<compile_context>
chip_gen: v7x
topology: tpu7x:2x2x1
jax: 0.10.0
libtpu: 0.0.40
codegen_flags: <defaults>
</compile_context>

<pallas_src>
import math
import functools
import numpy as np

import jax
import jax.numpy as jnp
from jax import lax
from jax.experimental import pallas as pl
from jax.experimental.pallas import tpu as pltpu  # noqa: F401  (TPU backend)

LN_EPS = 1e-5
BN_EPS = 1e-5
F32 = jnp.float32
NEG_BIG = -1e30  # additive "minus infinity" for masks / pool boundaries


def _layernorm(v, w, b):
    mu = jnp.mean(v, axis=-1, keepdims=True)
    var = jnp.mean((v - mu) ** 2, axis=-1, keepdims=True)
    return (v - mu) * lax.rsqrt(var + LN_EPS) * w + b


# ---------------------------------------------------------------------------
# One fused kernel for the whole forward pass (no grid; everything in VMEM)
# ---------------------------------------------------------------------------
def _informer_kernel(x_ref, slab_d, slab_q, slab_f, slab_h, out_ref, *,
                     layout, batch, seq_len, n_heads, n_layers, distil,
                     d_model, dk):
    slabs = (slab_d, slab_q, slab_f, slab_h)

    def seg(name):
        s, off, r, c = layout[name]
        return slabs[s][off:off + r, :c]

    B = batch
    L = seq_len
    D = d_model
    att_scale = 1.0 / math.sqrt(dk)

    # ---- embedding; PE (pre-tiled over batch) + embedding bias are fused
    #      into one (B*L, D) additive term built host-side ----
    h = jnp.dot(x_ref[...], seg("emb_w"), preferred_element_type=F32) + seg("pe_bias")

    # per-head 0/1 lane masks, loaded once (layer independent)
    head_masks = [seg(f"hm{hh}") for hh in range(n_heads)]

    for l in range(n_layers):
        N = B * L
        att_bias = seg(f"attb{l}")                       # (N, N) block-diag

        # ---- fused QKV projection over the flattened batch ----
        qkv = jnp.dot(h, seg(f"wqkv{l}"), preferred_element_type=F32) + seg(f"bqkv{l}")
        q = qkv[:, :D]
        k = qkv[:, D:2 * D]
        v = qkv[:, 2 * D:3 * D]

        # ---- multi-head dense softmax attention (== ProbAttention here).
        # Heads use full-width masked operands (no dk lane slices); per-head
        # contexts accumulate into one (N, D) block; softmax normalization is
        # deferred to an EUP approx-reciprocal after the value matmul.
        ctx = jnp.zeros((N, D), F32)
        for hh in range(n_heads):
            m = head_masks[hh]                           # (1, D) 0/1 mask
            s = lax.dot_general(q * m, k, (((1,), (1,)), ((), ())),
                                preferred_element_type=F32) * att_scale + att_bias
            smax = jnp.max(s, axis=-1, keepdims=True)
            e = jnp.exp(s - smax)
            r = pl.reciprocal(jnp.sum(e, axis=-1, keepdims=True), approx=True)
            ctx = ctx + jnp.dot(e, v * m, preferred_element_type=F32) * r

        attn_out = jnp.dot(ctx, seg(f"wo{l}"), preferred_element_type=F32) + seg(f"bo{l}")

        # ---- residual + LayerNorm1 ----
        h1 = _layernorm(h + attn_out, seg(f"n1w{l}"), seg(f"n1b{l}"))

        # ---- position-wise FFN (Conv1d k=1 == Linear), exact (erf) GELU ----
        y = jnp.dot(h1, seg(f"w1{l}"), preferred_element_type=F32) + seg(f"b1{l}")
        y = 0.5 * y * (1.0 + lax.erf(y * (1.0 / math.sqrt(2.0))))
        y = jnp.dot(y, seg(f"w2{l}"), preferred_element_type=F32) + seg(f"b2{l}")
        h = _layernorm(h1 + y, seg(f"n2w{l}"), seg(f"n2b{l}"))

        # ---- distilling ConvLayer: circular Conv1d(k=3) + BN(eval) + ELU +
        #      MaxPool1d(3, stride=2, padding=1), vectorized over the batch --
        if distil and l < n_layers - 1:
            sm1 = seg(f"sm1{l}")                         # (N, N) perm: prev row (circular, per sample)
            sp1 = seg(f"sp1{l}")                         # (N, N) perm: next row (circular, per sample)
            xm1 = jnp.dot(sm1, h, preferred_element_type=F32)
            xp1 = jnp.dot(sp1, h, preferred_element_type=F32)
            xcat = jnp.concatenate([xm1, h, xp1], axis=1)          # (N, 3D)
            y = jnp.dot(xcat, seg(f"cw{l}"), preferred_element_type=F32) + seg(f"cb{l}")
            y = y * seg(f"cscale{l}") + seg(f"cshift{l}")           # folded BN (eval)
            # ELU (alpha=1); exp argument clamped so discarded lanes stay finite
            y = jnp.where(y > 0, y, jnp.exp(jnp.minimum(y, 0.0)) - 1.0)
            # MaxPool1d(3, stride=2, pad=1): neighbors with -1e30 at sample
            # boundaries (additive bias), then select the stride-2 centers.
            prv = jnp.dot(sm1, y, preferred_element_type=F32) + seg(f"pbp{l}")
            nxt = jnp.dot(sp1, y, preferred_element_type=F32) + seg(f"pbn{l}")
            win = jnp.maximum(jnp.maximum(prv, nxt), y)
            h = jnp.dot(seg(f"spool{l}"), win, preferred_element_type=F32)
            L = (L - 1) // 2 + 1

    # ---- encoder final LayerNorm + per-sample mean pool + classifier ----
    hn = _layernorm(h, seg("hnw"), seg("hnb"))
    pooled = jnp.dot(seg("poolf"), hn, preferred_element_type=F32)   # (B, D)
    out_ref[...] = jnp.dot(pooled, seg("wc"), preferred_element_type=F32) + seg("bc")


# ---------------------------------------------------------------------------
# host-side slab packer (8-row-aligned segments, one DMA per slab)
# ---------------------------------------------------------------------------
class _SlabPacker:
    def __init__(self, width):
        self.width = int(width)
        self.parts = []
        self.rows = 0
        self.index = {}  # name -> (offset, nrows, ncols)

    def add(self, name, arr):
        a = np.asarray(arr, dtype=np.float32)
        if a.ndim == 1:
            a = a[None, :]
        r, c = a.shape
        assert c <= self.width, (name, c, self.width)
        if c < self.width:
            a = np.pad(a, ((0, 0), (0, self.width - c)))
        self.index[name] = (self.rows, r, c)
        self.parts.append(a)
        self.rows += r
        pad = (-self.rows) % 8                 # keep every segment 8-row aligned
        if pad:
            self.parts.append(np.zeros((pad, self.width), np.float32))
            self.rows += pad

    def finalize(self):
        if not self.parts:
            return jnp.zeros((8, self.width), F32)
        return jnp.asarray(np.concatenate(self.parts, axis=0))


def _block_diag_bias(B, L):
    sid = np.repeat(np.arange(B), L)
    return np.where(sid[:, None] == sid[None, :], 0.0, NEG_BIG).astype(np.float32)


def _conv_pool_consts(B, L):
    N = B * L
    sid = np.repeat(np.arange(B), L)
    t = np.tile(np.arange(L), B)
    rows = np.arange(N)
    sm1 = np.zeros((N, N), np.float32)
    sm1[rows, sid * L + (t - 1) % L] = 1.0           # previous row within sample (circular)
    sp1 = np.zeros((N, N), np.float32)
    sp1[rows, sid * L + (t + 1) % L] = 1.0           # next row within sample (circular)
    pbp = np.where(t == 0, NEG_BIG, 0.0).astype(np.float32)[:, None]       # (N, 1)
    pbn = np.where(t == L - 1, NEG_BIG, 0.0).astype(np.float32)[:, None]
    l_out = (L - 1) // 2 + 1
    spool = np.zeros((B * l_out, N), np.float32)
    for i in range(B * l_out):
        b, tp = divmod(i, l_out)
        spool[i, b * L + 2 * tp] = 1.0               # stride-2 center rows
    return sm1, sp1, pbp, pbn, spool, l_out


# ---------------------------------------------------------------------------
# wrapper: exactly one pallas_call, 5 input arrays (x + 4 packed slabs)
# ---------------------------------------------------------------------------
def informer_forward(x, params):
    x = jnp.asarray(x, F32)
    B, L0, Din = x.shape
    D = params["emb_w"].shape[1]
    d_ff = params["layers"][0]["w1"].shape[1]
    C = params["head"]["wc"].shape[1]
    H = params["n_heads"]
    dk = D // H
    n_layers = len(params["layers"])
    distil = params["distil"]
    assert B * L0 <= max(d_ff, D), "aux slab width too small for B*L"

    pk_d = _SlabPacker(D)                     # slab 0: lane width D
    pk_q = _SlabPacker(3 * D)                 # slab 1: lane width 3D
    pk_f = _SlabPacker(max(d_ff, B * L0))     # slab 2: lane width >= d_ff (also holds aux N-wide consts)
    pk_h = _SlabPacker(C)                     # slab 3: lane width C
    packers = (pk_d, pk_q, pk_f, pk_h)
    layout = {}

    def add(slab_id, name, arr):
        packers[slab_id].add(name, arr)
        off, r, c = packers[slab_id].index[name]
        layout[name] = (slab_id, off, r, c)

    # embedding: PE tiled over the batch + embedding bias folded together
    pe = np.asarray(params["pe"], np.float32)
    emb_b = np.asarray(params["emb_b"], np.float32)
    add(0, "pe_bias", np.tile(pe, (B, 1)) + emb_b)
    add(0, "emb_w", params["emb_w"])

    # per-head 0/1 lane masks
    for hh in range(H):
        m = np.zeros((1, D), np.float32)
        m[0, hh * dk:(hh + 1) * dk] = 1.0
        add(0, f"hm{hh}", m)

    L = L0
    for l, lp in enumerate(params["layers"]):
        add(2, f"attb{l}", _block_diag_bias(B, L))       # (N, N) additive mask
        add(1, f"wqkv{l}", lp["wqkv"])
        add(1, f"bqkv{l}", lp["bqkv"])
        add(0, f"wo{l}", lp["wo"])
        add(0, f"bo{l}", lp["bo"])
        add(0, f"n1w{l}", lp["n1w"])
        add(0, f"n1b{l}", lp["n1b"])
        add(2, f"w1{l}", lp["w1"])
        add(2, f"b1{l}", lp["b1"])
        add(0, f"w2{l}", lp["w2"])
        add(0, f"b2{l}", lp["b2"])
        add(0, f"n2w{l}", lp["n2w"])
        add(0, f"n2b{l}", lp["n2b"])
        if distil and l < n_layers - 1:
            cp = params["convs"][l]
            sm1, sp1, pbp, pbn, spool, l_out = _conv_pool_consts(B, L)
            add(0, f"cw{l}", cp["cw"])
            add(0, f"cb{l}", cp["cb"])
            add(0, f"cscale{l}", cp["scale"])
            add(0, f"cshift{l}", cp["shift"])
            add(2, f"sm1{l}", sm1)
            add(2, f"sp1{l}", sp1)
            add(0, f"pbp{l}", np.tile(pbp, (1, D)))
            add(0, f"pbn{l}", np.tile(pbn, (1, D)))
            add(2, f"spool{l}", spool)
            L = l_out

    # head: final norm + per-sample mean pool matrix + classifier
    hp = params["head"]
    add(0, "hnw", hp["nw"])
    add(0, "hnb", hp["nb"])
    poolf = np.zeros((B, B * L), np.float32)
    for b in range(B):
        poolf[b, b * L:(b + 1) * L] = 1.0 / L
    add(2, "poolf", poolf)
    add(3, "wc", hp["wc"])
    add(3, "bc", hp["bc"])

    kernel = functools.partial(
        _informer_kernel, layout=layout, batch=B, seq_len=L0,
        n_heads=H, n_layers=n_layers, distil=distil, d_model=D, dk=dk)

    return pl.pallas_call(
        kernel,
        out_shape=jax.ShapeDtypeStruct((B, C), F32),
    )(x.reshape(B * L0, Din),
      pk_d.finalize(), pk_q.finalize(), pk_f.finalize(), pk_h.finalize())


# ---------------------------------------------------------------------------
# deterministic parameter init (PyTorch-default-like fan_in scaling), with
# weights pre-packed for the fused kernel (QKV concat, conv-tap stack, BN fold)
# ---------------------------------------------------------------------------
def init_params(key, input_dim, d_model, n_heads, n_layers, d_ff,
                num_classes, seq_len, distil=True):
    keys = iter(jax.random.split(key, 64))

    def dense(shape, fan_in):
        bound = 1.0 / math.sqrt(fan_in)
        return jax.random.uniform(next(keys), shape, F32, -bound, bound)

    params = {"n_heads": n_heads, "distil": distil}
    params["emb_w"] = dense((input_dim, d_model), input_dim)
    params["emb_b"] = dense((1, d_model), input_dim)

    # sinusoidal positional encoding (first seq_len rows of the max_len table)
    pos = np.arange(seq_len, dtype=np.float32)[:, None]
    div = np.exp(np.arange(0, d_model, 2, dtype=np.float32)
                 * (-np.log(10000.0) / d_model))
    pe = np.zeros((seq_len, d_model), dtype=np.float32)
    pe[:, 0::2] = np.sin(pos * div)
    pe[:, 1::2] = np.cos(pos * div)
    params["pe"] = jnp.asarray(pe)

    layers = []
    for _ in range(n_layers):
        wq = dense((d_model, d_model), d_model)
        wk = dense((d_model, d_model), d_model)
        wv = dense((d_model, d_model), d_model)
        bq = dense((1, d_model), d_model)
        bk = dense((1, d_model), d_model)
        bv = dense((1, d_model), d_model)
        layers.append({
            "wqkv": jnp.concatenate([wq, wk, wv], axis=1),   # (D, 3D)
            "bqkv": jnp.concatenate([bq, bk, bv], axis=1),   # (1, 3D)
            "wo": dense((d_model, d_model), d_model),
            "bo": dense((1, d_model), d_model),
            "n1w": jnp.ones((1, d_model), F32),
            "n1b": jnp.zeros((1, d_model), F32),
            "w1": dense((d_model, d_ff), d_model),
            "b1": dense((1, d_ff), d_model),
            "w2": dense((d_ff, d_model), d_ff),
            "b2": dense((1, d_model), d_ff),
            "n2w": jnp.ones((1, d_model), F32),
            "n2b": jnp.zeros((1, d_model), F32),
        })
    params["layers"] = layers

    convs = []
    for _ in range(n_layers - 1 if distil else 0):
        w = dense((d_model, d_model, 3), d_model * 3)        # torch (out,in,k)
        w0 = jnp.transpose(w[:, :, 0])                       # tap t-1: (in,out)
        w1_ = jnp.transpose(w[:, :, 1])                      # tap t
        w2_ = jnp.transpose(w[:, :, 2])                      # tap t+1
        bnw = jnp.ones((1, d_model), F32)
        bnb = jnp.zeros((1, d_model), F32)
        bnm = jnp.zeros((1, d_model), F32)                   # running_mean
        bnv = jnp.ones((1, d_model), F32)                    # running_var
        scale = bnw / jnp.sqrt(bnv + BN_EPS)
        convs.append({
            "cw": jnp.concatenate([w0, w1_, w2_], axis=0),   # (3D, D) stacked taps
            "cb": dense((1, d_model), d_model * 3),
            "bnw": bnw, "bnb": bnb, "bnm": bnm, "bnv": bnv,
            "scale": scale,                                  # folded BN (eval)
            "shift": bnb - bnm * scale,
        })
    params["convs"] = convs

    params["head"] = {
        "nw": jnp.ones((1, d_model), F32),
        "nb": jnp.zeros((1, d_model), F32),
        "wc": dense((d_model, num_classes), d_model),
        "bc": dense((1, num_classes), d_model),
    }
    return params


# ---------------------------------------------------------------------------
# pure-jnp reference (mirrors the PyTorch forward, eval mode)
# ---------------------------------------------------------------------------
def reference_forward(x, params):
    H = params["n_heads"]
    D = params["emb_w"].shape[1]

    def layernorm(v, w, b):
        mu = jnp.mean(v, axis=-1, keepdims=True)
        var = jnp.mean((v - mu) ** 2, axis=-1, keepdims=True)
        return (v - mu) / jnp.sqrt(var + LN_EPS) * w + b

    h = x @ params["emb_w"] + params["emb_b"] + params["pe"][None]
    n_layers = len(params["layers"])
    for l, p in enumerate(params["layers"]):
        B, L, _ = h.shape
        dk = D // H
        q = (h @ p["wqkv"][:, :D] + p["bqkv"][:, :D]
             ).reshape(B, L, H, dk).transpose(0, 2, 1, 3)
        k = (h @ p["wqkv"][:, D:2 * D] + p["bqkv"][:, D:2 * D]
             ).reshape(B, L, H, dk).transpose(0, 2, 1, 3)
        v = (h @ p["wqkv"][:, 2 * D:] + p["bqkv"][:, 2 * D:]
             ).reshape(B, L, H, dk).transpose(0, 2, 1, 3)
        s = jnp.einsum("bhld,bhmd->bhlm", q, k) / math.sqrt(dk)
        a = jax.nn.softmax(s, axis=-1)
        ctx = jnp.einsum("bhlm,bhmd->bhld", a, v).transpose(0, 2, 1, 3).reshape(B, L, D)
        h1 = layernorm(h + ctx @ p["wo"] + p["bo"], p["n1w"], p["n1b"])
        y = h1 @ p["w1"] + p["b1"]
        y = 0.5 * y * (1.0 + lax.erf(y / math.sqrt(2.0)))
        y = y @ p["w2"] + p["b2"]
        h = layernorm(h1 + y, p["n2w"], p["n2b"])
        if params["distil"] and l < n_layers - 1:
            cp = params["convs"][l]
            xm1 = jnp.roll(h, 1, axis=1)
            xp1 = jnp.roll(h, -1, axis=1)
            y = (xm1 @ cp["cw"][:D] + h @ cp["cw"][D:2 * D]
                 + xp1 @ cp["cw"][2 * D:] + cp["cb"])
            y = (y - cp["bnm"]) / jnp.sqrt(cp["bnv"] + BN_EPS) * cp["bnw"] + cp["bnb"]
            y = jnp.where(y > 0, y, jnp.exp(y) - 1.0)
            Lc = y.shape[1]
            l_out = (Lc - 1) // 2 + 1
            neg = jnp.full((y.shape[0], 1, y.shape[2]), -jnp.inf, F32)
            yp = jnp.concatenate([neg, y, neg], axis=1)
            h = jnp.stack([jnp.max(yp[:, 2 * i:2 * i + 3, :], axis=1)
                           for i in range(l_out)], axis=1)
    hp = params["head"]
    hn = layernorm(h, hp["nw"], hp["nb"])
    pooled = jnp.mean(hn, axis=1)
    return pooled @ hp["wc"] + hp["bc"]


# ---------------------------------------------------------------------------
if __name__ == "__main__":
    B, L, INPUT_DIM = 2, 8, 4
    D_MODEL, N_HEADS, N_LAYERS = 32, 4, 2
    D_FF = 4 * D_MODEL
    FACTOR, NUM_CLASSES, DISTIL = 5, 3, True

    # Verify ProbAttention degenerates to exact dense attention at every stage.
    Ls = [L]
    for _ in range(N_LAYERS - 1):
        Ls.append((Ls[-1] - 1) // 2 + 1 if DISTIL else Ls[-1])
    for ll in Ls:
        assert ll <= FACTOR or FACTOR * int(np.ceil(np.log(ll))) >= ll

    key = jax.random.PRNGKey(0)
    pkey, xkey = jax.random.split(key)
    params = init_params(pkey, INPUT_DIM, D_MODEL, N_HEADS, N_LAYERS, D_FF,
                         NUM_CLASSES, L, DISTIL)
    x = jax.random.normal(xkey, (B, L, INPUT_DIM), F32)

    out = jax.block_until_ready(informer_forward(x, params))
    ref = jax.block_until_ready(reference_forward(x, params))

    assert out.shape == (B, NUM_CLASSES)
    assert bool(jnp.all(jnp.isfinite(out)))
    max_err = float(jnp.max(jnp.abs(out - ref)))
    assert max_err < 5e-2, f"mismatch vs reference: {max_err}"
    print("KERNEL_OK")
</pallas_src>

<mosaic_0001>
module attributes {stable_mosaic.version = 11 : i64} {
  func.func @_informer_kernel(%arg0: memref<16x4xf32, #tpu.memory_space<vmem>>, %arg1: memref<640x32xf32, #tpu.memory_space<vmem>>, %arg2: memref<80x96xf32, #tpu.memory_space<vmem>>, %arg3: memref<152x128xf32, #tpu.memory_space<vmem>>, %arg4: memref<40x3xf32, #tpu.memory_space<vmem>>, %arg5: memref<2x3xf32, #tpu.memory_space<vmem>>) attributes {dimension_semantics = [], scalar_prefetch = 0 : i64, scratch_operands = 0 : i64, tpu.core_type = #tpu.core_type<tc>} {
    %c0 = arith.constant 0 : index
    %c0_0 = arith.constant 0 : index
    %0 = vector.load %arg0[%c0, %c0_0] : memref<16x4xf32, #tpu.memory_space<vmem>>, vector<16x4xf32>
    %c16 = arith.constant 16 : index
    %c0_1 = arith.constant 0 : index
    %1 = vector.load %arg1[%c16, %c0_1] : memref<640x32xf32, #tpu.memory_space<vmem>>, vector<4x32xf32>
    %cst = arith.constant dense<0.000000e+00> : vector<16x32xf32>
    %2 = tpu.matmul %0, %1, %cst {dimension_numbers = #tpu.dot_dimension_numbers<[1], [0], [0], [1], [0, 0, 1, 1], [], []>} : vector<16x4xf32>, vector<4x32xf32>, vector<16x32xf32> -> vector<16x32xf32>
    %c0_2 = arith.constant 0 : index
    %c0_3 = arith.constant 0 : index
    %3 = vector.load %arg1[%c0_2, %c0_3] : memref<640x32xf32, #tpu.memory_space<vmem>>, vector<16x32xf32>
    %4 = arith.addf %2, %3 : vector<16x32xf32>
    %c24 = arith.constant 24 : index
    %c0_4 = arith.constant 0 : index
    %5 = vector.load %arg1[%c24, %c0_4] : memref<640x32xf32, #tpu.memory_space<vmem>>, vector<1x32xf32>
    %c32 = arith.constant 32 : index
    %c0_5 = arith.constant 0 : index
    %6 = vector.load %arg1[%c32, %c0_5] : memref<640x32xf32, #tpu.memory_space<vmem>>, vector<1x32xf32>
    %c40 = arith.constant 40 : index
    %c0_6 = arith.constant 0 : index
    %7 = vector.load %arg1[%c40, %c0_6] : memref<640x32xf32, #tpu.memory_space<vmem>>, vector<1x32xf32>
    %c48 = arith.constant 48 : index
    %c0_7 = arith.constant 0 : index
    %8 = vector.load %arg1[%c48, %c0_7] : memref<640x32xf32, #tpu.memory_space<vmem>>, vector<1x32xf32>
    %c0_8 = arith.constant 0 : index
    %c0_9 = arith.constant 0 : index
    %9 = vector.load %arg3[%c0_8, %c0_9] : memref<152x128xf32, #tpu.memory_space<vmem>>, vector<16x16xf32>
    %c0_10 = arith.constant 0 : index
    %c0_11 = arith.constant 0 : index
    %10 = vector.load %arg2[%c0_10, %c0_11] : memref<80x96xf32, #tpu.memory_space<vmem>>, vector<32x96xf32>
    %cst_12 = arith.constant dense<0.000000e+00> : vector<16x96xf32>
    %11 = tpu.matmul %4, %10, %cst_12 {dimension_numbers = #tpu.dot_dimension_numbers<[1], [0], [0], [1], [0, 0, 1, 1], [], []>} : vector<16x32xf32>, vector<32x96xf32>, vector<16x96xf32> -> vector<16x96xf32>
    %c32_13 = arith.constant 32 : index
    %c0_14 = arith.constant 0 : index
    %12 = vector.load %arg2[%c32_13, %c0_14] : memref<80x96xf32, #tpu.memory_space<vmem>>, vector<1x96xf32>
    %13 = vector.broadcast %12 : vector<1x96xf32> to vector<16x96xf32>
    %14 = arith.addf %11, %13 : vector<16x96xf32>
    %15 = vector.extract_strided_slice %14 {offsets = [0, 0], sizes = [16, 32], strides = [1, 1]} : vector<16x96xf32> to vector<16x32xf32>
    %16 = vector.extract_strided_slice %14 {offsets = [0, 32], sizes = [16, 32], strides = [1, 1]} : vector<16x96xf32> to vector<16x32xf32>
    %17 = vector.extract_strided_slice %14 {offsets = [0, 64], sizes = [16, 32], strides = [1, 1]} : vector<16x96xf32> to vector<16x32xf32>
    %cst_15 = arith.constant 0.000000e+00 : f32
    %18 = vector.broadcast %cst_15 : f32 to vector<16x32xf32>
    %19 = vector.broadcast %5 : vector<1x32xf32> to vector<16x32xf32>
    %20 = arith.mulf %15, %19 : vector<16x32xf32>
    %cst_16 = arith.constant dense<0.000000e+00> : vector<16x16xf32>
    %21 = tpu.matmul %20, %16, %cst_16 {dimension_numbers = #tpu.dot_dimension_numbers<[1], [1], [0], [0], [0, 0, 1, 0], [], []>} : vector<16x32xf32>, vector<16x32xf32>, vector<16x16xf32> -> vector<16x16xf32>
    %cst_17 = arith.constant 0.353553385 : f32
    %22 = vector.broadcast %cst_17 : f32 to vector<16x16xf32>
    %23 = arith.mulf %21, %22 : vector<16x16xf32>
    %24 = arith.addf %23, %9 : vector<16x16xf32>
    %cst_18 = arith.constant dense<0xFF800000> : vector<16xf32>
    %25 = vector.multi_reduction <maximumf>, %24, %cst_18 [1] : vector<16x16xf32> to vector<16xf32>
    %26 = vector.shape_cast %25 : vector<16xf32> to vector<16x1xf32>
    %27 = vector.broadcast %26 : vector<16x1xf32> to vector<16x16xf32>
    %28 = arith.subf %24, %27 : vector<16x16xf32>
    %29 = math.exp %28 : vector<16x16xf32>
    %cst_19 = arith.constant dense<0.000000e+00> : vector<16xf32>
    %30 = vector.multi_reduction <add>, %29, %cst_19 [1] : vector<16x16xf32> to vector<16xf32>
    %31 = vector.shape_cast %30 : vector<16xf32> to vector<16x1xf32>
    %32 = tpu.reciprocal %31 {approx = true} : vector<16x1xf32> -> vector<16x1xf32>
    %33 = vector.broadcast %5 : vector<1x32xf32> to vector<16x32xf32>
    %34 = arith.mulf %17, %33 : vector<16x32xf32>
    %cst_20 = arith.constant dense<0.000000e+00> : vector<16x32xf32>
    %35 = tpu.matmul %29, %34, %cst_20 {dimension_numbers = #tpu.dot_dimension_numbers<[1], [0], [0], [1], [0, 0, 1, 1], [], []>} : vector<16x16xf32>, vector<16x32xf32>, vector<16x32xf32> -> vector<16x32xf32>
    %36 = vector.broadcast %32 : vector<16x1xf32> to vector<16x32xf32>
    %37 = arith.mulf %35, %36 : vector<16x32xf32>
    %38 = arith.addf %18, %37 : vector<16x32xf32>
    %39 = vector.broadcast %6 : vector<1x32xf32> to vector<16x32xf32>
    %40 = arith.mulf %15, %39 : vector<16x32xf32>
    %cst_21 = arith.constant dense<0.000000e+00> : vector<16x16xf32>
    %41 = tpu.matmul %40, %16, %cst_21 {dimension_numbers = #tpu.dot_dimension_numbers<[1], [1], [0], [0], [0, 0, 1, 0], [], []>} : vector<16x32xf32>, vector<16x32xf32>, vector<16x16xf32> -> vector<16x16xf32>
    %cst_22 = arith.constant 0.353553385 : f32
    %42 = vector.broadcast %cst_22 : f32 to vector<16x16xf32>
    %43 = arith.mulf %41, %42 : vector<16x16xf32>
    %44 = arith.addf %43, %9 : vector<16x16xf32>
    %cst_23 = arith.constant dense<0xFF800000> : vector<16xf32>
    %45 = vector.multi_reduction <maximumf>, %44, %cst_23 [1] : vector<16x16xf32> to vector<16xf32>
    %46 = vector.shape_cast %45 : vector<16xf32> to vector<16x1xf32>
    %47 = vector.broadcast %46 : vector<16x1xf32> to vector<16x16xf32>
    %48 = arith.subf %44, %47 : vector<16x16xf32>
    %49 = math.exp %48 : vector<16x16xf32>
    %cst_24 = arith.constant dense<0.000000e+00> : vector<16xf32>
    %50 = vector.multi_reduction <add>, %49, %cst_24 [1] : vector<16x16xf32> to vector<16xf32>
    %51 = vector.shape_cast %50 : vector<16xf32> to vector<16x1xf32>
    %52 = tpu.reciprocal %51 {approx = true} : vector<16x1xf32> -> vector<16x1xf32>
    %53 = vector.broadcast %6 : vector<1x32xf32> to vector<16x32xf32>
    %54 = arith.mulf %17, %53 : vector<16x32xf32>
    %cst_25 = arith.constant dense<0.000000e+00> : vector<16x32xf32>
    %55 = tpu.matmul %49, %54, %cst_25 {dimension_numbers = #tpu.dot_dimension_numbers<[1], [0], [0], [1], [0, 0, 1, 1], [], []>} : vector<16x16xf32>, vector<16x32xf32>, vector<16x32xf32> -> vector<16x32xf32>
    %56 = vector.broadcast %52 : vector<16x1xf32> to vector<16x32xf32>
    %57 = arith.mulf %55, %56 : vector<16x32xf32>
    %58 = arith.addf %38, %57 : vector<16x32xf32>
    %59 = vector.broadcast %7 : vector<1x32xf32> to vector<16x32xf32>
    %60 = arith.mulf %15, %59 : vector<16x32xf32>
    %cst_26 = arith.constant dense<0.000000e+00> : vector<16x16xf32>
    %61 = tpu.matmul %60, %16, %cst_26 {dimension_numbers = #tpu.dot_dimension_numbers<[1], [1], [0], [0], [0, 0, 1, 0], [], []>} : vector<16x32xf32>, vector<16x32xf32>, vector<16x16xf32> -> vector<16x16xf32>
    %cst_27 = arith.constant 0.353553385 : f32
    %62 = vector.broadcast %cst_27 : f32 to vector<16x16xf32>
    %63 = arith.mulf %61, %62 : vector<16x16xf32>
    %64 = arith.addf %63, %9 : vector<16x16xf32>
    %cst_28 = arith.constant dense<0xFF800000> : vector<16xf32>
    %65 = vector.multi_reduction <maximumf>, %64, %cst_28 [1] : vector<16x16xf32> to vector<16xf32>
    %66 = vector.shape_cast %65 : vector<16xf32> to vector<16x1xf32>
    %67 = vector.broadcast %66 : vector<16x1xf32> to vector<16x16xf32>
    %68 = arith.subf %64, %67 : vector<16x16xf32>
    %69 = math.exp %68 : vector<16x16xf32>
    %cst_29 = arith.constant dense<0.000000e+00> : vector<16xf32>
    %70 = vector.multi_reduction <add>, %69, %cst_29 [1] : vector<16x16xf32> to vector<16xf32>
    %71 = vector.shape_cast %70 : vector<16xf32> to vector<16x1xf32>
    %72 = tpu.reciprocal %71 {approx = true} : vector<16x1xf32> -> vector<16x1xf32>
    %73 = vector.broadcast %7 : vector<1x32xf32> to vector<16x32xf32>
    %74 = arith.mulf %17, %73 : vector<16x32xf32>
    %cst_30 = arith.constant dense<0.000000e+00> : vector<16x32xf32>
    %75 = tpu.matmul %69, %74, %cst_30 {dimension_numbers = #tpu.dot_dimension_numbers<[1], [0], [0], [1], [0, 0, 1, 1], [], []>} : vector<16x16xf32>, vector<16x32xf32>, vector<16x32xf32> -> vector<16x32xf32>
    %76 = vector.broadcast %72 : vector<16x1xf32> to vector<16x32xf32>
    %77 = arith.mulf %75, %76 : vector<16x32xf32>
    %78 = arith.addf %58, %77 : vector<16x32xf32>
    %79 = vector.broadcast %8 : vector<1x32xf32> to vector<16x32xf32>
    %80 = arith.mulf %15, %79 : vector<16x32xf32>
    %cst_31 = arith.constant dense<0.000000e+00> : vector<16x16xf32>
    %81 = tpu.matmul %80, %16, %cst_31 {dimension_numbers = #tpu.dot_dimension_numbers<[1], [1], [0], [0], [0, 0, 1, 0], [], []>} : vector<16x32xf32>, vector<16x32xf32>, vector<16x16xf32> -> vector<16x16xf32>
    %cst_32 = arith.constant 0.353553385 : f32
    %82 = vector.broadcast %cst_32 : f32 to vector<16x16xf32>
    %83 = arith.mulf %81, %82 : vector<16x16xf32>
    %84 = arith.addf %83, %9 : vector<16x16xf32>
    %cst_33 = arith.constant dense<0xFF800000> : vector<16xf32>
    %85 = vector.multi_reduction <maximumf>, %84, %cst_33 [1] : vector<16x16xf32> to vector<16xf32>
    %86 = vector.shape_cast %85 : vector<16xf32> to vector<16x1xf32>
    %87 = vector.broadcast %86 : vector<16x1xf32> to vector<16x16xf32>
    %88 = arith.subf %84, %87 : vector<16x16xf32>
    %89 = math.exp %88 : vector<16x16xf32>
    %cst_34 = arith.constant dense<0.000000e+00> : vector<16xf32>
    %90 = vector.multi_reduction <add>, %89, %cst_34 [1] : vector<16x16xf32> to vector<16xf32>
    %91 = vector.shape_cast %90 : vector<16xf32> to vector<16x1xf32>
    %92 = tpu.reciprocal %91 {approx = true} : vector<16x1xf32> -> vector<16x1xf32>
    %93 = vector.broadcast %8 : vector<1x32xf32> to vector<16x32xf32>
    %94 = arith.mulf %17, %93 : vector<16x32xf32>
    %cst_35 = arith.constant dense<0.000000e+00> : vector<16x32xf32>
    %95 = tpu.matmul %89, %94, %cst_35 {dimension_numbers = #tpu.dot_dimension_numbers<[1], [0], [0], [1], [0, 0, 1, 1], [], []>} : vector<16x16xf32>, vector<16x32xf32>, vector<16x32xf32> -> vector<16x32xf32>
    %96 = vector.broadcast %92 : vector<16x1xf32> to vector<16x32xf32>
    %97 = arith.mulf %95, %96 : vector<16x32xf32>
    %98 = arith.addf %78, %97 : vector<16x32xf32>
    %c56 = arith.constant 56 : index
    %c0_36 = arith.constant 0 : index
    %99 = vector.load %arg1[%c56, %c0_36] : memref<640x32xf32, #tpu.memory_space<vmem>>, vector<32x32xf32>
    %cst_37 = arith.constant dense<0.000000e+00> : vector<16x32xf32>
    %100 = tpu.matmul %98, %99, %cst_37 {dimension_numbers = #tpu.dot_dimension_numbers<[1], [0], [0], [1], [0, 0, 1, 1], [], []>} : vector<16x32xf32>, vector<32x32xf32>, vector<16x32xf32> -> vector<16x32xf32>
    %c88 = arith.constant 88 : index
    %c0_38 = arith.constant 0 : index
    %101 = vector.load %arg1[%c88, %c0_38] : memref<640x32xf32, #tpu.memory_space<vmem>>, vector<1x32xf32>
    %102 = vector.broadcast %101 : vector<1x32xf32> to vector<16x32xf32>
    %103 = arith.addf %100, %102 : vector<16x32xf32>
    %104 = arith.addf %4, %103 : vector<16x32xf32>
    %c96 = arith.constant 96 : index
    %c0_39 = arith.constant 0 : index
    %105 = vector.load %arg1[%c96, %c0_39] : memref<640x32xf32, #tpu.memory_space<vmem>>, vector<1x32xf32>
    %c104 = arith.constant 104 : index
    %c0_40 = arith.constant 0 : index
    %106 = vector.load %arg1[%c104, %c0_40] : memref<640x32xf32, #tpu.memory_space<vmem>>, vector<1x32xf32>
    %cst_41 = arith.constant dense<0.000000e+00> : vector<16xf32>
    %107 = vector.multi_reduction <add>, %104, %cst_41 [1] : vector<16x32xf32> to vector<16xf32>
    %108 = vector.shape_cast %107 : vector<16xf32> to vector<16x1xf32>
    %cst_42 = arith.constant 3.200000e+01 : f32
    %109 = vector.broadcast %cst_42 : f32 to vector<16x1xf32>
    %110 = arith.divf %108, %109 : vector<16x1xf32>
    %111 = vector.broadcast %110 : vector<16x1xf32> to vector<16x32xf32>
    %112 = arith.subf %104, %111 : vector<16x32xf32>
    %113 = arith.mulf %112, %112 : vector<16x32xf32>
    %cst_43 = arith.constant dense<0.000000e+00> : vector<16xf32>
    %114 = vector.multi_reduction <add>, %113, %cst_43 [1] : vector<16x32xf32> to vector<16xf32>
    %115 = vector.shape_cast %114 : vector<16xf32> to vector<16x1xf32>
    %cst_44 = arith.constant 3.200000e+01 : f32
    %116 = vector.broadcast %cst_44 : f32 to vector<16x1xf32>
    %117 = arith.divf %115, %116 : vector<16x1xf32>
    %118 = vector.broadcast %110 : vector<16x1xf32> to vector<16x32xf32>
    %119 = arith.subf %104, %118 : vector<16x32xf32>
    %cst_45 = arith.constant 9.99999974E-6 : f32
    %120 = vector.broadcast %cst_45 : f32 to vector<16x1xf32>
    %121 = arith.addf %117, %120 : vector<16x1xf32>
    %122 = math.rsqrt %121 : vector<16x1xf32>
    %123 = vector.broadcast %122 : vector<16x1xf32> to vector<16x32xf32>
    %124 = arith.mulf %119, %123 : vector<16x32xf32>
    %125 = vector.broadcast %105 : vector<1x32xf32> to vector<16x32xf32>
    %126 = arith.mulf %124, %125 : vector<16x32xf32>
    %127 = vector.broadcast %106 : vector<1x32xf32> to vector<16x32xf32>
    %128 = arith.addf %126, %127 : vector<16x32xf32>
    %c16_46 = arith.constant 16 : index
    %c0_47 = arith.constant 0 : index
    %129 = vector.load %arg3[%c16_46, %c0_47] : memref<152x128xf32, #tpu.memory_space<vmem>>, vector<32x128xf32>
    %cst_48 = arith.constant dense<0.000000e+00> : vector<16x128xf32>
    %130 = tpu.matmul %128, %129, %cst_48 {dimension_numbers = #tpu.dot_dimension_numbers<[1], [0], [0], [1], [0, 0, 1, 1], [], []>} : vector<16x32xf32>, vector<32x128xf32>, vector<16x128xf32> -> vector<16x128xf32>
    %c48_49 = arith.constant 48 : index
    %c0_50 = arith.constant 0 : index
    %131 = vector.load %arg3[%c48_49, %c0_50] : memref<152x128xf32, #tpu.memory_space<vmem>>, vector<1x128xf32>
    %132 = vector.broadcast %131 : vector<1x128xf32> to vector<16x128xf32>
    %133 = arith.addf %130, %132 : vector<16x128xf32>
    %cst_51 = arith.constant 5.000000e-01 : f32
    %134 = vector.broadcast %cst_51 : f32 to vector<16x128xf32>
    %135 = arith.mulf %134, %133 : vector<16x128xf32>
    %cst_52 = arith.constant 0.707106769 : f32
    %136 = vector.broadcast %cst_52 : f32 to vector<16x128xf32>
    %137 = arith.mulf %133, %136 : vector<16x128xf32>
    %138 = math.erf %137 : vector<16x128xf32>
    %cst_53 = arith.constant 1.000000e+00 : f32
    %139 = vector.broadcast %cst_53 : f32 to vector<16x128xf32>
    %140 = arith.addf %139, %138 : vector<16x128xf32>
    %141 = arith.mulf %135, %140 : vector<16x128xf32>
    %c112 = arith.constant 112 : index
    %c0_54 = arith.constant 0 : index
    %142 = vector.load %arg1[%c112, %c0_54] : memref<640x32xf32, #tpu.memory_space<vmem>>, vector<128x32xf32>
    %cst_55 = arith.constant dense<0.000000e+00> : vector<16x32xf32>
    %143 = tpu.matmul %141, %142, %cst_55 {dimension_numbers = #tpu.dot_dimension_numbers<[1], [0], [0], [1], [0, 0, 1, 1], [], []>} : vector<16x128xf32>, vector<128x32xf32>, vector<16x32xf32> -> vector<16x32xf32>
    %c240 = arith.constant 240 : index
    %c0_56 = arith.constant 0 : index
    %144 = vector.load %arg1[%c240, %c0_56] : memref<640x32xf32, #tpu.memory_space<vmem>>, vector<1x32xf32>
    %145 = vector.broadcast %144 : vector<1x32xf32> to vector<16x32xf32>
    %146 = arith.addf %143, %145 : vector<16x32xf32>
    %147 = arith.addf %128, %146 : vector<16x32xf32>
    %c248 = arith.constant 248 : index
    %c0_57 = arith.constant 0 : index
    %148 = vector.load %arg1[%c248, %c0_57] : memref<640x32xf32, #tpu.memory_space<vmem>>, vector<1x32xf32>
    %c256 = arith.constant 256 : index
    %c0_58 = arith.constant 0 : index
    %149 = vector.load %arg1[%c256, %c0_58] : memref<640x32xf32, #tpu.memory_space<vmem>>, vector<1x32xf32>
    %cst_59 = arith.constant dense<0.000000e+00> : vector<16xf32>
    %150 = vector.multi_reduction <add>, %147, %cst_59 [1] : vector<16x32xf32> to vector<16xf32>
    %151 = vector.shape_cast %150 : vector<16xf32> to vector<16x1xf32>
    %cst_60 = arith.constant 3.200000e+01 : f32
    %152 = vector.broadcast %cst_60 : f32 to vector<16x1xf32>
    %153 = arith.divf %151, %152 : vector<16x1xf32>
    %154 = vector.broadcast %153 : vector<16x1xf32> to vector<16x32xf32>
    %155 = arith.subf %147, %154 : vector<16x32xf32>
    %156 = arith.mulf %155, %155 : vector<16x32xf32>
    %cst_61 = arith.constant dense<0.000000e+00> : vector<16xf32>
    %157 = vector.multi_reduction <add>, %156, %cst_61 [1] : vector<16x32xf32> to vector<16xf32>
    %158 = vector.shape_cast %157 : vector<16xf32> to vector<16x1xf32>
    %cst_62 = arith.constant 3.200000e+01 : f32
    %159 = vector.broadcast %cst_62 : f32 to vector<16x1xf32>
    %160 = arith.divf %158, %159 : vector<16x1xf32>
    %161 = vector.broadcast %153 : vector<16x1xf32> to vector<16x32xf32>
    %162 = arith.subf %147, %161 : vector<16x32xf32>
    %cst_63 = arith.constant 9.99999974E-6 : f32
    %163 = vector.broadcast %cst_63 : f32 to vector<16x1xf32>
    %164 = arith.addf %160, %163 : vector<16x1xf32>
    %165 = math.rsqrt %164 : vector<16x1xf32>
    %166 = vector.broadcast %165 : vector<16x1xf32> to vector<16x32xf32>
    %167 = arith.mulf %162, %166 : vector<16x32xf32>
    %168 = vector.broadcast %148 : vector<1x32xf32> to vector<16x32xf32>
    %169 = arith.mulf %167, %168 : vector<16x32xf32>
    %170 = vector.broadcast %149 : vector<1x32xf32> to vector<16x32xf32>
    %171 = arith.addf %169, %170 : vector<16x32xf32>
    %c56_64 = arith.constant 56 : index
    %c0_65 = arith.constant 0 : index
    %172 = vector.load %arg3[%c56_64, %c0_65] : memref<152x128xf32, #tpu.memory_space<vmem>>, vector<16x16xf32>
    %c72 = arith.constant 72 : index
    %c0_66 = arith.constant 0 : index
    %173 = vector.load %arg3[%c72, %c0_66] : memref<152x128xf32, #tpu.memory_space<vmem>>, vector<16x16xf32>
    %cst_67 = arith.constant dense<0.000000e+00> : vector<16x32xf32>
    %174 = tpu.matmul %172, %171, %cst_67 {dimension_numbers = #tpu.dot_dimension_numbers<[1], [0], [0], [1], [0, 0, 1, 1], [], []>} : vector<16x16xf32>, vector<16x32xf32>, vector<16x32xf32> -> vector<16x32xf32>
    %cst_68 = arith.constant dense<0.000000e+00> : vector<16x32xf32>
    %175 = tpu.matmul %173, %171, %cst_68 {dimension_numbers = #tpu.dot_dimension_numbers<[1], [0], [0], [1], [0, 0, 1, 1], [], []>} : vector<16x16xf32>, vector<16x32xf32>, vector<16x32xf32> -> vector<16x32xf32>
    %176 = tpu.concatenate %174, %171, %175 in 1 : vector<16x32xf32>, vector<16x32xf32>, vector<16x32xf32> -> vector<16x96xf32>
    %c264 = arith.constant 264 : index
    %c0_69 = arith.constant 0 : index
    %177 = vector.load %arg1[%c264, %c0_69] : memref<640x32xf32, #tpu.memory_space<vmem>>, vector<96x32xf32>
    %cst_70 = arith.constant dense<0.000000e+00> : vector<16x32xf32>
    %178 = tpu.matmul %176, %177, %cst_70 {dimension_numbers = #tpu.dot_dimension_numbers<[1], [0], [0], [1], [0, 0, 1, 1], [], []>} : vector<16x96xf32>, vector<96x32xf32>, vector<16x32xf32> -> vector<16x32xf32>
    %c360 = arith.constant 360 : index
    %c0_71 = arith.constant 0 : index
    %179 = vector.load %arg1[%c360, %c0_71] : memref<640x32xf32, #tpu.memory_space<vmem>>, vector<1x32xf32>
    %180 = vector.broadcast %179 : vector<1x32xf32> to vector<16x32xf32>
    %181 = arith.addf %178, %180 : vector<16x32xf32>
    %c368 = arith.constant 368 : index
    %c0_72 = arith.constant 0 : index
    %182 = vector.load %arg1[%c368, %c0_72] : memref<640x32xf32, #tpu.memory_space<vmem>>, vector<1x32xf32>
    %183 = vector.broadcast %182 : vector<1x32xf32> to vector<16x32xf32>
    %184 = arith.mulf %181, %183 : vector<16x32xf32>
    %c376 = arith.constant 376 : index
    %c0_73 = arith.constant 0 : index
    %185 = vector.load %arg1[%c376, %c0_73] : memref<640x32xf32, #tpu.memory_space<vmem>>, vector<1x32xf32>
    %186 = vector.broadcast %185 : vector<1x32xf32> to vector<16x32xf32>
    %187 = arith.addf %184, %186 : vector<16x32xf32>
    %cst_74 = arith.constant 0.000000e+00 : f32
    %188 = vector.broadcast %cst_74 : f32 to vector<16x32xf32>
    %189 = arith.cmpf ogt, %187, %188 : vector<16x32xf32>
    %cst_75 = arith.constant 0.000000e+00 : f32
    %190 = vector.broadcast %cst_75 : f32 to vector<16x32xf32>
    %191 = arith.minimumf %187, %190 : vector<16x32xf32>
    %192 = math.exp %191 : vector<16x32xf32>
    %cst_76 = arith.constant 1.000000e+00 : f32
    %193 = vector.broadcast %cst_76 : f32 to vector<16x32xf32>
    %194 = arith.subf %192, %193 : vector<16x32xf32>
    %195 = arith.select %189, %187, %194 : vector<16x32xi1>, vector<16x32xf32>
    %cst_77 = arith.constant dense<0.000000e+00> : vector<16x32xf32>
    %196 = tpu.matmul %172, %195, %cst_77 {dimension_numbers = #tpu.dot_dimension_numbers<[1], [0], [0], [1], [0, 0, 1, 1], [], []>} : vector<16x16xf32>, vector<16x32xf32>, vector<16x32xf32> -> vector<16x32xf32>
    %c384 = arith.constant 384 : index
    %c0_78 = arith.constant 0 : index
    %197 = vector.load %arg1[%c384, %c0_78] : memref<640x32xf32, #tpu.memory_space<vmem>>, vector<16x32xf32>
    %198 = arith.addf %196, %197 : vector<16x32xf32>
    %cst_79 = arith.constant dense<0.000000e+00> : vector<16x32xf32>
    %199 = tpu.matmul %173, %195, %cst_79 {dimension_numbers = #tpu.dot_dimension_numbers<[1], [0], [0], [1], [0, 0, 1, 1], [], []>} : vector<16x16xf32>, vector<16x32xf32>, vector<16x32xf32> -> vector<16x32xf32>
    %c400 = arith.constant 400 : index
    %c0_80 = arith.constant 0 : index
    %200 = vector.load %arg1[%c400, %c0_80] : memref<640x32xf32, #tpu.memory_space<vmem>>, vector<16x32xf32>
    %201 = arith.addf %199, %200 : vector<16x32xf32>
    %202 = arith.maximumf %198, %201 : vector<16x32xf32>
    %203 = arith.maximumf %202, %195 : vector<16x32xf32>
    %c88_81 = arith.constant 88 : index
    %c0_82 = arith.constant 0 : index
    %204 = vector.load %arg3[%c88_81, %c0_82] : memref<152x128xf32, #tpu.memory_space<vmem>>, vector<8x16xf32>
    %cst_83 = arith.constant dense<0.000000e+00> : vector<8x32xf32>
    %205 = tpu.matmul %204, %203, %cst_83 {dimension_numbers = #tpu.dot_dimension_numbers<[1], [0], [0], [1], [0, 0, 1, 1], [], []>} : vector<8x16xf32>, vector<16x32xf32>, vector<8x32xf32> -> vector<8x32xf32>
    %c96_84 = arith.constant 96 : index
    %c0_85 = arith.constant 0 : index
    %206 = vector.load %arg3[%c96_84, %c0_85] : memref<152x128xf32, #tpu.memory_space<vmem>>, vector<8x8xf32>
    %c40_86 = arith.constant 40 : index
    %c0_87 = arith.constant 0 : index
    %207 = vector.load %arg2[%c40_86, %c0_87] : memref<80x96xf32, #tpu.memory_space<vmem>>, vector<32x96xf32>
    %cst_88 = arith.constant dense<0.000000e+00> : vector<8x96xf32>
    %208 = tpu.matmul %205, %207, %cst_88 {dimension_numbers = #tpu.dot_dimension_numbers<[1], [0], [0], [1], [0, 0, 1, 1], [], []>} : vector<8x32xf32>, vector<32x96xf32>, vector<8x96xf32> -> vector<8x96xf32>
    %c72_89 = arith.constant 72 : index
    %c0_90 = arith.constant 0 : index
    %209 = vector.load %arg2[%c72_89, %c0_90] : memref<80x96xf32, #tpu.memory_space<vmem>>, vector<1x96xf32>
    %210 = vector.broadcast %209 : vector<1x96xf32> to vector<8x96xf32>
    %211 = arith.addf %208, %210 : vector<8x96xf32>
    %212 = vector.extract_strided_slice %211 {offsets = [0, 0], sizes = [8, 32], strides = [1, 1]} : vector<8x96xf32> to vector<8x32xf32>
    %213 = vector.extract_strided_slice %211 {offsets = [0, 32], sizes = [8, 32], strides = [1, 1]} : vector<8x96xf32> to vector<8x32xf32>
    %214 = vector.extract_strided_slice %211 {offsets = [0, 64], sizes = [8, 32], strides = [1, 1]} : vector<8x96xf32> to vector<8x32xf32>
    %cst_91 = arith.constant 0.000000e+00 : f32
    %215 = vector.broadcast %cst_91 : f32 to vector<8x32xf32>
    %216 = vector.broadcast %5 : vector<1x32xf32> to vector<8x32xf32>
    %217 = arith.mulf %212, %216 : vector<8x32xf32>
    %cst_92 = arith.constant dense<0.000000e+00> : vector<8x8xf32>
    %218 = tpu.matmul %217, %213, %cst_92 {dimension_numbers = #tpu.dot_dimension_numbers<[1], [1], [0], [0], [0, 0, 1, 0], [], []>} : vector<8x32xf32>, vector<8x32xf32>, vector<8x8xf32> -> vector<8x8xf32>
    %cst_93 = arith.constant 0.353553385 : f32
    %219 = vector.broadcast %cst_93 : f32 to vector<8x8xf32>
    %220 = arith.mulf %218, %219 : vector<8x8xf32>
    %221 = arith.addf %220, %206 : vector<8x8xf32>
    %cst_94 = arith.constant dense<0xFF800000> : vector<8xf32>
    %222 = vector.multi_reduction <maximumf>, %221, %cst_94 [1] : vector<8x8xf32> to vector<8xf32>
    %223 = vector.shape_cast %222 : vector<8xf32> to vector<8x1xf32>
    %224 = vector.broadcast %223 : vector<8x1xf32> to vector<8x8xf32>
    %225 = arith.subf %221, %224 : vector<8x8xf32>
    %226 = math.exp %225 : vector<8x8xf32>
    %cst_95 = arith.constant dense<0.000000e+00> : vector<8xf32>
    %227 = vector.multi_reduction <add>, %226, %cst_95 [1] : vector<8x8xf32> to vector<8xf32>
    %228 = vector.shape_cast %227 : vector<8xf32> to vector<8x1xf32>
    %229 = tpu.reciprocal %228 {approx = true} : vector<8x1xf32> -> vector<8x1xf32>
    %230 = vector.broadcast %5 : vector<1x32xf32> to vector<8x32xf32>
    %231 = arith.mulf %214, %230 : vector<8x32xf32>
    %cst_96 = arith.constant dense<0.000000e+00> : vector<8x32xf32>
    %232 = tpu.matmul %226, %231, %cst_96 {dimension_numbers = #tpu.dot_dimension_numbers<[1], [0], [0], [1], [0, 0, 1, 1], [], []>} : vector<8x8xf32>, vector<8x32xf32>, vector<8x32xf32> -> vector<8x32xf32>
    %233 = vector.broadcast %229 : vector<8x1xf32> to vector<8x32xf32>
    %234 = arith.mulf %232, %233 : vector<8x32xf32>
    %235 = arith.addf %215, %234 : vector<8x32xf32>
    %236 = vector.broadcast %6 : vector<1x32xf32> to vector<8x32xf32>
    %237 = arith.mulf %212, %236 : vector<8x32xf32>
    %cst_97 = arith.constant dense<0.000000e+00> : vector<8x8xf32>
    %238 = tpu.matmul %237, %213, %cst_97 {dimension_numbers = #tpu.dot_dimension_numbers<[1], [1], [0], [0], [0, 0, 1, 0], [], []>} : vector<8x32xf32>, vector<8x32xf32>, vector<8x8xf32> -> vector<8x8xf32>
    %cst_98 = arith.constant 0.353553385 : f32
    %239 = vector.broadcast %cst_98 : f32 to vector<8x8xf32>
    %240 = arith.mulf %238, %239 : vector<8x8xf32>
    %241 = arith.addf %240, %206 : vector<8x8xf32>
    %cst_99 = arith.constant dense<0xFF800000> : vector<8xf32>
    %242 = vector.multi_reduction <maximumf>, %241, %cst_99 [1] : vector<8x8xf32> to vector<8xf32>
    %243 = vector.shape_cast %242 : vector<8xf32> to vector<8x1xf32>
    %244 = vector.broadcast %243 : vector<8x1xf32> to vector<8x8xf32>
    %245 = arith.subf %241, %244 : vector<8x8xf32>
    %246 = math.exp %245 : vector<8x8xf32>
    %cst_100 = arith.constant dense<0.000000e+00> : vector<8xf32>
    %247 = vector.multi_reduction <add>, %246, %cst_100 [1] : vector<8x8xf32> to vector<8xf32>
    %248 = vector.shape_cast %247 : vector<8xf32> to vector<8x1xf32>
    %249 = tpu.reciprocal %248 {approx = true} : vector<8x1xf32> -> vector<8x1xf32>
    %250 = vector.broadcast %6 : vector<1x32xf32> to vector<8x32xf32>
    %251 = arith.mulf %214, %250 : vector<8x32xf32>
    %cst_101 = arith.constant dense<0.000000e+00> : vector<8x32xf32>
    %252 = tpu.matmul %246, %251, %cst_101 {dimension_numbers = #tpu.dot_dimension_numbers<[1], [0], [0], [1], [0, 0, 1, 1], [], []>} : vector<8x8xf32>, vector<8x32xf32>, vector<8x32xf32> -> vector<8x32xf32>
    %253 = vector.broadcast %249 : vector<8x1xf32> to vector<8x32xf32>
    %254 = arith.mulf %252, %253 : vector<8x32xf32>
    %255 = arith.addf %235, %254 : vector<8x32xf32>
    %256 = vector.broadcast %7 : vector<1x32xf32> to vector<8x32xf32>
    %257 = arith.mulf %212, %256 : vector<8x32xf32>
    %cst_102 = arith.constant dense<0.000000e+00> : vector<8x8xf32>
    %258 = tpu.matmul %257, %213, %cst_102 {dimension_numbers = #tpu.dot_dimension_numbers<[1], [1], [0], [0], [0, 0, 1, 0], [], []>} : vector<8x32xf32>, vector<8x32xf32>, vector<8x8xf32> -> vector<8x8xf32>
    %cst_103 = arith.constant 0.353553385 : f32
    %259 = vector.broadcast %cst_103 : f32 to vector<8x8xf32>
    %260 = arith.mulf %258, %259 : vector<8x8xf32>
    %261 = arith.addf %260, %206 : vector<8x8xf32>
    %cst_104 = arith.constant dense<0xFF800000> : vector<8xf32>
    %262 = vector.multi_reduction <maximumf>, %261, %cst_104 [1] : vector<8x8xf32> to vector<8xf32>
    %263 = vector.shape_cast %262 : vector<8xf32> to vector<8x1xf32>
    %264 = vector.broadcast %263 : vector<8x1xf32> to vector<8x8xf32>
    %265 = arith.subf %261, %264 : vector<8x8xf32>
    %266 = math.exp %265 : vector<8x8xf32>
    %cst_105 = arith.constant dense<0.000000e+00> : vector<8xf32>
    %267 = vector.multi_reduction <add>, %266, %cst_105 [1] : vector<8x8xf32> to vector<8xf32>
    %268 = vector.shape_cast %267 : vector<8xf32> to vector<8x1xf32>
    %269 = tpu.reciprocal %268 {approx = true} : vector<8x1xf32> -> vector<8x1xf32>
    %270 = vector.broadcast %7 : vector<1x32xf32> to vector<8x32xf32>
    %271 = arith.mulf %214, %270 : vector<8x32xf32>
    %cst_106 = arith.constant dense<0.000000e+00> : vector<8x32xf32>
    %272 = tpu.matmul %266, %271, %cst_106 {dimension_numbers = #tpu.dot_dimension_numbers<[1], [0], [0], [1], [0, 0, 1, 1], [], []>} : vector<8x8xf32>, vector<8x32xf32>, vector<8x32xf32> -> vector<8x32xf32>
    %273 = vector.broadcast %269 : vector<8x1xf32> to vector<8x32xf32>
    %274 = arith.mulf %272, %273 : vector<8x32xf32>
    %275 = arith.addf %255, %274 : vector<8x32xf32>
    %276 = vector.broadcast %8 : vector<1x32xf32> to vector<8x32xf32>
    %277 = arith.mulf %212, %276 : vector<8x32xf32>
    %cst_107 = arith.constant dense<0.000000e+00> : vector<8x8xf32>
    %278 = tpu.matmul %277, %213, %cst_107 {dimension_numbers = #tpu.dot_dimension_numbers<[1], [1], [0], [0], [0, 0, 1, 0], [], []>} : vector<8x32xf32>, vector<8x32xf32>, vector<8x8xf32> -> vector<8x8xf32>
    %cst_108 = arith.constant 0.353553385 : f32
    %279 = vector.broadcast %cst_108 : f32 to vector<8x8xf32>
    %280 = arith.mulf %278, %279 : vector<8x8xf32>
    %281 = arith.addf %280, %206 : vector<8x8xf32>
    %cst_109 = arith.constant dense<0xFF800000> : vector<8xf32>
    %282 = vector.multi_reduction <maximumf>, %281, %cst_109 [1] : vector<8x8xf32> to vector<8xf32>
    %283 = vector.shape_cast %282 : vector<8xf32> to vector<8x1xf32>
    %284 = vector.broadcast %283 : vector<8x1xf32> to vector<8x8xf32>
    %285 = arith.subf %281, %284 : vector<8x8xf32>
    %286 = math.exp %285 : vector<8x8xf32>
    %cst_110 = arith.constant dense<0.000000e+00> : vector<8xf32>
    %287 = vector.multi_reduction <add>, %286, %cst_110 [1] : vector<8x8xf32> to vector<8xf32>
    %288 = vector.shape_cast %287 : vector<8xf32> to vector<8x1xf32>
    %289 = tpu.reciprocal %288 {approx = true} : vector<8x1xf32> -> vector<8x1xf32>
    %290 = vector.broadcast %8 : vector<1x32xf32> to vector<8x32xf32>
    %291 = arith.mulf %214, %290 : vector<8x32xf32>
    %cst_111 = arith.constant dense<0.000000e+00> : vector<8x32xf32>
    %292 = tpu.matmul %286, %291, %cst_111 {dimension_numbers = #tpu.dot_dimension_numbers<[1], [0], [0], [1], [0, 0, 1, 1], [], []>} : vector<8x8xf32>, vector<8x32xf32>, vector<8x32xf32> -> vector<8x32xf32>
    %293 = vector.broadcast %289 : vector<8x1xf32> to vector<8x32xf32>
    %294 = arith.mulf %292, %293 : vector<8x32xf32>
    %295 = arith.addf %275, %294 : vector<8x32xf32>
    %c416 = arith.constant 416 : index
    %c0_112 = arith.constant 0 : index
    %296 = vector.load %arg1[%c416, %c0_112] : memref<640x32xf32, #tpu.memory_space<vmem>>, vector<32x32xf32>
    %cst_113 = arith.constant dense<0.000000e+00> : vector<8x32xf32>
    %297 = tpu.matmul %295, %296, %cst_113 {dimension_numbers = #tpu.dot_dimension_numbers<[1], [0], [0], [1], [0, 0, 1, 1], [], []>} : vector<8x32xf32>, vector<32x32xf32>, vector<8x32xf32> -> vector<8x32xf32>
    %c448 = arith.constant 448 : index
    %c0_114 = arith.constant 0 : index
    %298 = vector.load %arg1[%c448, %c0_114] : memref<640x32xf32, #tpu.memory_space<vmem>>, vector<1x32xf32>
    %299 = vector.broadcast %298 : vector<1x32xf32> to vector<8x32xf32>
    %300 = arith.addf %297, %299 : vector<8x32xf32>
    %301 = arith.addf %205, %300 : vector<8x32xf32>
    %c456 = arith.constant 456 : index
    %c0_115 = arith.constant 0 : index
    %302 = vector.load %arg1[%c456, %c0_115] : memref<640x32xf32, #tpu.memory_space<vmem>>, vector<1x32xf32>
    %c464 = arith.constant 464 : index
    %c0_116 = arith.constant 0 : index
    %303 = vector.load %arg1[%c464, %c0_116] : memref<640x32xf32, #tpu.memory_space<vmem>>, vector<1x32xf32>
    %cst_117 = arith.constant dense<0.000000e+00> : vector<8xf32>
    %304 = vector.multi_reduction <add>, %301, %cst_117 [1] : vector<8x32xf32> to vector<8xf32>
    %305 = vector.shape_cast %304 : vector<8xf32> to vector<8x1xf32>
    %cst_118 = arith.constant 3.200000e+01 : f32
    %306 = vector.broadcast %cst_118 : f32 to vector<8x1xf32>
    %307 = arith.divf %305, %306 : vector<8x1xf32>
    %308 = vector.broadcast %307 : vector<8x1xf32> to vector<8x32xf32>
    %309 = arith.subf %301, %308 : vector<8x32xf32>
    %310 = arith.mulf %309, %309 : vector<8x32xf32>
    %cst_119 = arith.constant dense<0.000000e+00> : vector<8xf32>
    %311 = vector.multi_reduction <add>, %310, %cst_119 [1] : vector<8x32xf32> to vector<8xf32>
    %312 = vector.shape_cast %311 : vector<8xf32> to vector<8x1xf32>
    %cst_120 = arith.constant 3.200000e+01 : f32
    %313 = vector.broadcast %cst_120 : f32 to vector<8x1xf32>
    %314 = arith.divf %312, %313 : vector<8x1xf32>
    %315 = vector.broadcast %307 : vector<8x1xf32> to vector<8x32xf32>
    %316 = arith.subf %301, %315 : vector<8x32xf32>
    %cst_121 = arith.constant 9.99999974E-6 : f32
    %317 = vector.broadcast %cst_121 : f32 to vector<8x1xf32>
    %318 = arith.addf %314, %317 : vector<8x1xf32>
    %319 = math.rsqrt %318 : vector<8x1xf32>
    %320 = vector.broadcast %319 : vector<8x1xf32> to vector<8x32xf32>
    %321 = arith.mulf %316, %320 : vector<8x32xf32>
    %322 = vector.broadcast %302 : vector<1x32xf32> to vector<8x32xf32>
    %323 = arith.mulf %321, %322 : vector<8x32xf32>
    %324 = vector.broadcast %303 : vector<1x32xf32> to vector<8x32xf32>
    %325 = arith.addf %323, %324 : vector<8x32xf32>
    %c104_122 = arith.constant 104 : index
    %c0_123 = arith.constant 0 : index
    %326 = vector.load %arg3[%c104_122, %c0_123] : memref<152x128xf32, #tpu.memory_space<vmem>>, vector<32x128xf32>
    %cst_124 = arith.constant dense<0.000000e+00> : vector<8x128xf32>
    %327 = tpu.matmul %325, %326, %cst_124 {dimension_numbers = #tpu.dot_dimension_numbers<[1], [0], [0], [1], [0, 0, 1, 1], [], []>} : vector<8x32xf32>, vector<32x128xf32>, vector<8x128xf32> -> vector<8x128xf32>
    %c136 = arith.constant 136 : index
    %c0_125 = arith.constant 0 : index
    %328 = vector.load %arg3[%c136, %c0_125] : memref<152x128xf32, #tpu.memory_space<vmem>>, vector<1x128xf32>
    %329 = vector.broadcast %328 : vector<1x128xf32> to vector<8x128xf32>
    %330 = arith.addf %327, %329 : vector<8x128xf32>
    %cst_126 = arith.constant 5.000000e-01 : f32
    %331 = vector.broadcast %cst_126 : f32 to vector<8x128xf32>
    %332 = arith.mulf %331, %330 : vector<8x128xf32>
    %cst_127 = arith.constant 0.707106769 : f32
    %333 = vector.broadcast %cst_127 : f32 to vector<8x128xf32>
    %334 = arith.mulf %330, %333 : vector<8x128xf32>
    %335 = math.erf %334 : vector<8x128xf32>
    %cst_128 = arith.constant 1.000000e+00 : f32
    %336 = vector.broadcast %cst_128 : f32 to vector<8x128xf32>
    %337 = arith.addf %336, %335 : vector<8x128xf32>
    %338 = arith.mulf %332, %337 : vector<8x128xf32>
    %c472 = arith.constant 472 : index
    %c0_129 = arith.constant 0 : index
    %339 = vector.load %arg1[%c472, %c0_129] : memref<640x32xf32, #tpu.memory_space<vmem>>, vector<128x32xf32>
    %cst_130 = arith.constant dense<0.000000e+00> : vector<8x32xf32>
    %340 = tpu.matmul %338, %339, %cst_130 {dimension_numbers = #tpu.dot_dimension_numbers<[1], [0], [0], [1], [0, 0, 1, 1], [], []>} : vector<8x128xf32>, vector<128x32xf32>, vector<8x32xf32> -> vector<8x32xf32>
    %c600 = arith.constant 600 : index
    %c0_131 = arith.constant 0 : index
    %341 = vector.load %arg1[%c600, %c0_131] : memref<640x32xf32, #tpu.memory_space<vmem>>, vector<1x32xf32>
    %342 = vector.broadcast %341 : vector<1x32xf32> to vector<8x32xf32>
    %343 = arith.addf %340, %342 : vector<8x32xf32>
    %344 = arith.addf %325, %343 : vector<8x32xf32>
    %c608 = arith.constant 608 : index
    %c0_132 = arith.constant 0 : index
    %345 = vector.load %arg1[%c608, %c0_132] : memref<640x32xf32, #tpu.memory_space<vmem>>, vector<1x32xf32>
    %c616 = arith.constant 616 : index
    %c0_133 = arith.constant 0 : index
    %346 = vector.load %arg1[%c616, %c0_133] : memref<640x32xf32, #tpu.memory_space<vmem>>, vector<1x32xf32>
    %cst_134 = arith.constant dense<0.000000e+00> : vector<8xf32>
    %347 = vector.multi_reduction <add>, %344, %cst_134 [1] : vector<8x32xf32> to vector<8xf32>
    %348 = vector.shape_cast %347 : vector<8xf32> to vector<8x1xf32>
    %cst_135 = arith.constant 3.200000e+01 : f32
    %349 = vector.broadcast %cst_135 : f32 to vector<8x1xf32>
    %350 = arith.divf %348, %349 : vector<8x1xf32>
    %351 = vector.broadcast %350 : vector<8x1xf32> to vector<8x32xf32>
    %352 = arith.subf %344, %351 : vector<8x32xf32>
    %353 = arith.mulf %352, %352 : vector<8x32xf32>
    %cst_136 = arith.constant dense<0.000000e+00> : vector<8xf32>
    %354 = vector.multi_reduction <add>, %353, %cst_136 [1] : vector<8x32xf32> to vector<8xf32>
    %355 = vector.shape_cast %354 : vector<8xf32> to vector<8x1xf32>
    %cst_137 = arith.constant 3.200000e+01 : f32
    %356 = vector.broadcast %cst_137 : f32 to vector<8x1xf32>
    %357 = arith.divf %355, %356 : vector<8x1xf32>
    %358 = vector.broadcast %350 : vector<8x1xf32> to vector<8x32xf32>
    %359 = arith.subf %344, %358 : vector<8x32xf32>
    %cst_138 = arith.constant 9.99999974E-6 : f32
    %360 = vector.broadcast %cst_138 : f32 to vector<8x1xf32>
    %361 = arith.addf %357, %360 : vector<8x1xf32>
    %362 = math.rsqrt %361 : vector<8x1xf32>
    %363 = vector.broadcast %362 : vector<8x1xf32> to vector<8x32xf32>
    %364 = arith.mulf %359, %363 : vector<8x32xf32>
    %365 = vector.broadcast %345 : vector<1x32xf32> to vector<8x32xf32>
    %366 = arith.mulf %364, %365 : vector<8x32xf32>
    %367 = vector.broadcast %346 : vector<1x32xf32> to vector<8x32xf32>
    %368 = arith.addf %366, %367 : vector<8x32xf32>
    %c624 = arith.constant 624 : index
    %c0_139 = arith.constant 0 : index
    %369 = vector.load %arg1[%c624, %c0_139] : memref<640x32xf32, #tpu.memory_space<vmem>>, vector<1x32xf32>
    %c632 = arith.constant 632 : index
    %c0_140 = arith.constant 0 : index
    %370 = vector.load %arg1[%c632, %c0_140] : memref<640x32xf32, #tpu.memory_space<vmem>>, vector<1x32xf32>
    %cst_141 = arith.constant dense<0.000000e+00> : vector<8xf32>
    %371 = vector.multi_reduction <add>, %368, %cst_141 [1] : vector<8x32xf32> to vector<8xf32>
    %372 = vector.shape_cast %371 : vector<8xf32> to vector<8x1xf32>
    %cst_142 = arith.constant 3.200000e+01 : f32
    %373 = vector.broadcast %cst_142 : f32 to vector<8x1xf32>
    %374 = arith.divf %372, %373 : vector<8x1xf32>
    %375 = vector.broadcast %374 : vector<8x1xf32> to vector<8x32xf32>
    %376 = arith.subf %368, %375 : vector<8x32xf32>
    %377 = arith.mulf %376, %376 : vector<8x32xf32>
    %cst_143 = arith.constant dense<0.000000e+00> : vector<8xf32>
    %378 = vector.multi_reduction <add>, %377, %cst_143 [1] : vector<8x32xf32> to vector<8xf32>
    %379 = vector.shape_cast %378 : vector<8xf32> to vector<8x1xf32>
    %cst_144 = arith.constant 3.200000e+01 : f32
    %380 = vector.broadcast %cst_144 : f32 to vector<8x1xf32>
    %381 = arith.divf %379, %380 : vector<8x1xf32>
    %382 = vector.broadcast %374 : vector<8x1xf32> to vector<8x32xf32>
    %383 = arith.subf %368, %382 : vector<8x32xf32>
    %cst_145 = arith.constant 9.99999974E-6 : f32
    %384 = vector.broadcast %cst_145 : f32 to vector<8x1xf32>
    %385 = arith.addf %381, %384 : vector<8x1xf32>
    %386 = math.rsqrt %385 : vector<8x1xf32>
    %387 = vector.broadcast %386 : vector<8x1xf32> to vector<8x32xf32>
    %388 = arith.mulf %383, %387 : vector<8x32xf32>
    %389 = vector.broadcast %369 : vector<1x32xf32> to vector<8x32xf32>
    %390 = arith.mulf %388, %389 : vector<8x32xf32>
    %391 = vector.broadcast %370 : vector<1x32xf32> to vector<8x32xf32>
    %392 = arith.addf %390, %391 : vector<8x32xf32>
    %c144 = arith.constant 144 : index
    %c0_146 = arith.constant 0 : index
    %393 = vector.load %arg3[%c144, %c0_146] : memref<152x128xf32, #tpu.memory_space<vmem>>, vector<2x8xf32>
    %cst_147 = arith.constant dense<0.000000e+00> : vector<2x32xf32>
    %394 = tpu.matmul %393, %392, %cst_147 {dimension_numbers = #tpu.dot_dimension_numbers<[1], [0], [0], [1], [0, 0, 1, 1], [], []>} : vector<2x8xf32>, vector<8x32xf32>, vector<2x32xf32> -> vector<2x32xf32>
    %c0_148 = arith.constant 0 : index
    %c0_149 = arith.constant 0 : index
    %395 = vector.load %arg4[%c0_148, %c0_149] : memref<40x3xf32, #tpu.memory_space<vmem>>, vector<32x3xf32>
    %cst_150 = arith.constant dense<0.000000e+00> : vector<2x3xf32>
    %396 = tpu.matmul %394, %395, %cst_150 {dimension_numbers = #tpu.dot_dimension_numbers<[1], [0], [0], [1], [0, 0, 1, 1], [], []>} : vector<2x32xf32>, vector<32x3xf32>, vector<2x3xf32> -> vector<2x3xf32>
    %c32_151 = arith.constant 32 : index
    %c0_152 = arith.constant 0 : index
    %397 = vector.load %arg4[%c32_151, %c0_152] : memref<40x3xf32, #tpu.memory_space<vmem>>, vector<1x3xf32>
    %398 = vector.broadcast %397 : vector<1x3xf32> to vector<2x3xf32>
    %399 = arith.addf %396, %398 : vector<2x3xf32>
    %c0_153 = arith.constant 0 : index
    %c0_154 = arith.constant 0 : index
    %400 = vector.load %arg5[%c0_153, %c0_154] : memref<2x3xf32, #tpu.memory_space<vmem>>, vector<2x3xf32>
    tpu.vector_store %arg5[%c0_153, %c0_154], %399 {strides = array<i32>} : memref<2x3xf32, #tpu.memory_space<vmem>>, vector<2x3xf32>,
    return
  }
}

</mosaic_0001>

<llo_original>
// kernel: tpu_custom_call.1
$region0: #{tpu_custom_call.1}
  #allocation0 [shape = 'u32[]', space=smem, size = 0x4, offset = 0x4, fixed_abs, tag = 'smem constant byte address 0x4 - core index']
  #allocation1 [shape = 'u32[144,128]{1,0:T(1,128)}', space=vmem, size = 0x12000, scoped, tag = 'internal scratch']
  %s0 = inlined_call_operand.vmem [shape: f32[16,4], index: 0, kind: input, shape index: {}]
  %s1 = inlined_call_operand.vmem [shape: f32[640,32], index: 1, kind: input, shape index: {}]
  %s2 = inlined_call_operand.vmem [shape: f32[80,96], index: 2, kind: input, shape index: {}]
  %s3 = inlined_call_operand.vmem [shape: f32[152,128], index: 3, kind: input, shape index: {}]
  %s4 = inlined_call_operand.vmem [shape: f32[40,3], index: 4, kind: input, shape index: {}]
  %s5 = inlined_call_operand.hbm [shape: f32[2,3], index: 5, kind: output, shape index: {}]
  %s6 = sld [smem:[#allocation0]]
  $region30: #{tpu_custom_call.1} parent=0
    _
  %s8 = ssub.s32 1, %s6
  %s9 = scalar_select 0, %s8, %s6
  $region1: #{tpu_custom_call.1} parent=0
    #allocation2 [shape = 'u8[1024]{0}', space=vmem, size = 0x400, scoped, tag = 'output window, operand 0, single buffered']
    #allocation3 [shape = 's32[1]{0}', space=sflag, size = 0x4, scoped, tag = 'scoped memory for tpu_custom_call.1']
    %10 = vsyncpa [#allocation3], 0
    // Predicated region
    $region2: #{tpu_custom_call.1} parent=1 // pred_check
      _
    $region3: #{tpu_custom_call.1} parent=1 // pred_check_branch
      %12 = sbr.rel (0) target = $region5
    $region4: #{tpu_custom_call.1} parent=1 // pred_region
      _
    $region5: #{tpu_custom_call.1} parent=1 // pred_fallthru
      _
    // Predicated region
    $region6: #{tpu_custom_call.1} parent=1 // pred_check
      _
    $region7: #{tpu_custom_call.1} parent=1 // pred_check_branch
      %14 = sbr.rel (0) target = $region9
    $region8: #{tpu_custom_call.1} parent=1 // pred_region
      _
    $region9: #{tpu_custom_call.1} parent=1 // pred_fallthru
      _
    // Predicated region
    $region10: #{tpu_custom_call.1} parent=1 // pred_check
      _
    $region11: #{tpu_custom_call.1} parent=1 // pred_check_branch
      %16 = sbr.rel (0) target = $region13
    $region12: #{tpu_custom_call.1} parent=1 // pred_region
      _
    $region13: #{tpu_custom_call.1} parent=1 // pred_fallthru
      _
    // Predicated region
    $region14: #{tpu_custom_call.1} parent=1 // pred_check
      _
    $region15: #{tpu_custom_call.1} parent=1 // pred_check_branch
      %18 = sbr.rel (0) target = $region17
    $region16: #{tpu_custom_call.1} parent=1 // pred_region
      _
    $region17: #{tpu_custom_call.1} parent=1 // pred_fallthru
      _
    // Predicated region
    $region18: #{tpu_custom_call.1} parent=1 // pred_check
      _
    $region19: #{tpu_custom_call.1} parent=1 // pred_check_branch
      %20 = sbr.rel (0) target = $region21
    $region20: #{tpu_custom_call.1} parent=1 // pred_region
      _
    $region21: #{tpu_custom_call.1} parent=1 // pred_fallthru
      _
    %v21 = vld [vmem:[%s0] sm:$0xff]
    %v22 = vld [vmem:[%s0 + $0x8] sm:$0xff]
    %v23 = vld [vmem:[%s1 + $0x10] sm:$0xf]
    %v24 = vld [vmem:[%s1] sm:$0xff]
    %v25 = vld [vmem:[%s1 + $0x8] sm:$0xff]
    %vm26 = vcmask 31744
    %v28 = vsel %vm26, %v21, 0
    %v31 = vsel %vm26, %v22, 0
    %vm33 = vcmask 1043456
    %v35 = vsel %vm33, %v23, 0
    %37 = vmatprep.subr.mxu0 0.0
    %38 = vmatpush1.msra.mxu0 %v35
    %39 = vmatprep.subr.mxu0 0.0
    %40 = vmatpush1.msra.mxu0 0.0
    %41 = vmatprep.subr.mxu0 0.0
    %42 = vmatpush1.msra.mxu0 0.0
    %43 = vmatprep.subr.mxu0 0.0
    %44 = vmatpush1.msra.mxu0 0.0
    %45 = vmatprep.subr.mxu0 0.0
    %46 = vmatpush1.msra.mxu0 0.0
    %47 = vmatprep.subr.mxu0 0.0
    %48 = vmatpush1.msra.mxu0 0.0
    %49 = vmatprep.subr.mxu0 0.0
    %50 = vmatpush1.msra.mxu0 0.0
    %51 = vmatprep.subr.mxu0 0.0
    %52 = vmatpush1.msra.mxu0 0.0
    %53 = vmatprep.subr.mxu0 0.0
    %54 = vmatpush1.msra.mxu0 0.0
    %55 = vmatprep.subr.mxu0 0.0
    %56 = vmatpush1.msra.mxu0 0.0
    %57 = vmatprep.subr.mxu0 0.0
    %58 = vmatpush1.msra.mxu0 0.0
    %59 = vmatprep.subr.mxu0 0.0
    %60 = vmatpush1.msra.mxu0 0.0
    %61 = vmatprep.subr.mxu0 0.0
    %62 = vmatpush1.msra.mxu0 0.0
    %63 = vmatprep.subr.mxu0 0.0
    %64 = vmatpush1.msra.mxu0 0.0
    %65 = vmatprep.subr.mxu0 0.0
    %66 = vmatpush1.msra.mxu0 0.0
    %67 = vmatprep.subr.mxu0 0.0
    %68 = vmatpush1.msra.mxu0 0.0
    %69 = vmatprep.subr.mxu0 0.0
    %70 = vmatpush1.msra.mxu0 0.0
    %71 = vmatprep.subr.mxu0 0.0
    %72 = vmatpush1.msra.mxu0 0.0
    %73 = vmatprep.subr.mxu0 0.0
    %74 = vmatpush1.msra.mxu0 0.0
    %75 = vmatprep.subr.mxu0 0.0
    %76 = vmatpush1.msra.mxu0 0.0
    %77 = vmatprep.subr.mxu0 0.0
    %78 = vmatpush1.msra.mxu0 0.0
    %79 = vmatprep.subr.mxu0 0.0
    %80 = vmatpush1.msra.mxu0 0.0
    %81 = vmatprep.subr.mxu0 0.0
    %82 = vmatpush1.msra.mxu0 0.0
    %83 = vmatprep.subr.mxu0 0.0
    %84 = vmatpush1.msra.mxu0 0.0
    %85 = vmatprep.subr.mxu0 0.0
    %86 = vmatpush1.msra.mxu0 0.0
    %87 = vmatprep.subr.mxu0 0.0
    %88 = vmatpush1.msra.mxu0 0.0
    %89 = vmatprep.subr.mxu0 0.0
    %90 = vmatpush1.msra.mxu0 0.0
    %91 = vmatprep.subr.mxu0 0.0
    %92 = vmatpush1.msra.mxu0 0.0
    %93 = vmatprep.subr.mxu0 0.0
    %94 = vmatpush1.msra.mxu0 0.0
    %95 = vmatprep.subr.mxu0 0.0
    %96 = vmatpush1.msra.mxu0 0.0
    %97 = vmatprep.subr.mxu0 0.0
    %98 = vmatpush1.msra.mxu0 0.0
    %99 = vmatprep.subr.mxu0 0.0
    %100 = vmatpush1.msra.mxu0 0.0
    %101 = vmatprep.mubr.f32.mxu0 0.0
    %102 = vmatmul.mubr.f32.gmra.mrb[0].mxu0 %v28
    %v103 = vpop.f32.mrb[0].mxu0
    %v104 = vadd.f32 %v24, %v103
    %v105 = vpop.f32.mrb[0].mxu0
    %106 = vmatprep.mubr.f32.mxu0 0.0
    %107 = vmatmul.mubr.f32.gmra.mrb[0].mxu0 %v31
    %v108 = vpop.f32.mrb[0].mxu0
    %v109 = vadd.f32 %v25, %v108
    %v110 = vpop.f32.mrb[0].mxu0
    %111 = vdwg.mxu0
    %v112 = vld [vmem:[%s1 + $0x18] sm:$0x1]
    %v113 = vld [vmem:[%s1 + $0x20] sm:$0x1]
    %v114 = vld [vmem:[%s1 + $0x28] sm:$0x1]
    %v115 = vld [vmem:[%s1 + $0x30] sm:$0x1]
    %v116 = vld [vmem:[%s3] sm:$0xff]
    %v117 = vld [vmem:[%s3 + $0x8] sm:$0xff]
    %v118 = vld [vmem:[%s2] sm:$0xff]
    %v119 = vld [vmem:[%s2 + $0x8] sm:$0xff]
    %v120 = vld [vmem:[%s2 + $0x10] sm:$0xff]
    %v121 = vld [vmem:[%s2 + $0x18] sm:$0xff]
    %v122 = vld [vmem:[%s2 + $0x20] sm:$0x1]
    %v123 = vlaneseq
    %v124 = vshrl.u32 %v123, 7
    %v125 = vsub.s32 0, %v124
    %v126 = vrot.slane %v122, %v125
    %vm127 = vcmask 261120
    %v129 = vsel %vm127, %v104, 0
    %v132 = vsel %vm127, %v109, 0
    %134 = vmatprep.subr.mxu0 0.0
    %135 = vmatpush1.msra.mxu0 %v118
    %136 = vmatprep.subr.mxu0 0.0
    %137 = vmatpush1.msra.mxu0 %v119
    %138 = vmatprep.subr.mxu0 0.0
    %139 = vmatpush1.msra.mxu0 %v120
    %140 = vmatprep.subr.mxu0 0.0
    %141 = vmatpush1.msra.mxu0 %v121
    %142 = vmatprep.subr.mxu0 0.0
    %143 = vmatpush1.msra.mxu0 0.0
    %144 = vmatprep.subr.mxu0 0.0
    %145 = vmatpush1.msra.mxu0 0.0
    %146 = vmatprep.subr.mxu0 0.0
    %147 = vmatpush1.msra.mxu0 0.0
    %148 = vmatprep.subr.mxu0 0.0
    %149 = vmatpush1.msra.mxu0 0.0
    %150 = vmatprep.subr.mxu0 0.0
    %151 = vmatpush1.msra.mxu0 0.0
    %152 = vmatprep.subr.mxu0 0.0
    %153 = vmatpush1.msra.mxu0 0.0
    %154 = vmatprep.subr.mxu0 0.0
    %155 = vmatpush1.msra.mxu0 0.0
    %156 = vmatprep.subr.mxu0 0.0
    %157 = vmatpush1.msra.mxu0 0.0
    %158 = vmatprep.subr.mxu0 0.0
    %159 = vmatpush1.msra.mxu0 0.0
    %160 = vmatprep.subr.mxu0 0.0
    %161 = vmatpush1.msra.mxu0 0.0
    %162 = vmatprep.subr.mxu0 0.0
    %163 = vmatpush1.msra.mxu0 0.0
    %164 = vmatprep.subr.mxu0 0.0
    %165 = vmatpush1.msra.mxu0 0.0
    %166 = vmatprep.subr.mxu0 0.0
    %167 = vmatpush1.msra.mxu0 0.0
    %168 = vmatprep.subr.mxu0 0.0
    %169 = vmatpush1.msra.mxu0 0.0
    %170 = vmatprep.subr.mxu0 0.0
    %171 = vmatpush1.msra.mxu0 0.0
    %172 = vmatprep.subr.mxu0 0.0
    %173 = vmatpush1.msra.mxu0 0.0
    %174 = vmatprep.subr.mxu0 0.0
    %175 = vmatpush1.msra.mxu0 0.0
    %176 = vmatprep.subr.mxu0 0.0
    %177 = vmatpush1.msra.mxu0 0.0
    %178 = vmatprep.subr.mxu0 0.0
    %179 = vmatpush1.msra.mxu0 0.0
    %180 = vmatprep.subr.mxu0 0.0
    %181 = vmatpush1.msra.mxu0 0.0
    %182 = vmatprep.subr.mxu0 0.0
    %183 = vmatpush1.msra.mxu0 0.0
    %184 = vmatprep.subr.mxu0 0.0
    %185 = vmatpush1.msra.mxu0 0.0
    %186 = vmatprep.subr.mxu0 0.0
    %187 = vmatpush1.msra.mxu0 0.0
    %188 = vmatprep.subr.mxu0 0.0
    %189 = vmatpush1.msra.mxu0 0.0
    %190 = vmatprep.subr.mxu0 0.0
    %191 = vmatpush1.msra.mxu0 0.0
    %192 = vmatprep.subr.mxu0 0.0
    %193 = vmatpush1.msra.mxu0 0.0
    %194 = vmatprep.subr.mxu0 0.0
    %195 = vmatpush1.msra.mxu0 0.0
    %196 = vmatprep.subr.mxu0 0.0
    %197 = vmatpush1.msra.mxu0 0.0
    %198 = vmatprep.mubr.f32.mxu0 0.0
    %199 = vmatmul.mubr.f32.gmra.mrb[0].mxu0 %v129
    %v200 = vpop.f32.mrb[0].mxu0
    %v201 = vadd.f32 %v126, %v200
    %v202 = vpop.f32.mrb[0].mxu0
    %203 = vmatprep.mubr.f32.mxu0 0.0
    %204 = vmatmul.mubr.f32.gmra.mrb[0].mxu0 %v132
    %v205 = vpop.f32.mrb[0].mxu0
    %v206 = vadd.f32 %v126, %v205
    %v207 = vpop.f32.mrb[0].mxu0
    %208 = vdwg.mxu0
    %v209 = vlaneseq
    %v210 = vshrl.u32 %v209, 7
    %v211 = vsub.s32 0, %v210
    %v212 = vrot.slane %v112, %v211
    %v213 = vmul.f32 %v201, %v212
    %v214 = vmul.f32 %v206, %v212
    %217 = vrot.lane.b32.xlu0 %v201, 96
    %v218 = vpop.permute.xlu0 %217
    %219 = vrot.lane.b32.xlu0 %v206, 96
    %v220 = vpop.permute.xlu0 %219
    %v222 = vsel %vm127, %v213, 0
    %v225 = vsel %vm127, %v214, 0
    %v227 = vsel %vm127, %v218, 0
    %v229 = vsel %vm127, %v220, 0
    %231 = vmatprep.subr.mxu0 0.0
    %232 = vmatpush1.xpose.msra.mxu0 %v227
    %233 = vmatprep.subr.mxu0 0.0
    %234 = vmatpush1.xpose.msra.mxu0 %v229
    %235 = vmatprep.subr.mxu0 0.0
    %236 = vmatpush1.xpose.msra.mxu0 0.0
    %237 = vmatprep.subr.mxu0 0.0
    %238 = vmatpush1.xpose.msra.mxu0 0.0
    %239 = vmatprep.subr.mxu0 0.0
    %240 = vmatpush1.xpose.msra.mxu0 0.0
    %241 = vmatprep.subr.mxu0 0.0
    %242 = vmatpush1.xpose.msra.mxu0 0.0
    %243 = vmatprep.subr.mxu0 0.0
    %244 = vmatpush1.xpose.msra.mxu0 0.0
    %245 = vmatprep.subr.mxu0 0.0
    %246 = vmatpush1.xpose.msra.mxu0 0.0
    %247 = vmatprep.subr.mxu0 0.0
    %248 = vmatpush1.xpose.msra.mxu0 0.0
    %249 = vmatprep.subr.mxu0 0.0
    %250 = vmatpush1.xpose.msra.mxu0 0.0
    %251 = vmatprep.subr.mxu0 0.0
    %252 = vmatpush1.xpose.msra.mxu0 0.0
    %253 = vmatprep.subr.mxu0 0.0
    %254 = vmatpush1.xpose.msra.mxu0 0.0
    %255 = vmatprep.subr.mxu0 0.0
    %256 = vmatpush1.xpose.msra.mxu0 0.0
    %257 = vmatprep.subr.mxu0 0.0
    %258 = vmatpush1.xpose.msra.mxu0 0.0
    %259 = vmatprep.subr.mxu0 0.0
    %260 = vmatpush1.xpose.msra.mxu0 0.0
    %261 = vmatprep.subr.mxu0 0.0
    %262 = vmatpush1.xpose.msra.mxu0 0.0
    %263 = vmatprep.subr.mxu0 0.0
    %264 = vmatpush1.xpose.msra.mxu0 0.0
    %265 = vmatprep.subr.mxu0 0.0
    %266 = vmatpush1.xpose.msra.mxu0 0.0
    %267 = vmatprep.subr.mxu0 0.0
    %268 = vmatpush1.xpose.msra.mxu0 0.0
    %269 = vmatprep.subr.mxu0 0.0
    %270 = vmatpush1.xpose.msra.mxu0 0.0
    %271 = vmatprep.subr.mxu0 0.0
    %272 = vmatpush1.xpose.msra.mxu0 0.0
    %273 = vmatprep.subr.mxu0 0.0
    %274 = vmatpush1.xpose.msra.mxu0 0.0
    %275 = vmatprep.subr.mxu0 0.0
    %276 = vmatpush1.xpose.msra.mxu0 0.0
    %277 = vmatprep.subr.mxu0 0.0
    %278 = vmatpush1.xpose.msra.mxu0 0.0
    %279 = vmatprep.subr.mxu0 0.0
    %280 = vmatpush1.xpose.msra.mxu0 0.0
    %281 = vmatprep.subr.mxu0 0.0
    %282 = vmatpush1.xpose.msra.mxu0 0.0
    %283 = vmatprep.subr.mxu0 0.0
    %284 = vmatpush1.xpose.msra.mxu0 0.0
    %285 = vmatprep.subr.mxu0 0.0
    %286 = vmatpush1.xpose.msra.mxu0 0.0
    %287 = vmatprep.subr.mxu0 0.0
    %288 = vmatpush1.xpose.msra.mxu0 0.0
    %289 = vmatprep.subr.mxu0 0.0
    %290 = vmatpush1.xpose.msra.mxu0 0.0
    %291 = vmatprep.subr.mxu0 0.0
    %292 = vmatpush1.xpose.msra.mxu0 0.0
    %293 = vmatprep.subr.mxu0 0.0
    %294 = vmatpush1.xpose.msra.mxu0 0.0
    %295 = vmatprep.mubr.f32.mxu0 0.0
    %296 = vmatmul.mubr.f32.gmra.mrb[0].mxu0 %v222
    %v297 = vpop.f32.mrb[0].mxu0
    %v298 = vadd.f32 0.0, %v297
    %v299 = vpop.f32.mrb[0].mxu0
    %300 = vmatprep.mubr.f32.mxu0 0.0
    %301 = vmatmul.mubr.f32.gmra.mrb[0].mxu0 %v225
    %v302 = vpop.f32.mrb[0].mxu0
    %v303 = vadd.f32 0.0, %v302
    %v304 = vpop.f32.mrb[0].mxu0
    %305 = vdwg.mxu0
    %v306 = vmul.f32 %v298, 0.35355338
    %v307 = vmul.f32 %v303, 0.35355338
    %v308 = vadd.f32 %v306, %v116
    %v309 = vadd.f32 %v307, %v117
    %vm310 = vcmask 130048
    %v311 = vsel %vm310, %v308, -inf
    %312 = vmax.xlane.f32.xlu0 %v311
    %v313 = vpop.xlane.xlu0 %312
    %v314 = vsel %vm310, %v309, -inf
    %315 = vmax.xlane.f32.xlu0 %v314
    %v316 = vpop.xlane.xlu0 %315
    %v317 = vsub.f32 %v308, %v313
    %v318 = vsub.f32 %v309, %v316
    %v319 = vmul.f32 %v317, 1.442695
    %v320 = vpow.pop %v319
    %v321 = vmul.f32 %v318, 1.442695
    %v322 = vpow.pop %v321
    %v323 = vsel %vm310, %v320, 0.0
    %324 = vadd.xlane.f32.xlu0 %v323
    %v325 = vpop.xlane.xlu0 %324
    %v326 = vsel %vm310, %v322, 0.0
    %327 = vadd.xlane.f32.xlu0 %v326
    %v328 = vpop.xlane.xlu0 %327
    %v329 = vrcp.pop %v325
    %v330 = vrcp.pop %v328
    %332 = vrot.lane.b32.xlu0 %v212, 64
    %v333 = vpop.permute.xlu0 %332
    %v335 = vmul.f32 %v201, %v333
    %v336 = vmul.f32 %v206, %v333
    %339 = vrot.lane.b32.xlu0 %v335, 64
    %v340 = vpop.permute.xlu0 %339
    %341 = vrot.lane.b32.xlu0 %v336, 64
    %v342 = vpop.permute.xlu0 %341
    %v346 = vsel %vm310, %v320, 0
    %v349 = vsel %vm310, %v322, 0
    %351 = vmatprep.subr.mxu0 0.0
    %352 = vmatpush1.msra.mxu0 %v340
    %353 = vmatprep.subr.mxu0 0.0
    %354 = vmatpush1.msra.mxu0 %v342
    %355 = vmatprep.subr.mxu0 0.0
    %356 = vmatpush1.msra.mxu0 0.0
    %357 = vmatprep.subr.mxu0 0.0
    %358 = vmatpush1.msra.mxu0 0.0
    %359 = vmatprep.subr.mxu0 0.0
    %360 = vmatpush1.msra.mxu0 0.0
    %361 = vmatprep.subr.mxu0 0.0
    %362 = vmatpush1.msra.mxu0 0.0
    %363 = vmatprep.subr.mxu0 0.0
    %364 = vmatpush1.msra.mxu0 0.0
    %365 = vmatprep.subr.mxu0 0.0
    %366 = vmatpush1.msra.mxu0 0.0
    %367 = vmatprep.subr.mxu0 0.0
    %368 = vmatpush1.msra.mxu0 0.0
    %369 = vmatprep.subr.mxu0 0.0
    %370 = vmatpush1.msra.mxu0 0.0
    %371 = vmatprep.subr.mxu0 0.0
    %372 = vmatpush1.msra.mxu0 0.0
    %373 = vmatprep.subr.mxu0 0.0
    %374 = vmatpush1.msra.mxu0 0.0
    %375 = vmatprep.subr.mxu0 0.0
    %376 = vmatpush1.msra.mxu0 0.0
    %377 = vmatprep.subr.mxu0 0.0
    %378 = vmatpush1.msra.mxu0 0.0
    %379 = vmatprep.subr.mxu0 0.0
    %380 = vmatpush1.msra.mxu0 0.0
    %381 = vmatprep.subr.mxu0 0.0
    %382 = vmatpush1.msra.mxu0 0.0
    %383 = vmatprep.subr.mxu0 0.0
    %384 = vmatpush1.msra.mxu0 0.0
    %385 = vmatprep.subr.mxu0 0.0
    %386 = vmatpush1.msra.mxu0 0.0
    %387 = vmatprep.subr.mxu0 0.0
    %388 = vmatpush1.msra.mxu0 0.0
    %389 = vmatprep.subr.mxu0 0.0
    %390 = vmatpush1.msra.mxu0 0.0
    %391 = vmatprep.subr.mxu0 0.0
    %392 = vmatpush1.msra.mxu0 0.0
    %393 = vmatprep.subr.mxu0 0.0
    %394 = vmatpush1.msra.mxu0 0.0
    %395 = vmatprep.subr.mxu0 0.0
    %396 = vmatpush1.msra.mxu0 0.0
    %397 = vmatprep.subr.mxu0 0.0
    %398 = vmatpush1.msra.mxu0 0.0
    %399 = vmatprep.subr.mxu0 0.0
    %400 = vmatpush1.msra.mxu0 0.0
    %401 = vmatprep.subr.mxu0 0.0
    %402 = vmatpush1.msra.mxu0 0.0
    %403 = vmatprep.subr.mxu0 0.0
    %404 = vmatpush1.msra.mxu0 0.0
    %405 = vmatprep.subr.mxu0 0.0
    %406 = vmatpush1.msra.mxu0 0.0
    %407 = vmatprep.subr.mxu0 0.0
    %408 = vmatpush1.msra.mxu0 0.0
    %409 = vmatprep.subr.mxu0 0.0
    %410 = vmatpush1.msra.mxu0 0.0
    %411 = vmatprep.subr.mxu0 0.0
    %412 = vmatpush1.msra.mxu0 0.0
    %413 = vmatprep.subr.mxu0 0.0
    %414 = vmatpush1.msra.mxu0 0.0
    %415 = vmatprep.mubr.f32.mxu0 0.0
    %416 = vmatmul.mubr.f32.gmra.mrb[0].mxu0 %v346
    %v417 = vpop.f32.mrb[0].mxu0
    %v418 = vadd.f32 0.0, %v417
    %v419 = vpop.f32.mrb[0].mxu0
    %420 = vmatprep.mubr.f32.mxu0 0.0
    %421 = vmatmul.mubr.f32.gmra.mrb[0].mxu0 %v349
    %v422 = vpop.f32.mrb[0].mxu0
    %v423 = vadd.f32 0.0, %v422
    %v424 = vpop.f32.mrb[0].mxu0
    %425 = vdwg.mxu0
    %v426 = vmul.f32 %v418, %v329
    %v427 = vmul.f32 %v423, %v330
    %v428 = vadd.f32 %v426, 0.0
    %v429 = vadd.f32 %v427, 0.0
    %v430 = vlaneseq
    %v431 = vshrl.u32 %v430, 7
    %v432 = vsub.s32 0, %v431
    %v433 = vrot.slane %v113, %v432
    %v434 = vmul.f32 %v201, %v433
    %v435 = vmul.f32 %v206, %v433
    %v437 = vsel %vm127, %v434, 0
    %v440 = vsel %vm127, %v435, 0
    %442 = vmatprep.subr.mxu0 0.0
    %443 = vmatpush1.xpose.msra.mxu0 %v227
    %444 = vmatprep.subr.mxu0 0.0
    %445 = vmatpush1.xpose.msra.mxu0 %v229
    %446 = vmatprep.subr.mxu0 0.0
    %447 = vmatpush1.xpose.msra.mxu0 0.0
    %448 = vmatprep.subr.mxu0 0.0
    %449 = vmatpush1.xpose.msra.mxu0 0.0
    %450 = vmatprep.subr.mxu0 0.0
    %451 = vmatpush1.xpose.msra.mxu0 0.0
    %452 = vmatprep.subr.mxu0 0.0
    %453 = vmatpush1.xpose.msra.mxu0 0.0
    %454 = vmatprep.subr.mxu0 0.0
    %455 = vmatpush1.xpose.msra.mxu0 0.0
    %456 = vmatprep.subr.mxu0 0.0
    %457 = vmatpush1.xpose.msra.mxu0 0.0
    %458 = vmatprep.subr.mxu0 0.0
    %459 = vmatpush1.xpose.msra.mxu0 0.0
    %460 = vmatprep.subr.mxu0 0.0
    %461 = vmatpush1.xpose.msra.mxu0 0.0
    %462 = vmatprep.subr.mxu0 0.0
    %463 = vmatpush1.xpose.msra.mxu0 0.0
    %464 = vmatprep.subr.mxu0 0.0
    %465 = vmatpush1.xpose.msra.mxu0 0.0
    %466 = vmatprep.subr.mxu0 0.0
    %467 = vmatpush1.xpose.msra.mxu0 0.0
    %468 = vmatprep.subr.mxu0 0.0
    %469 = vmatpush1.xpose.msra.mxu0 0.0
    %470 = vmatprep.subr.mxu0 0.0
    %471 = vmatpush1.xpose.msra.mxu0 0.0
    %472 = vmatprep.subr.mxu0 0.0
    %473 = vmatpush1.xpose.msra.mxu0 0.0
    %474 = vmatprep.subr.mxu0 0.0
    %475 = vmatpush1.xpose.msra.mxu0 0.0
    %476 = vmatprep.subr.mxu0 0.0
    %477 = vmatpush1.xpose.msra.mxu0 0.0
    %478 = vmatprep.subr.mxu0 0.0
    %479 = vmatpush1.xpose.msra.mxu0 0.0
    %480 = vmatprep.subr.mxu0 0.0
    %481 = vmatpush1.xpose.msra.mxu0 0.0
    %482 = vmatprep.subr.mxu0 0.0
    %483 = vmatpush1.xpose.msra.mxu0 0.0
    %484 = vmatprep.subr.mxu0 0.0
    %485 = vmatpush1.xpose.msra.mxu0 0.0
    %486 = vmatprep.subr.mxu0 0.0
    %487 = vmatpush1.xpose.msra.mxu0 0.0
    %488 = vmatprep.subr.mxu0 0.0
    %489 = vmatpush1.xpose.msra.mxu0 0.0
    %490 = vmatprep.subr.mxu0 0.0
    %491 = vmatpush1.xpose.msra.mxu0 0.0
    %492 = vmatprep.subr.mxu0 0.0
    %493 = vmatpush1.xpose.msra.mxu0 0.0
    %494 = vmatprep.subr.mxu0 0.0
    %495 = vmatpush1.xpose.msra.mxu0 0.0
    %496 = vmatprep.subr.mxu0 0.0
    %497 = vmatpush1.xpose.msra.mxu0 0.0
    %498 = vmatprep.subr.mxu0 0.0
    %499 = vmatpush1.xpose.msra.mxu0 0.0
    %500 = vmatprep.subr.mxu0 0.0
    %501 = vmatpush1.xpose.msra.mxu0 0.0
    %502 = vmatprep.subr.mxu0 0.0
    %503 = vmatpush1.xpose.msra.mxu0 0.0
    %504 = vmatprep.subr.mxu0 0.0
    %505 = vmatpush1.xpose.msra.mxu0 0.0
    %506 = vmatprep.mubr.f32.mxu0 0.0
    %507 = vmatmul.mubr.f32.gmra.mrb[0].mxu0 %v437
    %v508 = vpop.f32.mrb[0].mxu0
    %v509 = vadd.f32 0.0, %v508
    %v510 = vpop.f32.mrb[0].mxu0
    %511 = vmatprep.mubr.f32.mxu0 0.0
    %512 = vmatmul.mubr.f32.gmra.mrb[0].mxu0 %v440
    %v513 = vpop.f32.mrb[0].mxu0
    %v514 = vadd.f32 0.0, %v513
    %v515 = vpop.f32.mrb[0].mxu0
    %516 = vdwg.mxu0
    %v517 = vmul.f32 %v509, 0.35355338
    %v518 = vmul.f32 %v514, 0.35355338
    %v519 = vadd.f32 %v517, %v116
    %v520 = vadd.f32 %v518, %v117
    %v521 = vsel %vm310, %v519, -inf
    %522 = vmax.xlane.f32.xlu0 %v521
    %v523 = vpop.xlane.xlu0 %522
    %v524 = vsel %vm310, %v520, -inf
    %525 = vmax.xlane.f32.xlu0 %v524
    %v526 = vpop.xlane.xlu0 %525
    %v527 = vsub.f32 %v519, %v523
    %v528 = vsub.f32 %v520, %v526
    %v529 = vmul.f32 %v527, 1.442695
    %v530 = vpow.pop %v529
    %v531 = vmul.f32 %v528, 1.442695
    %v532 = vpow.pop %v531
    %v533 = vsel %vm310, %v530, 0.0
    %534 = vadd.xlane.f32.xlu0 %v533
    %v535 = vpop.xlane.xlu0 %534
    %v536 = vsel %vm310, %v532, 0.0
    %537 = vadd.xlane.f32.xlu0 %v536
    %v538 = vpop.xlane.xlu0 %537
    %v539 = vrcp.pop %v535
    %v540 = vrcp.pop %v538
    %542 = vrot.lane.b32.xlu0 %v433, 64
    %v543 = vpop.permute.xlu0 %542
    %v545 = vmul.f32 %v201, %v543
    %v546 = vmul.f32 %v206, %v543
    %549 = vrot.lane.b32.xlu0 %v545, 64
    %v550 = vpop.permute.xlu0 %549
    %551 = vrot.lane.b32.xlu0 %v546, 64
    %v552 = vpop.permute.xlu0 %551
    %v556 = vsel %vm310, %v530, 0
    %v559 = vsel %vm310, %v532, 0
    %561 = vmatprep.subr.mxu0 0.0
    %562 = vmatpush1.msra.mxu0 %v550
    %563 = vmatprep.subr.mxu0 0.0
    %564 = vmatpush1.msra.mxu0 %v552
    %565 = vmatprep.subr.mxu0 0.0
    %566 = vmatpush1.msra.mxu0 0.0
    %567 = vmatprep.subr.mxu0 0.0
    %568 = vmatpush1.msra.mxu0 0.0
    %569 = vmatprep.subr.mxu0 0.0
    %570 = vmatpush1.msra.mxu0 0.0
    %571 = vmatprep.subr.mxu0 0.0
    %572 = vmatpush1.msra.mxu0 0.0
    %573 = vmatprep.subr.mxu0 0.0
    %574 = vmatpush1.msra.mxu0 0.0
    %575 = vmatprep.subr.mxu0 0.0
    %576 = vmatpush1.msra.mxu0 0.0
    %577 = vmatprep.subr.mxu0 0.0
    %578 = vmatpush1.msra.mxu0 0.0
    %579 = vmatprep.subr.mxu0 0.0
    %580 = vmatpush1.msra.mxu0 0.0
    %581 = vmatprep.subr.mxu0 0.0
    %582 = vmatpush1.msra.mxu0 0.0
    %583 = vmatprep.subr.mxu0 0.0
    %584 = vmatpush1.msra.mxu0 0.0
    %585 = vmatprep.subr.mxu0 0.0
    %586 = vmatpush1.msra.mxu0 0.0
    %587 = vmatprep.subr.mxu0 0.0
    %588 = vmatpush1.msra.mxu0 0.0
    %589 = vmatprep.subr.mxu0 0.0
    %590 = vmatpush1.msra.mxu0 0.0
    %591 = vmatprep.subr.mxu0 0.0
    %592 = vmatpush1.msra.mxu0 0.0
    %593 = vmatprep.subr.mxu0 0.0
    %594 = vmatpush1.msra.mxu0 0.0
    %595 = vmatprep.subr.mxu0 0.0
    %596 = vmatpush1.msra.mxu0 0.0
    %597 = vmatprep.subr.mxu0 0.0
    %598 = vmatpush1.msra.mxu0 0.0
    %599 = vmatprep.subr.mxu0 0.0
    %600 = vmatpush1.msra.mxu0 0.0
    %601 = vmatprep.subr.mxu0 0.0
    %602 = vmatpush1.msra.mxu0 0.0
    %603 = vmatprep.subr.mxu0 0.0
    %604 = vmatpush1.msra.mxu0 0.0
    %605 = vmatprep.subr.mxu0 0.0
    %606 = vmatpush1.msra.mxu0 0.0
    %607 = vmatprep.subr.mxu0 0.0
    %608 = vmatpush1.msra.mxu0 0.0
    %609 = vmatprep.subr.mxu0 0.0
    %610 = vmatpush1.msra.mxu0 0.0
    %611 = vmatprep.subr.mxu0 0.0
    %612 = vmatpush1.msra.mxu0 0.0
    %613 = vmatprep.subr.mxu0 0.0
    %614 = vmatpush1.msra.mxu0 0.0
    %615 = vmatprep.subr.mxu0 0.0
    %616 = vmatpush1.msra.mxu0 0.0
    %617 = vmatprep.subr.mxu0 0.0
    %618 = vmatpush1.msra.mxu0 0.0
    %619 = vmatprep.subr.mxu0 0.0
    %620 = vmatpush1.msra.mxu0 0.0
    %621 = vmatprep.subr.mxu0 0.0
    %622 = vmatpush1.msra.mxu0 0.0
    %623 = vmatprep.subr.mxu0 0.0
    %624 = vmatpush1.msra.mxu0 0.0
    %625 = vmatprep.mubr.f32.mxu0 0.0
    %626 = vmatmul.mubr.f32.gmra.mrb[0].mxu0 %v556
    %v627 = vpop.f32.mrb[0].mxu0
    %v628 = vadd.f32 0.0, %v627
    %v629 = vpop.f32.mrb[0].mxu0
    %630 = vmatprep.mubr.f32.mxu0 0.0
    %631 = vmatmul.mubr.f32.gmra.mrb[0].mxu0 %v559
    %v632 = vpop.f32.mrb[0].mxu0
    %v633 = vadd.f32 0.0, %v632
    %v634 = vpop.f32.mrb[0].mxu0
    %635 = vdwg.mxu0
    %v636 = vmul.f32 %v628, %v539
    %v637 = vmul.f32 %v633, %v540
    %v638 = vadd.f32 %v428, %v636
    %v639 = vadd.f32 %v429, %v637
    %v640 = vlaneseq
    %v641 = vshrl.u32 %v640, 7
    %v642 = vsub.s32 0, %v641
    %v643 = vrot.slane %v114, %v642
    %v644 = vmul.f32 %v201, %v643
    %v645 = vmul.f32 %v206, %v643
    %v647 = vsel %vm127, %v644, 0
    %v650 = vsel %vm127, %v645, 0
    %652 = vmatprep.subr.mxu0 0.0
    %653 = vmatpush1.xpose.msra.mxu0 %v227
    %654 = vmatprep.subr.mxu0 0.0
    %655 = vmatpush1.xpose.msra.mxu0 %v229
    %656 = vmatprep.subr.mxu0 0.0
    %657 = vmatpush1.xpose.msra.mxu0 0.0
    %658 = vmatprep.subr.mxu0 0.0
    %659 = vmatpush1.xpose.msra.mxu0 0.0
    %660 = vmatprep.subr.mxu0 0.0
    %661 = vmatpush1.xpose.msra.mxu0 0.0
    %662 = vmatprep.subr.mxu0 0.0
    %663 = vmatpush1.xpose.msra.mxu0 0.0
    %664 = vmatprep.subr.mxu0 0.0
    %665 = vmatpush1.xpose.msra.mxu0 0.0
    %666 = vmatprep.subr.mxu0 0.0
    %667 = vmatpush1.xpose.msra.mxu0 0.0
    %668 = vmatprep.subr.mxu0 0.0
    %669 = vmatpush1.xpose.msra.mxu0 0.0
    %670 = vmatprep.subr.mxu0 0.0
    %671 = vmatpush1.xpose.msra.mxu0 0.0
    %672 = vmatprep.subr.mxu0 0.0
    %673 = vmatpush1.xpose.msra.mxu0 0.0
    %674 = vmatprep.subr.mxu0 0.0
    %675 = vmatpush1.xpose.msra.mxu0 0.0
    %676 = vmatprep.subr.mxu0 0.0
    %677 = vmatpush1.xpose.msra.mxu0 0.0
    %678 = vmatprep.subr.mxu0 0.0
    %679 = vmatpush1.xpose.msra.mxu0 0.0
    %680 = vmatprep.subr.mxu0 0.0
    %681 = vmatpush1.xpose.msra.mxu0 0.0
    %682 = vmatprep.subr.mxu0 0.0
    %683 = vmatpush1.xpose.msra.mxu0 0.0
    %684 = vmatprep.subr.mxu0 0.0
    %685 = vmatpush1.xpose.msra.mxu0 0.0
    %686 = vmatprep.subr.mxu0 0.0
    %687 = vmatpush1.xpose.msra.mxu0 0.0
    %688 = vmatprep.subr.mxu0 0.0
    %689 = vmatpush1.xpose.msra.mxu0 0.0
    %690 = vmatprep.subr.mxu0 0.0
    %691 = vmatpush1.xpose.msra.mxu0 0.0
    %692 = vmatprep.subr.mxu0 0.0
    %693 = vmatpush1.xpose.msra.mxu0 0.0
    %694 = vmatprep.subr.mxu0 0.0
    %695 = vmatpush1.xpose.msra.mxu0 0.0
    %696 = vmatprep.subr.mxu0 0.0
    %697 = vmatpush1.xpose.msra.mxu0 0.0
    %698 = vmatprep.subr.mxu0 0.0
    %699 = vmatpush1.xpose.msra.mxu0 0.0
    %700 = vmatprep.subr.mxu0 0.0
    %701 = vmatpush1.xpose.msra.mxu0 0.0
    %702 = vmatprep.subr.mxu0 0.0
    %703 = vmatpush1.xpose.msra.mxu0 0.0
    %704 = vmatprep.subr.mxu0 0.0
    %705 = vmatpush1.xpose.msra.mxu0 0.0
    %706 = vmatprep.subr.mxu0 0.0
    %707 = vmatpush1.xpose.msra.mxu0 0.0
    %708 = vmatprep.subr.mxu0 0.0
    %709 = vmatpush1.xpose.msra.mxu0 0.0
    %710 = vmatprep.subr.mxu0 0.0
    %711 = vmatpush1.xpose.msra.mxu0 0.0
    %712 = vmatprep.subr.mxu0 0.0
    %713 = vmatpush1.xpose.msra.mxu0 0.0
    %714 = vmatprep.subr.mxu0 0.0
    %715 = vmatpush1.xpose.msra.mxu0 0.0
    %716 = vmatprep.mubr.f32.mxu0 0.0
    %717 = vmatmul.mubr.f32.gmra.mrb[0].mxu0 %v647
    %v718 = vpop.f32.mrb[0].mxu0
    %v719 = vadd.f32 0.0, %v718
    %v720 = vpop.f32.mrb[0].mxu0
    %721 = vmatprep.mubr.f32.mxu0 0.0
    %722 = vmatmul.mubr.f32.gmra.mrb[0].mxu0 %v650
    %v723 = vpop.f32.mrb[0].mxu0
    %v724 = vadd.f32 0.0, %v723
    %v725 = vpop.f32.mrb[0].mxu0
    %726 = vdwg.mxu0
    %v727 = vmul.f32 %v719, 0.35355338
    %v728 = vmul.f32 %v724, 0.35355338
    %v729 = vadd.f32 %v727, %v116
    %v730 = vadd.f32 %v728, %v117
    %v731 = vsel %vm310, %v729, -inf
    %732 = vmax.xlane.f32.xlu0 %v731
    %v733 = vpop.xlane.xlu0 %732
    %v734 = vsel %vm310, %v730, -inf
    %735 = vmax.xlane.f32.xlu0 %v734
    %v736 = vpop.xlane.xlu0 %735
    %v737 = vsub.f32 %v729, %v733
    %v738 = vsub.f32 %v730, %v736
    %v739 = vmul.f32 %v737, 1.442695
    %v740 = vpow.pop %v739
    %v741 = vmul.f32 %v738, 1.442695
    %v742 = vpow.pop %v741
    %v743 = vsel %vm310, %v740, 0.0
    %744 = vadd.xlane.f32.xlu0 %v743
    %v745 = vpop.xlane.xlu0 %744
    %v746 = vsel %vm310, %v742, 0.0
    %747 = vadd.xlane.f32.xlu0 %v746
    %v748 = vpop.xlane.xlu0 %747
    %v749 = vrcp.pop %v745
    %v750 = vrcp.pop %v748
    %752 = vrot.lane.b32.xlu0 %v643, 64
    %v753 = vpop.permute.xlu0 %752
    %v755 = vmul.f32 %v201, %v753
    %v756 = vmul.f32 %v206, %v753
    %759 = vrot.lane.b32.xlu0 %v755, 64
    %v760 = vpop.permute.xlu0 %759
    %761 = vrot.lane.b32.xlu0 %v756, 64
    %v762 = vpop.permute.xlu0 %761
    %v766 = vsel %vm310, %v740, 0
    %v769 = vsel %vm310, %v742, 0
    %771 = vmatprep.subr.mxu0 0.0
    %772 = vmatpush1.msra.mxu0 %v760
    %773 = vmatprep.subr.mxu0 0.0
    %774 = vmatpush1.msra.mxu0 %v762
    %775 = vmatprep.subr.mxu0 0.0
    %776 = vmatpush1.msra.mxu0 0.0
    %777 = vmatprep.subr.mxu0 0.0
    %778 = vmatpush1.msra.mxu0 0.0
    %779 = vmatprep.subr.mxu0 0.0
    %780 = vmatpush1.msra.mxu0 0.0
    %781 = vmatprep.subr.mxu0 0.0
    %782 = vmatpush1.msra.mxu0 0.0
    %783 = vmatprep.subr.mxu0 0.0
    %784 = vmatpush1.msra.mxu0 0.0
    %785 = vmatprep.subr.mxu0 0.0
    %786 = vmatpush1.msra.mxu0 0.0
    %787 = vmatprep.subr.mxu0 0.0
    %788 = vmatpush1.msra.mxu0 0.0
    %789 = vmatprep.subr.mxu0 0.0
    %790 = vmatpush1.msra.mxu0 0.0
    %791 = vmatprep.subr.mxu0 0.0
    %792 = vmatpush1.msra.mxu0 0.0
    %793 = vmatprep.subr.mxu0 0.0
    %794 = vmatpush1.msra.mxu0 0.0
    %795 = vmatprep.subr.mxu0 0.0
    %796 = vmatpush1.msra.mxu0 0.0
    %797 = vmatprep.subr.mxu0 0.0
    %798 = vmatpush1.msra.mxu0 0.0
    %799 = vmatprep.subr.mxu0 0.0
    %800 = vmatpush1.msra.mxu0 0.0
    %801 = vmatprep.subr.mxu0 0.0
    %802 = vmatpush1.msra.mxu0 0.0
    %803 = vmatprep.subr.mxu0 0.0
    %804 = vmatpush1.msra.mxu0 0.0
    %805 = vmatprep.subr.mxu0 0.0
    %806 = vmatpush1.msra.mxu0 0.0
    %807 = vmatprep.subr.mxu0 0.0
    %808 = vmatpush1.msra.mxu0 0.0
    %809 = vmatprep.subr.mxu0 0.0
    %810 = vmatpush1.msra.mxu0 0.0
    %811 = vmatprep.subr.mxu0 0.0
    %812 = vmatpush1.msra.mxu0 0.0
    %813 = vmatprep.subr.mxu0 0.0
    %814 = vmatpush1.msra.mxu0 0.0
    %815 = vmatprep.subr.mxu0 0.0
    %816 = vmatpush1.msra.mxu0 0.0
    %817 = vmatprep.subr.mxu0 0.0
    %818 = vmatpush1.msra.mxu0 0.0
    %819 = vmatprep.subr.mxu0 0.0
    %820 = vmatpush1.msra.mxu0 0.0
    %821 = vmatprep.subr.mxu0 0.0
    %822 = vmatpush1.msra.mxu0 0.0
    %823 = vmatprep.subr.mxu0 0.0
    %824 = vmatpush1.msra.mxu0 0.0
    %825 = vmatprep.subr.mxu0 0.0
    %826 = vmatpush1.msra.mxu0 0.0
    %827 = vmatprep.subr.mxu0 0.0
    %828 = vmatpush1.msra.mxu0 0.0
    %829 = vmatprep.subr.mxu0 0.0
    %830 = vmatpush1.msra.mxu0 0.0
    %831 = vmatprep.subr.mxu0 0.0
    %832 = vmatpush1.msra.mxu0 0.0
    %833 = vmatprep.subr.mxu0 0.0
    %834 = vmatpush1.msra.mxu0 0.0
    %835 = vmatprep.mubr.f32.mxu0 0.0
    %836 = vmatmul.mubr.f32.gmra.mrb[0].mxu0 %v766
    %v837 = vpop.f32.mrb[0].mxu0
    %v838 = vadd.f32 0.0, %v837
    %v839 = vpop.f32.mrb[0].mxu0
    %840 = vmatprep.mubr.f32.mxu0 0.0
    %841 = vmatmul.mubr.f32.gmra.mrb[0].mxu0 %v769
    %v842 = vpop.f32.mrb[0].mxu0
    %v843 = vadd.f32 0.0, %v842
    %v844 = vpop.f32.mrb[0].mxu0
    %845 = vdwg.mxu0
    %v846 = vmul.f32 %v838, %v749
    %v847 = vmul.f32 %v843, %v750
    %v848 = vadd.f32 %v638, %v846
    %v849 = vadd.f32 %v639, %v847
    %v850 = vlaneseq
    %v851 = vshrl.u32 %v850, 7
    %v852 = vsub.s32 0, %v851
    %v853 = vrot.slane %v115, %v852
    %v854 = vmul.f32 %v201, %v853
    %v855 = vmul.f32 %v206, %v853
    %v857 = vsel %vm127, %v854, 0
    %v860 = vsel %vm127, %v855, 0
    %862 = vmatprep.subr.mxu0 0.0
    %863 = vmatpush1.xpose.msra.mxu0 %v227
    %864 = vmatprep.subr.mxu0 0.0
    %865 = vmatpush1.xpose.msra.mxu0 %v229
    %866 = vmatprep.subr.mxu0 0.0
    %867 = vmatpush1.xpose.msra.mxu0 0.0
    %868 = vmatprep.subr.mxu0 0.0
    %869 = vmatpush1.xpose.msra.mxu0 0.0
    %870 = vmatprep.subr.mxu0 0.0
    %871 = vmatpush1.xpose.msra.mxu0 0.0
    %872 = vmatprep.subr.mxu0 0.0
    %873 = vmatpush1.xpose.msra.mxu0 0.0
    %874 = vmatprep.subr.mxu0 0.0
    %875 = vmatpush1.xpose.msra.mxu0 0.0
    %876 = vmatprep.subr.mxu0 0.0
    %877 = vmatpush1.xpose.msra.mxu0 0.0
    %878 = vmatprep.subr.mxu0 0.0
    %879 = vmatpush1.xpose.msra.mxu0 0.0
    %880 = vmatprep.subr.mxu0 0.0
    %881 = vmatpush1.xpose.msra.mxu0 0.0
    %882 = vmatprep.subr.mxu0 0.0
    %883 = vmatpush1.xpose.msra.mxu0 0.0
    %884 = vmatprep.subr.mxu0 0.0
    %885 = vmatpush1.xpose.msra.mxu0 0.0
    %886 = vmatprep.subr.mxu0 0.0
    %887 = vmatpush1.xpose.msra.mxu0 0.0
    %888 = vmatprep.subr.mxu0 0.0
    %889 = vmatpush1.xpose.msra.mxu0 0.0
    %890 = vmatprep.subr.mxu0 0.0
    %891 = vmatpush1.xpose.msra.mxu0 0.0
    %892 = vmatprep.subr.mxu0 0.0
    %893 = vmatpush1.xpose.msra.mxu0 0.0
    %894 = vmatprep.subr.mxu0 0.0
    %895 = vmatpush1.xpose.msra.mxu0 0.0
    %896 = vmatprep.subr.mxu0 0.0
    %897 = vmatpush1.xpose.msra.mxu0 0.0
    %898 = vmatprep.subr.mxu0 0.0
    %899 = vmatpush1.xpose.msra.mxu0 0.0
    %900 = vmatprep.subr.mxu0 0.0
    %901 = vmatpush1.xpose.msra.mxu0 0.0
    %902 = vmatprep.subr.mxu0 0.0
    %903 = vmatpush1.xpose.msra.mxu0 0.0
    %904 = vmatprep.subr.mxu0 0.0
    %905 = vmatpush1.xpose.msra.mxu0 0.0
    %906 = vmatprep.subr.mxu0 0.0
    %907 = vmatpush1.xpose.msra.mxu0 0.0
    %908 = vmatprep.subr.mxu0 0.0
    %909 = vmatpush1.xpose.msra.mxu0 0.0
    %910 = vmatprep.subr.mxu0 0.0
    %911 = vmatpush1.xpose.msra.mxu0 0.0
    %912 = vmatprep.subr.mxu0 0.0
    %913 = vmatpush1.xpose.msra.mxu0 0.0
    %914 = vmatprep.subr.mxu0 0.0
    %915 = vmatpush1.xpose.msra.mxu0 0.0
    %916 = vmatprep.subr.mxu0 0.0
    %917 = vmatpush1.xpose.msra.mxu0 0.0
    %918 = vmatprep.subr.mxu0 0.0
    %919 = vmatpush1.xpose.msra.mxu0 0.0
    %920 = vmatprep.subr.mxu0 0.0
    %921 = vmatpush1.xpose.msra.mxu0 0.0
    %922 = vmatprep.subr.mxu0 0.0
    %923 = vmatpush1.xpose.msra.mxu0 0.0
    %924 = vmatprep.subr.mxu0 0.0
    %925 = vmatpush1.xpose.msra.mxu0 0.0
    %926 = vmatprep.mubr.f32.mxu0 0.0
    %927 = vmatmul.mubr.f32.gmra.mrb[0].mxu0 %v857
    %v928 = vpop.f32.mrb[0].mxu0
    %v929 = vadd.f32 0.0, %v928
    %v930 = vpop.f32.mrb[0].mxu0
    %931 = vmatprep.mubr.f32.mxu0 0.0
    %932 = vmatmul.mubr.f32.gmra.mrb[0].mxu0 %v860
    %v933 = vpop.f32.mrb[0].mxu0
    %v934 = vadd.f32 0.0, %v933
    %v935 = vpop.f32.mrb[0].mxu0
    %936 = vdwg.mxu0
    %v937 = vmul.f32 %v929, 0.35355338
    %v938 = vmul.f32 %v934, 0.35355338
    %v939 = vadd.f32 %v937, %v116
    %v940 = vadd.f32 %v938, %v117
    %v941 = vsel %vm310, %v939, -inf
    %942 = vmax.xlane.f32.xlu0 %v941
    %v943 = vpop.xlane.xlu0 %942
    %v944 = vsel %vm310, %v940, -inf
    %945 = vmax.xlane.f32.xlu0 %v944
    %v946 = vpop.xlane.xlu0 %945
    %v947 = vsub.f32 %v939, %v943
    %v948 = vsub.f32 %v940, %v946
    %v949 = vmul.f32 %v947, 1.442695
    %v950 = vpow.pop %v949
    %v951 = vmul.f32 %v948, 1.442695
    %v952 = vpow.pop %v951
    %v953 = vsel %vm310, %v950, 0.0
    %954 = vadd.xlane.f32.xlu0 %v953
    %v955 = vpop.xlane.xlu0 %954
    %v956 = vsel %vm310, %v952, 0.0
    %957 = vadd.xlane.f32.xlu0 %v956
    %v958 = vpop.xlane.xlu0 %957
    %v959 = vrcp.pop %v955
    %v960 = vrcp.pop %v958
    %962 = vrot.lane.b32.xlu0 %v853, 64
    %v963 = vpop.permute.xlu0 %962
    %v965 = vmul.f32 %v201, %v963
    %v966 = vmul.f32 %v206, %v963
    %969 = vrot.lane.b32.xlu0 %v965, 64
    %v970 = vpop.permute.xlu0 %969
    %971 = vrot.lane.b32.xlu0 %v966, 64
    %v972 = vpop.permute.xlu0 %971
    %v976 = vsel %vm310, %v950, 0
    %v979 = vsel %vm310, %v952, 0
    %981 = vmatprep.subr.mxu0 0.0
    %982 = vmatpush1.msra.mxu0 %v970
    %983 = vmatprep.subr.mxu0 0.0
    %984 = vmatpush1.msra.mxu0 %v972
    %985 = vmatprep.subr.mxu0 0.0
    %986 = vmatpush1.msra.mxu0 0.0
    %987 = vmatprep.subr.mxu0 0.0
    %988 = vmatpush1.msra.mxu0 0.0
    %989 = vmatprep.subr.mxu0 0.0
    %990 = vmatpush1.msra.mxu0 0.0
    %991 = vmatprep.subr.mxu0 0.0
    %992 = vmatpush1.msra.mxu0 0.0
    %993 = vmatprep.subr.mxu0 0.0
    %994 = vmatpush1.msra.mxu0 0.0
    %995 = vmatprep.subr.mxu0 0.0
    %996 = vmatpush1.msra.mxu0 0.0
    %997 = vmatprep.subr.mxu0 0.0
    %998 = vmatpush1.msra.mxu0 0.0
    %999 = vmatprep.subr.mxu0 0.0
    %1000 = vmatpush1.msra.mxu0 0.0
    %1001 = vmatprep.subr.mxu0 0.0
    %1002 = vmatpush1.msra.mxu0 0.0
    %1003 = vmatprep.subr.mxu0 0.0
    %1004 = vmatpush1.msra.mxu0 0.0
    %1005 = vmatprep.subr.mxu0 0.0
    %1006 = vmatpush1.msra.mxu0 0.0
    %1007 = vmatprep.subr.mxu0 0.0
    %1008 = vmatpush1.msra.mxu0 0.0
    %1009 = vmatprep.subr.mxu0 0.0
    %1010 = vmatpush1.msra.mxu0 0.0
    %1011 = vmatprep.subr.mxu0 0.0
    %1012 = vmatpush1.msra.mxu0 0.0
    %1013 = vmatprep.subr.mxu0 0.0
    %1014 = vmatpush1.msra.mxu0 0.0
    %1015 = vmatprep.subr.mxu0 0.0
    %1016 = vmatpush1.msra.mxu0 0.0
    %1017 = vmatprep.subr.mxu0 0.0
    %1018 = vmatpush1.msra.mxu0 0.0
    %1019 = vmatprep.subr.mxu0 0.0
    %1020 = vmatpush1.msra.mxu0 0.0
    %1021 = vmatprep.subr.mxu0 0.0
    %1022 = vmatpush1.msra.mxu0 0.0
    %1023 = vmatprep.subr.mxu0 0.0
    %1024 = vmatpush1.msra.mxu0 0.0
    %1025 = vmatprep.subr.mxu0 0.0
    %1026 = vmatpush1.msra.mxu0 0.0
    %1027 = vmatprep.subr.mxu0 0.0
    %1028 = vmatpush1.msra.mxu0 0.0
    %1029 = vmatprep.subr.mxu0 0.0
    %1030 = vmatpush1.msra.mxu0 0.0
    %1031 = vmatprep.subr.mxu0 0.0
    %1032 = vmatpush1.msra.mxu0 0.0
    %1033 = vmatprep.subr.mxu0 0.0
    %1034 = vmatpush1.msra.mxu0 0.0
    %1035 = vmatprep.subr.mxu0 0.0
    %1036 = vmatpush1.msra.mxu0 0.0
    %1037 = vmatprep.subr.mxu0 0.0
    %1038 = vmatpush1.msra.mxu0 0.0
    %1039 = vmatprep.subr.mxu0 0.0
    %1040 = vmatpush1.msra.mxu0 0.0
    %1041 = vmatprep.subr.mxu0 0.0
    %1042 = vmatpush1.msra.mxu0 0.0
    %1043 = vmatprep.subr.mxu0 0.0
    %1044 = vmatpush1.msra.mxu0 0.0
    %1045 = vmatprep.mubr.f32.mxu0 0.0
    %1046 = vmatmul.mubr.f32.gmra.mrb[0].mxu0 %v976
    %v1047 = vpop.f32.mrb[0].mxu0
    %v1048 = vadd.f32 0.0, %v1047
    %v1049 = vpop.f32.mrb[0].mxu0
    %1050 = vmatprep.mubr.f32.mxu0 0.0
    %1051 = vmatmul.mubr.f32.gmra.mrb[0].mxu0 %v979
    %v1052 = vpop.f32.mrb[0].mxu0
    %v1053 = vadd.f32 0.0, %v1052
    %v1054 = vpop.f32.mrb[0].mxu0
    %1055 = vdwg.mxu0
    %v1056 = vmul.f32 %v1048, %v959
    %v1057 = vmul.f32 %v1053, %v960
    %v1058 = vadd.f32 %v848, %v1056
    %v1059 = vadd.f32 %v849, %v1057
    %v1060 = vld [vmem:[%s1 + $0x38] sm:$0xff]
    %v1061 = vld [vmem:[%s1 + $0x40] sm:$0xff]
    %v1062 = vld [vmem:[%s1 + $0x48] sm:$0xff]
    %v1063 = vld [vmem:[%s1 + $0x50] sm:$0xff]
    %v1064 = vld [vmem:[%s1 + $0x58] sm:$0x1]
    %v1065 = vlaneseq
    %v1066 = vshrl.u32 %v1065, 7
    %v1067 = vsub.s32 0, %v1066
    %v1068 = vrot.slane %v1064, %v1067
    %v1070 = vsel %vm127, %v1058, 0
    %v1073 = vsel %vm127, %v1059, 0
    %1075 = vmatprep.subr.mxu0 0.0
    %1076 = vmatpush1.msra.mxu0 %v1060
    %1077 = vmatprep.subr.mxu0 0.0
    %1078 = vmatpush1.msra.mxu0 %v1061
    %1079 = vmatprep.subr.mxu0 0.0
    %1080 = vmatpush1.msra.mxu0 %v1062
    %1081 = vmatprep.subr.mxu0 0.0
    %1082 = vmatpush1.msra.mxu0 %v1063
    %1083 = vmatprep.subr.mxu0 0.0
    %1084 = vmatpush1.msra.mxu0 0.0
    %1085 = vmatprep.subr.mxu0 0.0
    %1086 = vmatpush1.msra.mxu0 0.0
    %1087 = vmatprep.subr.mxu0 0.0
    %1088 = vmatpush1.msra.mxu0 0.0
    %1089 = vmatprep.subr.mxu0 0.0
    %1090 = vmatpush1.msra.mxu0 0.0
    %1091 = vmatprep.subr.mxu0 0.0
    %1092 = vmatpush1.msra.mxu0 0.0
    %1093 = vmatprep.subr.mxu0 0.0
    %1094 = vmatpush1.msra.mxu0 0.0
    %1095 = vmatprep.subr.mxu0 0.0
    %1096 = vmatpush1.msra.mxu0 0.0
    %1097 = vmatprep.subr.mxu0 0.0
    %1098 = vmatpush1.msra.mxu0 0.0
    %1099 = vmatprep.subr.mxu0 0.0
    %1100 = vmatpush1.msra.mxu0 0.0
    %1101 = vmatprep.subr.mxu0 0.0
    %1102 = vmatpush1.msra.mxu0 0.0
    %1103 = vmatprep.subr.mxu0 0.0
    %1104 = vmatpush1.msra.mxu0 0.0
    %1105 = vmatprep.subr.mxu0 0.0
    %1106 = vmatpush1.msra.mxu0 0.0
    %1107 = vmatprep.subr.mxu0 0.0
    %1108 = vmatpush1.msra.mxu0 0.0
    %1109 = vmatprep.subr.mxu0 0.0
    %1110 = vmatpush1.msra.mxu0 0.0
    %1111 = vmatprep.subr.mxu0 0.0
    %1112 = vmatpush1.msra.mxu0 0.0
    %1113 = vmatprep.subr.mxu0 0.0
    %1114 = vmatpush1.msra.mxu0 0.0
    %1115 = vmatprep.subr.mxu0 0.0
    %1116 = vmatpush1.msra.mxu0 0.0
    %1117 = vmatprep.subr.mxu0 0.0
    %1118 = vmatpush1.msra.mxu0 0.0
    %1119 = vmatprep.subr.mxu0 0.0
    %1120 = vmatpush1.msra.mxu0 0.0
    %1121 = vmatprep.subr.mxu0 0.0
    %1122 = vmatpush1.msra.mxu0 0.0
    %1123 = vmatprep.subr.mxu0 0.0
    %1124 = vmatpush1.msra.mxu0 0.0
    %1125 = vmatprep.subr.mxu0 0.0
    %1126 = vmatpush1.msra.mxu0 0.0
    %1127 = vmatprep.subr.mxu0 0.0
    %1128 = vmatpush1.msra.mxu0 0.0
    %1129 = vmatprep.subr.mxu0 0.0
    %1130 = vmatpush1.msra.mxu0 0.0
    %1131 = vmatprep.subr.mxu0 0.0
    %1132 = vmatpush1.msra.mxu0 0.0
    %1133 = vmatprep.subr.mxu0 0.0
    %1134 = vmatpush1.msra.mxu0 0.0
    %1135 = vmatprep.subr.mxu0 0.0
    %1136 = vmatpush1.msra.mxu0 0.0
    %1137 = vmatprep.subr.mxu0 0.0
    %1138 = vmatpush1.msra.mxu0 0.0
    %1139 = vmatprep.mubr.f32.mxu0 0.0
    %1140 = vmatmul.mubr.f32.gmra.mrb[0].mxu0 %v1070
    %v1141 = vpop.f32.mrb[0].mxu0
    %v1142 = vadd.f32 %v1068, %v1141
    %v1143 = vpop.f32.mrb[0].mxu0
    %1144 = vmatprep.mubr.f32.mxu0 0.0
    %1145 = vmatmul.mubr.f32.gmra.mrb[0].mxu0 %v1073
    %v1146 = vpop.f32.mrb[0].mxu0
    %v1147 = vadd.f32 %v1068, %v1146
    %v1148 = vpop.f32.mrb[0].mxu0
    %1149 = vdwg.mxu0
    %v1150 = vadd.f32 %v104, %v1142
    %v1151 = vadd.f32 %v109, %v1147
    %v1152 = vld [vmem:[%s1 + $0x60] sm:$0x1]
    %v1153 = vld [vmem:[%s1 + $0x68] sm:$0x1]
    %v1154 = vsel %vm127, %v1150, 0.0
    %1155 = vadd.xlane.f32.xlu0 %v1154
    %v1156 = vpop.xlane.xlu0 %1155
    %v1157 = vsel %vm127, %v1151, 0.0
    %1158 = vadd.xlane.f32.xlu0 %v1157
    %v1159 = vpop.xlane.xlu0 %1158
    %v1160 = vrcp.pop 32.0
    %v1161 = vmul.f32 %v1156, %v1160
    %v1162 = vmul.f32 %v1159, %v1160
    %v1163 = vsub.f32 %v1150, %v1161
    %v1164 = vsub.f32 %v1151, %v1162
    %v1165 = vmul.f32 %v1163, %v1163
    %v1166 = vmul.f32 %v1164, %v1164
    %v1167 = vsel %vm127, %v1165, 0.0
    %1168 = vadd.xlane.f32.xlu0 %v1167
    %v1169 = vpop.xlane.xlu0 %1168
    %v1170 = vsel %vm127, %v1166, 0.0
    %1171 = vadd.xlane.f32.xlu0 %v1170
    %v1172 = vpop.xlane.xlu0 %1171
    %v1173 = vmul.f32 %v1169, %v1160
    %v1174 = vmul.f32 %v1172, %v1160
    %v1175 = vadd.f32 %v1173, 1e-05
    %v1176 = vadd.f32 %v1174, 1e-05
    %v1177 = vrsqrt.pop %v1175
    %v1178 = vrsqrt.pop %v1176
    %v1179 = vmul.f32 %v1163, %v1177
    %v1180 = vmul.f32 %v1164, %v1178
    %v1181 = vlaneseq
    %v1182 = vshrl.u32 %v1181, 7
    %v1183 = vsub.s32 0, %v1182
    %v1184 = vrot.slane %v1152, %v1183
    %v1185 = vmul.f32 %v1179, %v1184
    %v1186 = vmul.f32 %v1180, %v1184
    %v1187 = vlaneseq
    %v1188 = vshrl.u32 %v1187, 7
    %v1189 = vsub.s32 0, %v1188
    %v1190 = vrot.slane %v1153, %v1189
    %v1191 = vadd.f32 %v1185, %v1190
    %v1192 = vadd.f32 %v1186, %v1190
    %v1193 = vld [vmem:[%s3 + $0x10] sm:$0xff]
    %v1194 = vld [vmem:[%s3 + $0x18] sm:$0xff]
    %v1195 = vld [vmem:[%s3 + $0x20] sm:$0xff]
    %v1196 = vld [vmem:[%s3 + $0x28] sm:$0xff]
    %v1197 = vld [vmem:[%s3 + $0x30] sm:$0x1]
    %v1198 = vlaneseq
    %v1199 = vshrl.u32 %v1198, 7
    %v1200 = vsub.s32 0, %v1199
    %v1201 = vrot.slane %v1197, %v1200
    %v1203 = vsel %vm127, %v1191, 0
    %v1206 = vsel %vm127, %v1192, 0
    %1208 = vmatprep.subr.mxu0 0.0
    %1209 = vmatpush1.msra.mxu0 %v1193
    %1210 = vmatprep.subr.mxu0 0.0
    %1211 = vmatpush1.msra.mxu0 %v1194
    %1212 = vmatprep.subr.mxu0 0.0
    %1213 = vmatpush1.msra.mxu0 %v1195
    %1214 = vmatprep.subr.mxu0 0.0
    %1215 = vmatpush1.msra.mxu0 %v1196
    %1216 = vmatprep.subr.mxu0 0.0
    %1217 = vmatpush1.msra.mxu0 0.0
    %1218 = vmatprep.subr.mxu0 0.0
    %1219 = vmatpush1.msra.mxu0 0.0
    %1220 = vmatprep.subr.mxu0 0.0
    %1221 = vmatpush1.msra.mxu0 0.0
    %1222 = vmatprep.subr.mxu0 0.0
    %1223 = vmatpush1.msra.mxu0 0.0
    %1224 = vmatprep.subr.mxu0 0.0
    %1225 = vmatpush1.msra.mxu0 0.0
    %1226 = vmatprep.subr.mxu0 0.0
    %1227 = vmatpush1.msra.mxu0 0.0
    %1228 = vmatprep.subr.mxu0 0.0
    %1229 = vmatpush1.msra.mxu0 0.0
    %1230 = vmatprep.subr.mxu0 0.0
    %1231 = vmatpush1.msra.mxu0 0.0
    %1232 = vmatprep.subr.mxu0 0.0
    %1233 = vmatpush1.msra.mxu0 0.0
    %1234 = vmatprep.subr.mxu0 0.0
    %1235 = vmatpush1.msra.mxu0 0.0
    %1236 = vmatprep.subr.mxu0 0.0
    %1237 = vmatpush1.msra.mxu0 0.0
    %1238 = vmatprep.subr.mxu0 0.0
    %1239 = vmatpush1.msra.mxu0 0.0
    %1240 = vmatprep.subr.mxu0 0.0
    %1241 = vmatpush1.msra.mxu0 0.0
    %1242 = vmatprep.subr.mxu0 0.0
    %1243 = vmatpush1.msra.mxu0 0.0
    %1244 = vmatprep.subr.mxu0 0.0
    %1245 = vmatpush1.msra.mxu0 0.0
    %1246 = vmatprep.subr.mxu0 0.0
    %1247 = vmatpush1.msra.mxu0 0.0
    %1248 = vmatprep.subr.mxu0 0.0
    %1249 = vmatpush1.msra.mxu0 0.0
    %1250 = vmatprep.subr.mxu0 0.0
    %1251 = vmatpush1.msra.mxu0 0.0
    %1252 = vmatprep.subr.mxu0 0.0
    %1253 = vmatpush1.msra.mxu0 0.0
    %1254 = vmatprep.subr.mxu0 0.0
    %1255 = vmatpush1.msra.mxu0 0.0
    %1256 = vmatprep.subr.mxu0 0.0
    %1257 = vmatpush1.msra.mxu0 0.0
    %1258 = vmatprep.subr.mxu0 0.0
    %1259 = vmatpush1.msra.mxu0 0.0
    %1260 = vmatprep.subr.mxu0 0.0
    %1261 = vmatpush1.msra.mxu0 0.0
    %1262 = vmatprep.subr.mxu0 0.0
    %1263 = vmatpush1.msra.mxu0 0.0
    %1264 = vmatprep.subr.mxu0 0.0
    %1265 = vmatpush1.msra.mxu0 0.0
    %1266 = vmatprep.subr.mxu0 0.0
    %1267 = vmatpush1.msra.mxu0 0.0
    %1268 = vmatprep.subr.mxu0 0.0
    %1269 = vmatpush1.msra.mxu0 0.0
    %1270 = vmatprep.subr.mxu0 0.0
    %1271 = vmatpush1.msra.mxu0 0.0
    %1272 = vmatprep.mubr.f32.mxu0 0.0
    %1273 = vmatmul.mubr.f32.gmra.mrb[0].mxu0 %v1203
    %v1274 = vpop.f32.mrb[0].mxu0
    %v1275 = vadd.f32 %v1201, %v1274
    %v1276 = vpop.f32.mrb[0].mxu0
    %1277 = vmatprep.mubr.f32.mxu0 0.0
    %1278 = vmatmul.mubr.f32.gmra.mrb[0].mxu0 %v1206
    %v1279 = vpop.f32.mrb[0].mxu0
    %v1280 = vadd.f32 %v1201, %v1279
    %v1281 = vpop.f32.mrb[0].mxu0
    %1282 = vdwg.mxu0
    %v1283 = vmul.f32 %v1275, 0.5
    %v1284 = vmul.f32 %v1280, 0.5
    %v1285 = vmul.f32 %v1275, 0.70710677
    %v1286 = vmul.f32 %v1280, 0.70710677
    %v1287 = verf.f32.pop %v1285
    %v1288 = verf.f32.pop %v1286
    %v1289 = vadd.f32 %v1287, 1.0
    %v1290 = vadd.f32 %v1288, 1.0
    %v1291 = vmul.f32 %v1283, %v1289
    %v1292 = vmul.f32 %v1284, %v1290
    %v1293 = vld [vmem:[%s1 + $0x70] sm:$0xff]
    %v1294 = vld [vmem:[%s1 + $0x78] sm:$0xff]
    %v1295 = vld [vmem:[%s1 + $0x80] sm:$0xff]
    %v1296 = vld [vmem:[%s1 + $0x88] sm:$0xff]
    %v1297 = vld [vmem:[%s1 + $0x90] sm:$0xff]
    %v1298 = vld [vmem:[%s1 + $0x98] sm:$0xff]
    %v1299 = vld [vmem:[%s1 + $0xa0] sm:$0xff]
    %v1300 = vld [vmem:[%s1 + $0xa8] sm:$0xff]
    %v1301 = vld [vmem:[%s1 + $0xb0] sm:$0xff]
    %v1302 = vld [vmem:[%s1 + $0xb8] sm:$0xff]
    %v1303 = vld [vmem:[%s1 + $0xc0] sm:$0xff]
    %v1304 = vld [vmem:[%s1 + $0xc8] sm:$0xff]
    %v1305 = vld [vmem:[%s1 + $0xd0] sm:$0xff]
    %v1306 = vld [vmem:[%s1 + $0xd8] sm:$0xff]
    %v1307 = vld [vmem:[%s1 + $0xe0] sm:$0xff]
    %v1308 = vld [vmem:[%s1 + $0xe8] sm:$0xff]
    %v1309 = vld [vmem:[%s1 + $0xf0] sm:$0x1]
    %v1310 = vlaneseq
    %v1311 = vshrl.u32 %v1310, 7
    %v1312 = vsub.s32 0, %v1311
    %v1313 = vrot.slane %v1309, %v1312
    %1314 = vmatprep.subr.mxu0 0.0
    %1315 = vmatpush1.msra.mxu0 %v1293
    %1316 = vmatprep.subr.mxu0 0.0
    %1317 = vmatpush1.msra.mxu0 %v1294
    %1318 = vmatprep.subr.mxu0 0.0
    %1319 = vmatpush1.msra.mxu0 %v1295
    %1320 = vmatprep.subr.mxu0 0.0
    %1321 = vmatpush1.msra.mxu0 %v1296
    %1322 = vmatprep.subr.mxu0 0.0
    %1323 = vmatpush1.msra.mxu0 %v1297
    %1324 = vmatprep.subr.mxu0 0.0
    %1325 = vmatpush1.msra.mxu0 %v1298
    %1326 = vmatprep.subr.mxu0 0.0
    %1327 = vmatpush1.msra.mxu0 %v1299
    %1328 = vmatprep.subr.mxu0 0.0
    %1329 = vmatpush1.msra.mxu0 %v1300
    %1330 = vmatprep.subr.mxu0 0.0
    %1331 = vmatpush1.msra.mxu0 %v1301
    %1332 = vmatprep.subr.mxu0 0.0
    %1333 = vmatpush1.msra.mxu0 %v1302
    %1334 = vmatprep.subr.mxu0 0.0
    %1335 = vmatpush1.msra.mxu0 %v1303
    %1336 = vmatprep.subr.mxu0 0.0
    %1337 = vmatpush1.msra.mxu0 %v1304
    %1338 = vmatprep.subr.mxu0 0.0
    %1339 = vmatpush1.msra.mxu0 %v1305
    %1340 = vmatprep.subr.mxu0 0.0
    %1341 = vmatpush1.msra.mxu0 %v1306
    %1342 = vmatprep.subr.mxu0 0.0
    %1343 = vmatpush1.msra.mxu0 %v1307
    %1344 = vmatprep.subr.mxu0 0.0
    %1345 = vmatpush1.msra.mxu0 %v1308
    %1346 = vmatprep.subr.mxu0 0.0
    %1347 = vmatpush1.msra.mxu0 0.0
    %1348 = vmatprep.subr.mxu0 0.0
    %1349 = vmatpush1.msra.mxu0 0.0
    %1350 = vmatprep.subr.mxu0 0.0
    %1351 = vmatpush1.msra.mxu0 0.0
    %1352 = vmatprep.subr.mxu0 0.0
    %1353 = vmatpush1.msra.mxu0 0.0
    %1354 = vmatprep.subr.mxu0 0.0
    %1355 = vmatpush1.msra.mxu0 0.0
    %1356 = vmatprep.subr.mxu0 0.0
    %1357 = vmatpush1.msra.mxu0 0.0
    %1358 = vmatprep.subr.mxu0 0.0
    %1359 = vmatpush1.msra.mxu0 0.0
    %1360 = vmatprep.subr.mxu0 0.0
    %1361 = vmatpush1.msra.mxu0 0.0
    %1362 = vmatprep.subr.mxu0 0.0
    %1363 = vmatpush1.msra.mxu0 0.0
    %1364 = vmatprep.subr.mxu0 0.0
    %1365 = vmatpush1.msra.mxu0 0.0
    %1366 = vmatprep.subr.mxu0 0.0
    %1367 = vmatpush1.msra.mxu0 0.0
    %1368 = vmatprep.subr.mxu0 0.0
    %1369 = vmatpush1.msra.mxu0 0.0
    %1370 = vmatprep.subr.mxu0 0.0
    %1371 = vmatpush1.msra.mxu0 0.0
    %1372 = vmatprep.subr.mxu0 0.0
    %1373 = vmatpush1.msra.mxu0 0.0
    %1374 = vmatprep.subr.mxu0 0.0
    %1375 = vmatpush1.msra.mxu0 0.0
    %1376 = vmatprep.subr.mxu0 0.0
    %1377 = vmatpush1.msra.mxu0 0.0
    %1378 = vmatprep.mubr.f32.mxu0 0.0
    %1379 = vmatmul.mubr.f32.gmra.mrb[0].mxu0 %v1291
    %v1380 = vpop.f32.mrb[0].mxu0
    %v1381 = vadd.f32 %v1313, %v1380
    %v1382 = vpop.f32.mrb[0].mxu0
    %1383 = vmatprep.mubr.f32.mxu0 0.0
    %1384 = vmatmul.mubr.f32.gmra.mrb[0].mxu0 %v1292
    %v1385 = vpop.f32.mrb[0].mxu0
    %v1386 = vadd.f32 %v1313, %v1385
    %v1387 = vpop.f32.mrb[0].mxu0
    %1388 = vdwg.mxu0
    %v1389 = vadd.f32 %v1191, %v1381
    %v1390 = vadd.f32 %v1192, %v1386
    %v1391 = vld [vmem:[%s1 + $0xf8] sm:$0x1]
    %v1392 = vld [vmem:[%s1 + $0x100] sm:$0x1]
    %v1393 = vsel %vm127, %v1389, 0.0
    %1394 = vadd.xlane.f32.xlu0 %v1393
    %v1395 = vpop.xlane.xlu0 %1394
    %v1396 = vsel %vm127, %v1390, 0.0
    %1397 = vadd.xlane.f32.xlu0 %v1396
    %v1398 = vpop.xlane.xlu0 %1397
    %v1399 = vmul.f32 %v1395, %v1160
    %v1400 = vmul.f32 %v1398, %v1160
    %v1401 = vsub.f32 %v1389, %v1399
    %v1402 = vsub.f32 %v1390, %v1400
    %v1403 = vmul.f32 %v1401, %v1401
    %v1404 = vmul.f32 %v1402, %v1402
    %v1405 = vsel %vm127, %v1403, 0.0
    %1406 = vadd.xlane.f32.xlu0 %v1405
    %v1407 = vpop.xlane.xlu0 %1406
    %v1408 = vsel %vm127, %v1404, 0.0
    %1409 = vadd.xlane.f32.xlu0 %v1408
    %v1410 = vpop.xlane.xlu0 %1409
    %v1411 = vmul.f32 %v1407, %v1160
    %v1412 = vmul.f32 %v1410, %v1160
    %v1413 = vadd.f32 %v1411, 1e-05
    %v1414 = vadd.f32 %v1412, 1e-05
    %v1415 = vrsqrt.pop %v1413
    %v1416 = vrsqrt.pop %v1414
    %v1417 = vmul.f32 %v1401, %v1415
    %v1418 = vmul.f32 %v1402, %v1416
    %v1419 = vlaneseq
    %v1420 = vshrl.u32 %v1419, 7
    %v1421 = vsub.s32 0, %v1420
    %v1422 = vrot.slane %v1391, %v1421
    %v1423 = vmul.f32 %v1417, %v1422
    %v1424 = vmul.f32 %v1418, %v1422
    %v1425 = vlaneseq
    %v1426 = vshrl.u32 %v1425, 7
    %v1427 = vsub.s32 0, %v1426
    %v1428 = vrot.slane %v1392, %v1427
    %v1429 = vadd.f32 %v1423, %v1428
    %v1430 = vadd.f32 %v1424, %v1428
    %v1431 = vld [vmem:[%s3 + $0x38] sm:$0xff]
    %v1432 = vld [vmem:[%s3 + $0x40] sm:$0xff]
    %v1433 = vld [vmem:[%s3 + $0x48] sm:$0xff]
    %v1434 = vld [vmem:[%s3 + $0x50] sm:$0xff]
    %v1436 = vsel %vm310, %v1431, 0
    %v1439 = vsel %vm310, %v1432, 0
    %1441 = vmatprep.subr.mxu0 0.0
    %1442 = vmatpush1.msra.mxu0 %v1429
    %1443 = vmatprep.subr.mxu0 0.0
    %1444 = vmatpush1.msra.mxu0 %v1430
    %1445 = vmatprep.subr.mxu0 0.0
    %1446 = vmatpush1.msra.mxu0 0.0
    %1447 = vmatprep.subr.mxu0 0.0
    %1448 = vmatpush1.msra.mxu0 0.0
    %1449 = vmatprep.subr.mxu0 0.0
    %1450 = vmatpush1.msra.mxu0 0.0
    %1451 = vmatprep.subr.mxu0 0.0
    %1452 = vmatpush1.msra.mxu0 0.0
    %1453 = vmatprep.subr.mxu0 0.0
    %1454 = vmatpush1.msra.mxu0 0.0
    %1455 = vmatprep.subr.mxu0 0.0
    %1456 = vmatpush1.msra.mxu0 0.0
    %1457 = vmatprep.subr.mxu0 0.0
    %1458 = vmatpush1.msra.mxu0 0.0
    %1459 = vmatprep.subr.mxu0 0.0
    %1460 = vmatpush1.msra.mxu0 0.0
    %1461 = vmatprep.subr.mxu0 0.0
    %1462 = vmatpush1.msra.mxu0 0.0
    %1463 = vmatprep.subr.mxu0 0.0
    %1464 = vmatpush1.msra.mxu0 0.0
    %1465 = vmatprep.subr.mxu0 0.0
    %1466 = vmatpush1.msra.mxu0 0.0
    %1467 = vmatprep.subr.mxu0 0.0
    %1468 = vmatpush1.msra.mxu0 0.0
    %1469 = vmatprep.subr.mxu0 0.0
    %1470 = vmatpush1.msra.mxu0 0.0
    %1471 = vmatprep.subr.mxu0 0.0
    %1472 = vmatpush1.msra.mxu0 0.0
    %1473 = vmatprep.subr.mxu0 0.0
    %1474 = vmatpush1.msra.mxu0 0.0
    %1475 = vmatprep.subr.mxu0 0.0
    %1476 = vmatpush1.msra.mxu0 0.0
    %1477 = vmatprep.subr.mxu0 0.0
    %1478 = vmatpush1.msra.mxu0 0.0
    %1479 = vmatprep.subr.mxu0 0.0
    %1480 = vmatpush1.msra.mxu0 0.0
    %1481 = vmatprep.subr.mxu0 0.0
    %1482 = vmatpush1.msra.mxu0 0.0
    %1483 = vmatprep.subr.mxu0 0.0
    %1484 = vmatpush1.msra.mxu0 0.0
    %1485 = vmatprep.subr.mxu0 0.0
    %1486 = vmatpush1.msra.mxu0 0.0
    %1487 = vmatprep.subr.mxu0 0.0
    %1488 = vmatpush1.msra.mxu0 0.0
    %1489 = vmatprep.subr.mxu0 0.0
    %1490 = vmatpush1.msra.mxu0 0.0
    %1491 = vmatprep.subr.mxu0 0.0
    %1492 = vmatpush1.msra.mxu0 0.0
    %1493 = vmatprep.subr.mxu0 0.0
    %1494 = vmatpush1.msra.mxu0 0.0
    %1495 = vmatprep.subr.mxu0 0.0
    %1496 = vmatpush1.msra.mxu0 0.0
    %1497 = vmatprep.subr.mxu0 0.0
    %1498 = vmatpush1.msra.mxu0 0.0
    %1499 = vmatprep.subr.mxu0 0.0
    %1500 = vmatpush1.msra.mxu0 0.0
    %1501 = vmatprep.subr.mxu0 0.0
    %1502 = vmatpush1.msra.mxu0 0.0
    %1503 = vmatprep.subr.mxu0 0.0
    %1504 = vmatpush1.msra.mxu0 0.0
    %1505 = vmatprep.mubr.f32.mxu0 0.0
    %1506 = vmatmul.mubr.f32.gmra.mrb[0].mxu0 %v1436
    %v1507 = vpop.f32.mrb[0].mxu0
    %v1508 = vadd.f32 0.0, %v1507
    %v1509 = vpop.f32.mrb[0].mxu0
    %1510 = vmatprep.mubr.f32.mxu0 0.0
    %1511 = vmatmul.mubr.f32.gmra.mrb[0].mxu0 %v1439
    %v1512 = vpop.f32.mrb[0].mxu0
    %v1513 = vadd.f32 0.0, %v1512
    %v1514 = vpop.f32.mrb[0].mxu0
    %1515 = vdwg.mxu0
    %v1517 = vsel %vm310, %v1433, 0
    %v1520 = vsel %vm310, %v1434, 0
    %1522 = vmatprep.subr.mxu0 0.0
    %1523 = vmatpush1.msra.mxu0 %v1429
    %1524 = vmatprep.subr.mxu0 0.0
    %1525 = vmatpush1.msra.mxu0 %v1430
    %1526 = vmatprep.subr.mxu0 0.0
    %1527 = vmatpush1.msra.mxu0 0.0
    %1528 = vmatprep.subr.mxu0 0.0
    %1529 = vmatpush1.msra.mxu0 0.0
    %1530 = vmatprep.subr.mxu0 0.0
    %1531 = vmatpush1.msra.mxu0 0.0
    %1532 = vmatprep.subr.mxu0 0.0
    %1533 = vmatpush1.msra.mxu0 0.0
    %1534 = vmatprep.subr.mxu0 0.0
    %1535 = vmatpush1.msra.mxu0 0.0
    %1536 = vmatprep.subr.mxu0 0.0
    %1537 = vmatpush1.msra.mxu0 0.0
    %1538 = vmatprep.subr.mxu0 0.0
    %1539 = vmatpush1.msra.mxu0 0.0
    %1540 = vmatprep.subr.mxu0 0.0
    %1541 = vmatpush1.msra.mxu0 0.0
    %1542 = vmatprep.subr.mxu0 0.0
    %1543 = vmatpush1.msra.mxu0 0.0
    %1544 = vmatprep.subr.mxu0 0.0
    %1545 = vmatpush1.msra.mxu0 0.0
    %1546 = vmatprep.subr.mxu0 0.0
    %1547 = vmatpush1.msra.mxu0 0.0
    %1548 = vmatprep.subr.mxu0 0.0
    %1549 = vmatpush1.msra.mxu0 0.0
    %1550 = vmatprep.subr.mxu0 0.0
    %1551 = vmatpush1.msra.mxu0 0.0
    %1552 = vmatprep.subr.mxu0 0.0
    %1553 = vmatpush1.msra.mxu0 0.0
    %1554 = vmatprep.subr.mxu0 0.0
    %1555 = vmatpush1.msra.mxu0 0.0
    %1556 = vmatprep.subr.mxu0 0.0
    %1557 = vmatpush1.msra.mxu0 0.0
    %1558 = vmatprep.subr.mxu0 0.0
    %1559 = vmatpush1.msra.mxu0 0.0
    %1560 = vmatprep.subr.mxu0 0.0
    %1561 = vmatpush1.msra.mxu0 0.0
    %1562 = vmatprep.subr.mxu0 0.0
    %1563 = vmatpush1.msra.mxu0 0.0
    %1564 = vmatprep.subr.mxu0 0.0
    %1565 = vmatpush1.msra.mxu0 0.0
    %1566 = vmatprep.subr.mxu0 0.0
    %1567 = vmatpush1.msra.mxu0 0.0
    %1568 = vmatprep.subr.mxu0 0.0
    %1569 = vmatpush1.msra.mxu0 0.0
    %1570 = vmatprep.subr.mxu0 0.0
    %1571 = vmatpush1.msra.mxu0 0.0
    %1572 = vmatprep.subr.mxu0 0.0
    %1573 = vmatpush1.msra.mxu0 0.0
    %1574 = vmatprep.subr.mxu0 0.0
    %1575 = vmatpush1.msra.mxu0 0.0
    %1576 = vmatprep.subr.mxu0 0.0
    %1577 = vmatpush1.msra.mxu0 0.0
    %1578 = vmatprep.subr.mxu0 0.0
    %1579 = vmatpush1.msra.mxu0 0.0
    %1580 = vmatprep.subr.mxu0 0.0
    %1581 = vmatpush1.msra.mxu0 0.0
    %1582 = vmatprep.subr.mxu0 0.0
    %1583 = vmatpush1.msra.mxu0 0.0
    %1584 = vmatprep.subr.mxu0 0.0
    %1585 = vmatpush1.msra.mxu0 0.0
    %1586 = vmatprep.mubr.f32.mxu0 0.0
    %1587 = vmatmul.mubr.f32.gmra.mrb[0].mxu0 %v1517
    %v1588 = vpop.f32.mrb[0].mxu0
    %v1589 = vadd.f32 0.0, %v1588
    %v1590 = vpop.f32.mrb[0].mxu0
    %1591 = vmatprep.mubr.f32.mxu0 0.0
    %1592 = vmatmul.mubr.f32.gmra.mrb[0].mxu0 %v1520
    %v1593 = vpop.f32.mrb[0].mxu0
    %v1594 = vadd.f32 0.0, %v1593
    %v1595 = vpop.f32.mrb[0].mxu0
    %1596 = vdwg.mxu0
    %1599 = vrot.lane.b32.xlu0 %v1429, 32
    %v1600 = vpop.permute.xlu0 %1599
    %1601 = vrot.lane.b32.xlu0 %v1430, 32
    %v1602 = vpop.permute.xlu0 %1601
    %1607 = vrot.lane.b32.xlu0 %v1589, 64
    %v1608 = vpop.permute.xlu0 %1607
    %1609 = vrot.lane.b32.xlu0 %v1594, 64
    %v1610 = vpop.permute.xlu0 %1609
    %v1613 = vsel %vm127, %v1508, %v1600
    %v1614 = vsel %vm127, %v1513, %v1602
    %vm1615 = vcmask 523264
    %v1616 = vsel %vm1615, %v1613, %v1608
    %v1617 = vsel %vm1615, %v1614, %v1610
    %v1618 = vld [vmem:[%s1 + $0x108] sm:$0xff]
    %v1619 = vld [vmem:[%s1 + $0x110] sm:$0xff]
    %v1620 = vld [vmem:[%s1 + $0x118] sm:$0xff]
    %v1621 = vld [vmem:[%s1 + $0x120] sm:$0xff]
    %v1622 = vld [vmem:[%s1 + $0x128] sm:$0xff]
    %v1623 = vld [vmem:[%s1 + $0x130] sm:$0xff]
    %v1624 = vld [vmem:[%s1 + $0x138] sm:$0xff]
    %v1625 = vld [vmem:[%s1 + $0x140] sm:$0xff]
    %v1626 = vld [vmem:[%s1 + $0x148] sm:$0xff]
    %v1627 = vld [vmem:[%s1 + $0x150] sm:$0xff]
    %v1628 = vld [vmem:[%s1 + $0x158] sm:$0xff]
    %v1629 = vld [vmem:[%s1 + $0x160] sm:$0xff]
    %v1630 = vld [vmem:[%s1 + $0x168] sm:$0x1]
    %v1631 = vlaneseq
    %v1632 = vshrl.u32 %v1631, 7
    %v1633 = vsub.s32 0, %v1632
    %v1634 = vrot.slane %v1630, %v1633
    %vm1635 = vcmask 785408
    %v1637 = vsel %vm1635, %v1616, 0
    %v1640 = vsel %vm1635, %v1617, 0
    %1642 = vmatprep.subr.mxu0 0.0
    %1643 = vmatpush1.msra.mxu0 %v1618
    %1644 = vmatprep.subr.mxu0 0.0
    %1645 = vmatpush1.msra.mxu0 %v1619
    %1646 = vmatprep.subr.mxu0 0.0
    %1647 = vmatpush1.msra.mxu0 %v1620
    %1648 = vmatprep.subr.mxu0 0.0
    %1649 = vmatpush1.msra.mxu0 %v1621
    %1650 = vmatprep.subr.mxu0 0.0
    %1651 = vmatpush1.msra.mxu0 %v1622
    %1652 = vmatprep.subr.mxu0 0.0
    %1653 = vmatpush1.msra.mxu0 %v1623
    %1654 = vmatprep.subr.mxu0 0.0
    %1655 = vmatpush1.msra.mxu0 %v1624
    %1656 = vmatprep.subr.mxu0 0.0
    %1657 = vmatpush1.msra.mxu0 %v1625
    %1658 = vmatprep.subr.mxu0 0.0
    %1659 = vmatpush1.msra.mxu0 %v1626
    %1660 = vmatprep.subr.mxu0 0.0
    %1661 = vmatpush1.msra.mxu0 %v1627
    %1662 = vmatprep.subr.mxu0 0.0
    %1663 = vmatpush1.msra.mxu0 %v1628
    %1664 = vmatprep.subr.mxu0 0.0
    %1665 = vmatpush1.msra.mxu0 %v1629
    %1666 = vmatprep.subr.mxu0 0.0
    %1667 = vmatpush1.msra.mxu0 0.0
    %1668 = vmatprep.subr.mxu0 0.0
    %1669 = vmatpush1.msra.mxu0 0.0
    %1670 = vmatprep.subr.mxu0 0.0
    %1671 = vmatpush1.msra.mxu0 0.0
    %1672 = vmatprep.subr.mxu0 0.0
    %1673 = vmatpush1.msra.mxu0 0.0
    %1674 = vmatprep.subr.mxu0 0.0
    %1675 = vmatpush1.msra.mxu0 0.0
    %1676 = vmatprep.subr.mxu0 0.0
    %1677 = vmatpush1.msra.mxu0 0.0
    %1678 = vmatprep.subr.mxu0 0.0
    %1679 = vmatpush1.msra.mxu0 0.0
    %1680 = vmatprep.subr.mxu0 0.0
    %1681 = vmatpush1.msra.mxu0 0.0
    %1682 = vmatprep.subr.mxu0 0.0
    %1683 = vmatpush1.msra.mxu0 0.0
    %1684 = vmatprep.subr.mxu0 0.0
    %1685 = vmatpush1.msra.mxu0 0.0
    %1686 = vmatprep.subr.mxu0 0.0
    %1687 = vmatpush1.msra.mxu0 0.0
    %1688 = vmatprep.subr.mxu0 0.0
    %1689 = vmatpush1.msra.mxu0 0.0
    %1690 = vmatprep.subr.mxu0 0.0
    %1691 = vmatpush1.msra.mxu0 0.0
    %1692 = vmatprep.subr.mxu0 0.0
    %1693 = vmatpush1.msra.mxu0 0.0
    %1694 = vmatprep.subr.mxu0 0.0
    %1695 = vmatpush1.msra.mxu0 0.0
    %1696 = vmatprep.subr.mxu0 0.0
    %1697 = vmatpush1.msra.mxu0 0.0
    %1698 = vmatprep.subr.mxu0 0.0
    %1699 = vmatpush1.msra.mxu0 0.0
    %1700 = vmatprep.subr.mxu0 0.0
    %1701 = vmatpush1.msra.mxu0 0.0
    %1702 = vmatprep.subr.mxu0 0.0
    %1703 = vmatpush1.msra.mxu0 0.0
    %1704 = vmatprep.subr.mxu0 0.0
    %1705 = vmatpush1.msra.mxu0 0.0
    %1706 = vmatprep.mubr.f32.mxu0 0.0
    %1707 = vmatmul.mubr.f32.gmra.mrb[0].mxu0 %v1637
    %v1708 = vpop.f32.mrb[0].mxu0
    %v1709 = vadd.f32 %v1634, %v1708
    %v1710 = vpop.f32.mrb[0].mxu0
    %1711 = vmatprep.mubr.f32.mxu0 0.0
    %1712 = vmatmul.mubr.f32.gmra.mrb[0].mxu0 %v1640
    %v1713 = vpop.f32.mrb[0].mxu0
    %v1714 = vadd.f32 %v1634, %v1713
    %v1715 = vpop.f32.mrb[0].mxu0
    %1716 = vdwg.mxu0
    %v1717 = vld [vmem:[%s1 + $0x170] sm:$0x1]
    %v1718 = vlaneseq
    %v1719 = vshrl.u32 %v1718, 7
    %v1720 = vsub.s32 0, %v1719
    %v1721 = vrot.slane %v1717, %v1720
    %v1722 = vmul.f32 %v1709, %v1721
    %v1723 = vmul.f32 %v1714, %v1721
    %v1724 = vld [vmem:[%s1 + $0x178] sm:$0x1]
    %v1725 = vlaneseq
    %v1726 = vshrl.u32 %v1725, 7
    %v1727 = vsub.s32 0, %v1726
    %v1728 = vrot.slane %v1724, %v1727
    %v1729 = vadd.f32 %v1722, %v1728
    %v1730 = vadd.f32 %v1723, %v1728
    %vm1731 = vcmp.gt.f32.partialorder %v1729, 0.0
    %vm1732 = vcmp.gt.f32.partialorder %v1730, 0.0
    %v1733 = vmin.f32 %v1729, 0.0
    %v1734 = vmin.f32 %v1730, 0.0
    %v1735 = vmul.f32 %v1733, 1.442695
    %v1736 = vpow.pop %v1735
    %v1737 = vmul.f32 %v1734, 1.442695
    %v1738 = vpow.pop %v1737
    %v1739 = vsub.f32 %v1736, 1.0
    %v1740 = vsub.f32 %v1738, 1.0
    %v1741 = vsel %vm1731, %v1729, %v1739
    %v1742 = vsel %vm1732, %v1730, %v1740
    %v1743 = vld [vmem:[%s1 + $0x180] sm:$0xff]
    %v1744 = vld [vmem:[%s1 + $0x188] sm:$0xff]
    %1745 = vmatprep.subr.mxu0 0.0
    %1746 = vmatpush1.msra.mxu0 %v1741
    %1747 = vmatprep.subr.mxu0 0.0
    %1748 = vmatpush1.msra.mxu0 %v1742
    %1749 = vmatprep.subr.mxu0 0.0
    %1750 = vmatpush1.msra.mxu0 0.0
    %1751 = vmatprep.subr.mxu0 0.0
    %1752 = vmatpush1.msra.mxu0 0.0
    %1753 = vmatprep.subr.mxu0 0.0
    %1754 = vmatpush1.msra.mxu0 0.0
    %1755 = vmatprep.subr.mxu0 0.0
    %1756 = vmatpush1.msra.mxu0 0.0
    %1757 = vmatprep.subr.mxu0 0.0
    %1758 = vmatpush1.msra.mxu0 0.0
    %1759 = vmatprep.subr.mxu0 0.0
    %1760 = vmatpush1.msra.mxu0 0.0
    %1761 = vmatprep.subr.mxu0 0.0
    %1762 = vmatpush1.msra.mxu0 0.0
    %1763 = vmatprep.subr.mxu0 0.0
    %1764 = vmatpush1.msra.mxu0 0.0
    %1765 = vmatprep.subr.mxu0 0.0
    %1766 = vmatpush1.msra.mxu0 0.0
    %1767 = vmatprep.subr.mxu0 0.0
    %1768 = vmatpush1.msra.mxu0 0.0
    %1769 = vmatprep.subr.mxu0 0.0
    %1770 = vmatpush1.msra.mxu0 0.0
    %1771 = vmatprep.subr.mxu0 0.0
    %1772 = vmatpush1.msra.mxu0 0.0
    %1773 = vmatprep.subr.mxu0 0.0
    %1774 = vmatpush1.msra.mxu0 0.0
    %1775 = vmatprep.subr.mxu0 0.0
    %1776 = vmatpush1.msra.mxu0 0.0
    %1777 = vmatprep.subr.mxu0 0.0
    %1778 = vmatpush1.msra.mxu0 0.0
    %1779 = vmatprep.subr.mxu0 0.0
    %1780 = vmatpush1.msra.mxu0 0.0
    %1781 = vmatprep.subr.mxu0 0.0
    %1782 = vmatpush1.msra.mxu0 0.0
    %1783 = vmatprep.subr.mxu0 0.0
    %1784 = vmatpush1.msra.mxu0 0.0
    %1785 = vmatprep.subr.mxu0 0.0
    %1786 = vmatpush1.msra.mxu0 0.0
    %1787 = vmatprep.subr.mxu0 0.0
    %1788 = vmatpush1.msra.mxu0 0.0
    %1789 = vmatprep.subr.mxu0 0.0
    %1790 = vmatpush1.msra.mxu0 0.0
    %1791 = vmatprep.subr.mxu0 0.0
    %1792 = vmatpush1.msra.mxu0 0.0
    %1793 = vmatprep.subr.mxu0 0.0
    %1794 = vmatpush1.msra.mxu0 0.0
    %1795 = vmatprep.subr.mxu0 0.0
    %1796 = vmatpush1.msra.mxu0 0.0
    %1797 = vmatprep.subr.mxu0 0.0
    %1798 = vmatpush1.msra.mxu0 0.0
    %1799 = vmatprep.subr.mxu0 0.0
    %1800 = vmatpush1.msra.mxu0 0.0
    %1801 = vmatprep.subr.mxu0 0.0
    %1802 = vmatpush1.msra.mxu0 0.0
    %1803 = vmatprep.subr.mxu0 0.0
    %1804 = vmatpush1.msra.mxu0 0.0
    %1805 = vmatprep.subr.mxu0 0.0
    %1806 = vmatpush1.msra.mxu0 0.0
    %1807 = vmatprep.subr.mxu0 0.0
    %1808 = vmatpush1.msra.mxu0 0.0
    %1809 = vmatprep.mubr.f32.mxu0 0.0
    %1810 = vmatmul.mubr.f32.gmra.mrb[0].mxu0 %v1436
    %v1811 = vpop.f32.mrb[0].mxu0
    %v1812 = vadd.f32 %v1743, %v1811
    %v1813 = vpop.f32.mrb[0].mxu0
    %1814 = vmatprep.mubr.f32.mxu0 0.0
    %1815 = vmatmul.mubr.f32.gmra.mrb[0].mxu0 %v1439
    %v1816 = vpop.f32.mrb[0].mxu0
    %v1817 = vadd.f32 %v1744, %v1816
    %v1818 = vpop.f32.mrb[0].mxu0
    %1819 = vdwg.mxu0
    %v1820 = vld [vmem:[%s1 + $0x190] sm:$0xff]
    %v1821 = vld [vmem:[%s1 + $0x198] sm:$0xff]
    %1822 = vmatprep.subr.mxu0 0.0
    %1823 = vmatpush1.msra.mxu0 %v1741
    %1824 = vmatprep.subr.mxu0 0.0
    %1825 = vmatpush1.msra.mxu0 %v1742
    %1826 = vmatprep.subr.mxu0 0.0
    %1827 = vmatpush1.msra.mxu0 0.0
    %1828 = vmatprep.subr.mxu0 0.0
    %1829 = vmatpush1.msra.mxu0 0.0
    %1830 = vmatprep.subr.mxu0 0.0
    %1831 = vmatpush1.msra.mxu0 0.0
    %1832 = vmatprep.subr.mxu0 0.0
    %1833 = vmatpush1.msra.mxu0 0.0
    %1834 = vmatprep.subr.mxu0 0.0
    %1835 = vmatpush1.msra.mxu0 0.0
    %1836 = vmatprep.subr.mxu0 0.0
    %1837 = vmatpush1.msra.mxu0 0.0
    %1838 = vmatprep.subr.mxu0 0.0
    %1839 = vmatpush1.msra.mxu0 0.0
    %1840 = vmatprep.subr.mxu0 0.0
    %1841 = vmatpush1.msra.mxu0 0.0
    %1842 = vmatprep.subr.mxu0 0.0
    %1843 = vmatpush1.msra.mxu0 0.0
    %1844 = vmatprep.subr.mxu0 0.0
    %1845 = vmatpush1.msra.mxu0 0.0
    %1846 = vmatprep.subr.mxu0 0.0
    %1847 = vmatpush1.msra.mxu0 0.0
    %1848 = vmatprep.subr.mxu0 0.0
    %1849 = vmatpush1.msra.mxu0 0.0
    %1850 = vmatprep.subr.mxu0 0.0
    %1851 = vmatpush1.msra.mxu0 0.0
    %1852 = vmatprep.subr.mxu0 0.0
    %1853 = vmatpush1.msra.mxu0 0.0
    %1854 = vmatprep.subr.mxu0 0.0
    %1855 = vmatpush1.msra.mxu0 0.0
    %1856 = vmatprep.subr.mxu0 0.0
    %1857 = vmatpush1.msra.mxu0 0.0
    %1858 = vmatprep.subr.mxu0 0.0
    %1859 = vmatpush1.msra.mxu0 0.0
    %1860 = vmatprep.subr.mxu0 0.0
    %1861 = vmatpush1.msra.mxu0 0.0
    %1862 = vmatprep.subr.mxu0 0.0
    %1863 = vmatpush1.msra.mxu0 0.0
    %1864 = vmatprep.subr.mxu0 0.0
    %1865 = vmatpush1.msra.mxu0 0.0
    %1866 = vmatprep.subr.mxu0 0.0
    %1867 = vmatpush1.msra.mxu0 0.0
    %1868 = vmatprep.subr.mxu0 0.0
    %1869 = vmatpush1.msra.mxu0 0.0
    %1870 = vmatprep.subr.mxu0 0.0
    %1871 = vmatpush1.msra.mxu0 0.0
    %1872 = vmatprep.subr.mxu0 0.0
    %1873 = vmatpush1.msra.mxu0 0.0
    %1874 = vmatprep.subr.mxu0 0.0
    %1875 = vmatpush1.msra.mxu0 0.0
    %1876 = vmatprep.subr.mxu0 0.0
    %1877 = vmatpush1.msra.mxu0 0.0
    %1878 = vmatprep.subr.mxu0 0.0
    %1879 = vmatpush1.msra.mxu0 0.0
    %1880 = vmatprep.subr.mxu0 0.0
    %1881 = vmatpush1.msra.mxu0 0.0
    %1882 = vmatprep.subr.mxu0 0.0
    %1883 = vmatpush1.msra.mxu0 0.0
    %1884 = vmatprep.subr.mxu0 0.0
    %1885 = vmatpush1.msra.mxu0 0.0
    %1886 = vmatprep.mubr.f32.mxu0 0.0
    %1887 = vmatmul.mubr.f32.gmra.mrb[0].mxu0 %v1517
    %v1888 = vpop.f32.mrb[0].mxu0
    %v1889 = vadd.f32 %v1820, %v1888
    %v1890 = vpop.f32.mrb[0].mxu0
    %1891 = vmatprep.mubr.f32.mxu0 0.0
    %1892 = vmatmul.mubr.f32.gmra.mrb[0].mxu0 %v1520
    %v1893 = vpop.f32.mrb[0].mxu0
    %v1894 = vadd.f32 %v1821, %v1893
    %v1895 = vpop.f32.mrb[0].mxu0
    %1896 = vdwg.mxu0
    %v1897 = vmax.f32 %v1812, %v1889
    %v1898 = vmax.f32 %v1817, %v1894
    %v1899 = vmax.f32 %v1897, %v1741
    %v1900 = vmax.f32 %v1898, %v1742
    %v1901 = vld [vmem:[%s3 + $0x58] sm:$0xff]
    %v1903 = vsel %vm310, %v1901, 0
    %1905 = vmatprep.subr.mxu0 0.0
    %1906 = vmatpush1.msra.mxu0 %v1899
    %1907 = vmatprep.subr.mxu0 0.0
    %1908 = vmatpush1.msra.mxu0 %v1900
    %1909 = vmatprep.subr.mxu0 0.0
    %1910 = vmatpush1.msra.mxu0 0.0
    %1911 = vmatprep.subr.mxu0 0.0
    %1912 = vmatpush1.msra.mxu0 0.0
    %1913 = vmatprep.subr.mxu0 0.0
    %1914 = vmatpush1.msra.mxu0 0.0
    %1915 = vmatprep.subr.mxu0 0.0
    %1916 = vmatpush1.msra.mxu0 0.0
    %1917 = vmatprep.subr.mxu0 0.0
    %1918 = vmatpush1.msra.mxu0 0.0
    %1919 = vmatprep.subr.mxu0 0.0
    %1920 = vmatpush1.msra.mxu0 0.0
    %1921 = vmatprep.subr.mxu0 0.0
    %1922 = vmatpush1.msra.mxu0 0.0
    %1923 = vmatprep.subr.mxu0 0.0
    %1924 = vmatpush1.msra.mxu0 0.0
    %1925 = vmatprep.subr.mxu0 0.0
    %1926 = vmatpush1.msra.mxu0 0.0
    %1927 = vmatprep.subr.mxu0 0.0
    %1928 = vmatpush1.msra.mxu0 0.0
    %1929 = vmatprep.subr.mxu0 0.0
    %1930 = vmatpush1.msra.mxu0 0.0
    %1931 = vmatprep.subr.mxu0 0.0
    %1932 = vmatpush1.msra.mxu0 0.0
    %1933 = vmatprep.subr.mxu0 0.0
    %1934 = vmatpush1.msra.mxu0 0.0
    %1935 = vmatprep.subr.mxu0 0.0
    %1936 = vmatpush1.msra.mxu0 0.0
    %1937 = vmatprep.subr.mxu0 0.0
    %1938 = vmatpush1.msra.mxu0 0.0
    %1939 = vmatprep.subr.mxu0 0.0
    %1940 = vmatpush1.msra.mxu0 0.0
    %1941 = vmatprep.subr.mxu0 0.0
    %1942 = vmatpush1.msra.mxu0 0.0
    %1943 = vmatprep.subr.mxu0 0.0
    %1944 = vmatpush1.msra.mxu0 0.0
    %1945 = vmatprep.subr.mxu0 0.0
    %1946 = vmatpush1.msra.mxu0 0.0
    %1947 = vmatprep.subr.mxu0 0.0
    %1948 = vmatpush1.msra.mxu0 0.0
    %1949 = vmatprep.subr.mxu0 0.0
    %1950 = vmatpush1.msra.mxu0 0.0
    %1951 = vmatprep.subr.mxu0 0.0
    %1952 = vmatpush1.msra.mxu0 0.0
    %1953 = vmatprep.subr.mxu0 0.0
    %1954 = vmatpush1.msra.mxu0 0.0
    %1955 = vmatprep.subr.mxu0 0.0
    %1956 = vmatpush1.msra.mxu0 0.0
    %1957 = vmatprep.subr.mxu0 0.0
    %1958 = vmatpush1.msra.mxu0 0.0
    %1959 = vmatprep.subr.mxu0 0.0
    %1960 = vmatpush1.msra.mxu0 0.0
    %1961 = vmatprep.subr.mxu0 0.0
    %1962 = vmatpush1.msra.mxu0 0.0
    %1963 = vmatprep.subr.mxu0 0.0
    %1964 = vmatpush1.msra.mxu0 0.0
    %1965 = vmatprep.subr.mxu0 0.0
    %1966 = vmatpush1.msra.mxu0 0.0
    %1967 = vmatprep.subr.mxu0 0.0
    %1968 = vmatpush1.msra.mxu0 0.0
    %1969 = vmatprep.mubr.f32.mxu0 0.0
    %1970 = vmatmul.mubr.f32.gmra.mrb[0].mxu0 %v1903
    %v1971 = vpop.f32.mrb[0].mxu0
    %v1972 = vadd.f32 0.0, %v1971
    %v1973 = vpop.f32.mrb[0].mxu0
    %1974 = vdwg.mxu0
    %v1975 = vld [vmem:[%s3 + $0x60] sm:$0xff]
    %v1976 = vld [vmem:[%s2 + $0x28] sm:$0xff]
    %v1977 = vld [vmem:[%s2 + $0x30] sm:$0xff]
    %v1978 = vld [vmem:[%s2 + $0x38] sm:$0xff]
    %v1979 = vld [vmem:[%s2 + $0x40] sm:$0xff]
    %v1980 = vld [vmem:[%s2 + $0x48] sm:$0x1]
    %v1981 = vlaneseq
    %v1982 = vshrl.u32 %v1981, 7
    %v1983 = vsub.s32 0, %v1982
    %v1984 = vrot.slane %v1980, %v1983
    %v1986 = vsel %vm127, %v1972, 0
    %1988 = vmatprep.subr.mxu0 0.0
    %1989 = vmatpush1.msra.mxu0 %v1976
    %1990 = vmatprep.subr.mxu0 0.0
    %1991 = vmatpush1.msra.mxu0 %v1977
    %1992 = vmatprep.subr.mxu0 0.0
    %1993 = vmatpush1.msra.mxu0 %v1978
    %1994 = vmatprep.subr.mxu0 0.0
    %1995 = vmatpush1.msra.mxu0 %v1979
    %1996 = vmatprep.subr.mxu0 0.0
    %1997 = vmatpush1.msra.mxu0 0.0
    %1998 = vmatprep.subr.mxu0 0.0
    %1999 = vmatpush1.msra.mxu0 0.0
    %2000 = vmatprep.subr.mxu0 0.0
    %2001 = vmatpush1.msra.mxu0 0.0
    %2002 = vmatprep.subr.mxu0 0.0
    %2003 = vmatpush1.msra.mxu0 0.0
    %2004 = vmatprep.subr.mxu0 0.0
    %2005 = vmatpush1.msra.mxu0 0.0
    %2006 = vmatprep.subr.mxu0 0.0
    %2007 = vmatpush1.msra.mxu0 0.0
    %2008 = vmatprep.subr.mxu0 0.0
    %2009 = vmatpush1.msra.mxu0 0.0
    %2010 = vmatprep.subr.mxu0 0.0
    %2011 = vmatpush1.msra.mxu0 0.0
    %2012 = vmatprep.subr.mxu0 0.0
    %2013 = vmatpush1.msra.mxu0 0.0
    %2014 = vmatprep.subr.mxu0 0.0
    %2015 = vmatpush1.msra.mxu0 0.0
    %2016 = vmatprep.subr.mxu0 0.0
    %2017 = vmatpush1.msra.mxu0 0.0
    %2018 = vmatprep.subr.mxu0 0.0
    %2019 = vmatpush1.msra.mxu0 0.0
    %2020 = vmatprep.subr.mxu0 0.0
    %2021 = vmatpush1.msra.mxu0 0.0
    %2022 = vmatprep.subr.mxu0 0.0
    %2023 = vmatpush1.msra.mxu0 0.0
    %2024 = vmatprep.subr.mxu0 0.0
    %2025 = vmatpush1.msra.mxu0 0.0
    %2026 = vmatprep.subr.mxu0 0.0
    %2027 = vmatpush1.msra.mxu0 0.0
    %2028 = vmatprep.subr.mxu0 0.0
    %2029 = vmatpush1.msra.mxu0 0.0
    %2030 = vmatprep.subr.mxu0 0.0
    %2031 = vmatpush1.msra.mxu0 0.0
    %2032 = vmatprep.subr.mxu0 0.0
    %2033 = vmatpush1.msra.mxu0 0.0
    %2034 = vmatprep.subr.mxu0 0.0
    %2035 = vmatpush1.msra.mxu0 0.0
    %2036 = vmatprep.subr.mxu0 0.0
    %2037 = vmatpush1.msra.mxu0 0.0
    %2038 = vmatprep.subr.mxu0 0.0
    %2039 = vmatpush1.msra.mxu0 0.0
    %2040 = vmatprep.subr.mxu0 0.0
    %2041 = vmatpush1.msra.mxu0 0.0
    %2042 = vmatprep.subr.mxu0 0.0
    %2043 = vmatpush1.msra.mxu0 0.0
    %2044 = vmatprep.subr.mxu0 0.0
    %2045 = vmatpush1.msra.mxu0 0.0
    %2046 = vmatprep.subr.mxu0 0.0
    %2047 = vmatpush1.msra.mxu0 0.0
    %2048 = vmatprep.subr.mxu0 0.0
    %2049 = vmatpush1.msra.mxu0 0.0
    %2050 = vmatprep.subr.mxu0 0.0
    %2051 = vmatpush1.msra.mxu0 0.0
    %2052 = vmatprep.mubr.f32.mxu0 0.0
    %2053 = vmatmul.mubr.f32.gmra.mrb[0].mxu0 %v1986
    %v2054 = vpop.f32.mrb[0].mxu0
    %v2055 = vadd.f32 %v1984, %v2054
    %v2056 = vpop.f32.mrb[0].mxu0
    %2057 = vdwg.mxu0
    %v2058 = vmul.f32 %v2055, %v212
    %2060 = vrot.lane.b32.xlu0 %v2055, 96
    %v2061 = vpop.permute.xlu0 %2060
    %v2063 = vsel %vm127, %v2058, 0
    %v2065 = vsel %vm127, %v2061, 0
    %2067 = vmatprep.subr.mxu0 0.0
    %2068 = vmatpush1.xpose.msra.mxu0 %v2065
    %2069 = vmatprep.subr.mxu0 0.0
    %2070 = vmatpush1.xpose.msra.mxu0 0.0
    %2071 = vmatprep.subr.mxu0 0.0
    %2072 = vmatpush1.xpose.msra.mxu0 0.0
    %2073 = vmatprep.subr.mxu0 0.0
    %2074 = vmatpush1.xpose.msra.mxu0 0.0
    %2075 = vmatprep.subr.mxu0 0.0
    %2076 = vmatpush1.xpose.msra.mxu0 0.0
    %2077 = vmatprep.subr.mxu0 0.0
    %2078 = vmatpush1.xpose.msra.mxu0 0.0
    %2079 = vmatprep.subr.mxu0 0.0
    %2080 = vmatpush1.xpose.msra.mxu0 0.0
    %2081 = vmatprep.subr.mxu0 0.0
    %2082 = vmatpush1.xpose.msra.mxu0 0.0
    %2083 = vmatprep.subr.mxu0 0.0
    %2084 = vmatpush1.xpose.msra.mxu0 0.0
    %2085 = vmatprep.subr.mxu0 0.0
    %2086 = vmatpush1.xpose.msra.mxu0 0.0
    %2087 = vmatprep.subr.mxu0 0.0
    %2088 = vmatpush1.xpose.msra.mxu0 0.0
    %2089 = vmatprep.subr.mxu0 0.0
    %2090 = vmatpush1.xpose.msra.mxu0 0.0
    %2091 = vmatprep.subr.mxu0 0.0
    %2092 = vmatpush1.xpose.msra.mxu0 0.0
    %2093 = vmatprep.subr.mxu0 0.0
    %2094 = vmatpush1.xpose.msra.mxu0 0.0
    %2095 = vmatprep.subr.mxu0 0.0
    %2096 = vmatpush1.xpose.msra.mxu0 0.0
    %2097 = vmatprep.subr.mxu0 0.0
    %2098 = vmatpush1.xpose.msra.mxu0 0.0
    %2099 = vmatprep.subr.mxu0 0.0
    %2100 = vmatpush1.xpose.msra.mxu0 0.0
    %2101 = vmatprep.subr.mxu0 0.0
    %2102 = vmatpush1.xpose.msra.mxu0 0.0
    %2103 = vmatprep.subr.mxu0 0.0
    %2104 = vmatpush1.xpose.msra.mxu0 0.0
    %2105 = vmatprep.subr.mxu0 0.0
    %2106 = vmatpush1.xpose.msra.mxu0 0.0
    %2107 = vmatprep.subr.mxu0 0.0
    %2108 = vmatpush1.xpose.msra.mxu0 0.0
    %2109 = vmatprep.subr.mxu0 0.0
    %2110 = vmatpush1.xpose.msra.mxu0 0.0
    %2111 = vmatprep.subr.mxu0 0.0
    %2112 = vmatpush1.xpose.msra.mxu0 0.0
    %2113 = vmatprep.subr.mxu0 0.0
    %2114 = vmatpush1.xpose.msra.mxu0 0.0
    %2115 = vmatprep.subr.mxu0 0.0
    %2116 = vmatpush1.xpose.msra.mxu0 0.0
    %2117 = vmatprep.subr.mxu0 0.0
    %2118 = vmatpush1.xpose.msra.mxu0 0.0
    %2119 = vmatprep.subr.mxu0 0.0
    %2120 = vmatpush1.xpose.msra.mxu0 0.0
    %2121 = vmatprep.subr.mxu0 0.0
    %2122 = vmatpush1.xpose.msra.mxu0 0.0
    %2123 = vmatprep.subr.mxu0 0.0
    %2124 = vmatpush1.xpose.msra.mxu0 0.0
    %2125 = vmatprep.subr.mxu0 0.0
    %2126 = vmatpush1.xpose.msra.mxu0 0.0
    %2127 = vmatprep.subr.mxu0 0.0
    %2128 = vmatpush1.xpose.msra.mxu0 0.0
    %2129 = vmatprep.subr.mxu0 0.0
    %2130 = vmatpush1.xpose.msra.mxu0 0.0
    %2131 = vmatprep.mubr.f32.mxu0 0.0
    %2132 = vmatmul.mubr.f32.gmra.mrb[0].mxu0 %v2063
    %v2133 = vpop.f32.mrb[0].mxu0
    %v2134 = vadd.f32 0.0, %v2133
    %v2135 = vpop.f32.mrb[0].mxu0
    %2136 = vdwg.mxu0
    %v2137 = vmul.f32 %v2134, 0.35355338
    %v2138 = vadd.f32 %v2137, %v1975
    %vm2139 = vcmask 64512
    %v2140 = vsel %vm2139, %v2138, -inf
    %2141 = vmax.xlane.f32.xlu0 %v2140
    %v2142 = vpop.xlane.xlu0 %2141
    %v2143 = vsub.f32 %v2138, %v2142
    %v2144 = vmul.f32 %v2143, 1.442695
    %v2145 = vpow.pop %v2144
    %v2146 = vsel %vm2139, %v2145, 0.0
    %2147 = vadd.xlane.f32.xlu0 %v2146
    %v2148 = vpop.xlane.xlu0 %2147
    %v2149 = vrcp.pop %v2148
    %v2150 = vmul.f32 %v2055, %v333
    %2152 = vrot.lane.b32.xlu0 %v2150, 64
    %v2153 = vpop.permute.xlu0 %2152
    %v2156 = vsel %vm2139, %v2145, 0
    %2158 = vmatprep.subr.mxu0 0.0
    %2159 = vmatpush1.msra.mxu0 %v2153
    %2160 = vmatprep.subr.mxu0 0.0
    %2161 = vmatpush1.msra.mxu0 0.0
    %2162 = vmatprep.subr.mxu0 0.0
    %2163 = vmatpush1.msra.mxu0 0.0
    %2164 = vmatprep.subr.mxu0 0.0
    %2165 = vmatpush1.msra.mxu0 0.0
    %2166 = vmatprep.subr.mxu0 0.0
    %2167 = vmatpush1.msra.mxu0 0.0
    %2168 = vmatprep.subr.mxu0 0.0
    %2169 = vmatpush1.msra.mxu0 0.0
    %2170 = vmatprep.subr.mxu0 0.0
    %2171 = vmatpush1.msra.mxu0 0.0
    %2172 = vmatprep.subr.mxu0 0.0
    %2173 = vmatpush1.msra.mxu0 0.0
    %2174 = vmatprep.subr.mxu0 0.0
    %2175 = vmatpush1.msra.mxu0 0.0
    %2176 = vmatprep.subr.mxu0 0.0
    %2177 = vmatpush1.msra.mxu0 0.0
    %2178 = vmatprep.subr.mxu0 0.0
    %2179 = vmatpush1.msra.mxu0 0.0
    %2180 = vmatprep.subr.mxu0 0.0
    %2181 = vmatpush1.msra.mxu0 0.0
    %2182 = vmatprep.subr.mxu0 0.0
    %2183 = vmatpush1.msra.mxu0 0.0
    %2184 = vmatprep.subr.mxu0 0.0
    %2185 = vmatpush1.msra.mxu0 0.0
    %2186 = vmatprep.subr.mxu0 0.0
    %2187 = vmatpush1.msra.mxu0 0.0
    %2188 = vmatprep.subr.mxu0 0.0
    %2189 = vmatpush1.msra.mxu0 0.0
    %2190 = vmatprep.subr.mxu0 0.0
    %2191 = vmatpush1.msra.mxu0 0.0
    %2192 = vmatprep.subr.mxu0 0.0
    %2193 = vmatpush1.msra.mxu0 0.0
    %2194 = vmatprep.subr.mxu0 0.0
    %2195 = vmatpush1.msra.mxu0 0.0
    %2196 = vmatprep.subr.mxu0 0.0
    %2197 = vmatpush1.msra.mxu0 0.0
    %2198 = vmatprep.subr.mxu0 0.0
    %2199 = vmatpush1.msra.mxu0 0.0
    %2200 = vmatprep.subr.mxu0 0.0
    %2201 = vmatpush1.msra.mxu0 0.0
    %2202 = vmatprep.subr.mxu0 0.0
    %2203 = vmatpush1.msra.mxu0 0.0
    %2204 = vmatprep.subr.mxu0 0.0
    %2205 = vmatpush1.msra.mxu0 0.0
    %2206 = vmatprep.subr.mxu0 0.0
    %2207 = vmatpush1.msra.mxu0 0.0
    %2208 = vmatprep.subr.mxu0 0.0
    %2209 = vmatpush1.msra.mxu0 0.0
    %2210 = vmatprep.subr.mxu0 0.0
    %2211 = vmatpush1.msra.mxu0 0.0
    %2212 = vmatprep.subr.mxu0 0.0
    %2213 = vmatpush1.msra.mxu0 0.0
    %2214 = vmatprep.subr.mxu0 0.0
    %2215 = vmatpush1.msra.mxu0 0.0
    %2216 = vmatprep.subr.mxu0 0.0
    %2217 = vmatpush1.msra.mxu0 0.0
    %2218 = vmatprep.subr.mxu0 0.0
    %2219 = vmatpush1.msra.mxu0 0.0
    %2220 = vmatprep.subr.mxu0 0.0
    %2221 = vmatpush1.msra.mxu0 0.0
    %2222 = vmatprep.mubr.f32.mxu0 0.0
    %2223 = vmatmul.mubr.f32.gmra.mrb[0].mxu0 %v2156
    %v2224 = vpop.f32.mrb[0].mxu0
    %v2225 = vadd.f32 0.0, %v2224
    %v2226 = vpop.f32.mrb[0].mxu0
    %2227 = vdwg.mxu0
    %v2228 = vmul.f32 %v2225, %v2149
    %v2229 = vadd.f32 %v2228, 0.0
    %v2230 = vmul.f32 %v2055, %v433
    %v2232 = vsel %vm127, %v2230, 0
    %2234 = vmatprep.subr.mxu0 0.0
    %2235 = vmatpush1.xpose.msra.mxu0 %v2065
    %2236 = vmatprep.subr.mxu0 0.0
    %2237 = vmatpush1.xpose.msra.mxu0 0.0
    %2238 = vmatprep.subr.mxu0 0.0
    %2239 = vmatpush1.xpose.msra.mxu0 0.0
    %2240 = vmatprep.subr.mxu0 0.0
    %2241 = vmatpush1.xpose.msra.mxu0 0.0
    %2242 = vmatprep.subr.mxu0 0.0
    %2243 = vmatpush1.xpose.msra.mxu0 0.0
    %2244 = vmatprep.subr.mxu0 0.0
    %2245 = vmatpush1.xpose.msra.mxu0 0.0
    %2246 = vmatprep.subr.mxu0 0.0
    %2247 = vmatpush1.xpose.msra.mxu0 0.0
    %2248 = vmatprep.subr.mxu0 0.0
    %2249 = vmatpush1.xpose.msra.mxu0 0.0
    %2250 = vmatprep.subr.mxu0 0.0
    %2251 = vmatpush1.xpose.msra.mxu0 0.0
    %2252 = vmatprep.subr.mxu0 0.0
    %2253 = vmatpush1.xpose.msra.mxu0 0.0
    %2254 = vmatprep.subr.mxu0 0.0
    %2255 = vmatpush1.xpose.msra.mxu0 0.0
    %2256 = vmatprep.subr.mxu0 0.0
    %2257 = vmatpush1.xpose.msra.mxu0 0.0
    %2258 = vmatprep.subr.mxu0 0.0
    %2259 = vmatpush1.xpose.msra.mxu0 0.0
    %2260 = vmatprep.subr.mxu0 0.0
    %2261 = vmatpush1.xpose.msra.mxu0 0.0
    %2262 = vmatprep.subr.mxu0 0.0
    %2263 = vmatpush1.xpose.msra.mxu0 0.0
    %2264 = vmatprep.subr.mxu0 0.0
    %2265 = vmatpush1.xpose.msra.mxu0 0.0
    %2266 = vmatprep.subr.mxu0 0.0
    %2267 = vmatpush1.xpose.msra.mxu0 0.0
    %2268 = vmatprep.subr.mxu0 0.0
    %2269 = vmatpush1.xpose.msra.mxu0 0.0
    %2270 = vmatprep.subr.mxu0 0.0
    %2271 = vmatpush1.xpose.msra.mxu0 0.0
    %2272 = vmatprep.subr.mxu0 0.0
    %2273 = vmatpush1.xpose.msra.mxu0 0.0
    %2274 = vmatprep.subr.mxu0 0.0
    %2275 = vmatpush1.xpose.msra.mxu0 0.0
    %2276 = vmatprep.subr.mxu0 0.0
    %2277 = vmatpush1.xpose.msra.mxu0 0.0
    %2278 = vmatprep.subr.mxu0 0.0
    %2279 = vmatpush1.xpose.msra.mxu0 0.0
    %2280 = vmatprep.subr.mxu0 0.0
    %2281 = vmatpush1.xpose.msra.mxu0 0.0
    %2282 = vmatprep.subr.mxu0 0.0
    %2283 = vmatpush1.xpose.msra.mxu0 0.0
    %2284 = vmatprep.subr.mxu0 0.0
    %2285 = vmatpush1.xpose.msra.mxu0 0.0
    %2286 = vmatprep.subr.mxu0 0.0
    %2287 = vmatpush1.xpose.msra.mxu0 0.0
    %2288 = vmatprep.subr.mxu0 0.0
    %2289 = vmatpush1.xpose.msra.mxu0 0.0
    %2290 = vmatprep.subr.mxu0 0.0
    %2291 = vmatpush1.xpose.msra.mxu0 0.0
    %2292 = vmatprep.subr.mxu0 0.0
    %2293 = vmatpush1.xpose.msra.mxu0 0.0
    %2294 = vmatprep.subr.mxu0 0.0
    %2295 = vmatpush1.xpose.msra.mxu0 0.0
    %2296 = vmatprep.subr.mxu0 0.0
    %2297 = vmatpush1.xpose.msra.mxu0 0.0
    %2298 = vmatprep.mubr.f32.mxu0 0.0
    %2299 = vmatmul.mubr.f32.gmra.mrb[0].mxu0 %v2232
    %v2300 = vpop.f32.mrb[0].mxu0
    %v2301 = vadd.f32 0.0, %v2300
    %v2302 = vpop.f32.mrb[0].mxu0
    %2303 = vdwg.mxu0
    %v2304 = vmul.f32 %v2301, 0.35355338
    %v2305 = vadd.f32 %v2304, %v1975
    %v2306 = vsel %vm2139, %v2305, -inf
    %2307 = vmax.xlane.f32.xlu0 %v2306
    %v2308 = vpop.xlane.xlu0 %2307
    %v2309 = vsub.f32 %v2305, %v2308
    %v2310 = vmul.f32 %v2309, 1.442695
    %v2311 = vpow.pop %v2310
    %v2312 = vsel %vm2139, %v2311, 0.0
    %2313 = vadd.xlane.f32.xlu0 %v2312
    %v2314 = vpop.xlane.xlu0 %2313
    %v2315 = vrcp.pop %v2314
    %v2316 = vmul.f32 %v2055, %v543
    %2318 = vrot.lane.b32.xlu0 %v2316, 64
    %v2319 = vpop.permute.xlu0 %2318
    %v2322 = vsel %vm2139, %v2311, 0
    %2324 = vmatprep.subr.mxu0 0.0
    %2325 = vmatpush1.msra.mxu0 %v2319
    %2326 = vmatprep.subr.mxu0 0.0
    %2327 = vmatpush1.msra.mxu0 0.0
    %2328 = vmatprep.subr.mxu0 0.0
    %2329 = vmatpush1.msra.mxu0 0.0
    %2330 = vmatprep.subr.mxu0 0.0
    %2331 = vmatpush1.msra.mxu0 0.0
    %2332 = vmatprep.subr.mxu0 0.0
    %2333 = vmatpush1.msra.mxu0 0.0
    %2334 = vmatprep.subr.mxu0 0.0
    %2335 = vmatpush1.msra.mxu0 0.0
    %2336 = vmatprep.subr.mxu0 0.0
    %2337 = vmatpush1.msra.mxu0 0.0
    %2338 = vmatprep.subr.mxu0 0.0
    %2339 = vmatpush1.msra.mxu0 0.0
    %2340 = vmatprep.subr.mxu0 0.0
    %2341 = vmatpush1.msra.mxu0 0.0
    %2342 = vmatprep.subr.mxu0 0.0
    %2343 = vmatpush1.msra.mxu0 0.0
    %2344 = vmatprep.subr.mxu0 0.0
    %2345 = vmatpush1.msra.mxu0 0.0
    %2346 = vmatprep.subr.mxu0 0.0
    %2347 = vmatpush1.msra.mxu0 0.0
    %2348 = vmatprep.subr.mxu0 0.0
    %2349 = vmatpush1.msra.mxu0 0.0
    %2350 = vmatprep.subr.mxu0 0.0
    %2351 = vmatpush1.msra.mxu0 0.0
    %2352 = vmatprep.subr.mxu0 0.0
    %2353 = vmatpush1.msra.mxu0 0.0
    %2354 = vmatprep.subr.mxu0 0.0
    %2355 = vmatpush1.msra.mxu0 0.0
    %2356 = vmatprep.subr.mxu0 0.0
    %2357 = vmatpush1.msra.mxu0 0.0
    %2358 = vmatprep.subr.mxu0 0.0
    %2359 = vmatpush1.msra.mxu0 0.0
    %2360 = vmatprep.subr.mxu0 0.0
    %2361 = vmatpush1.msra.mxu0 0.0
    %2362 = vmatprep.subr.mxu0 0.0
    %2363 = vmatpush1.msra.mxu0 0.0
    %2364 = vmatprep.subr.mxu0 0.0
    %2365 = vmatpush1.msra.mxu0 0.0
    %2366 = vmatprep.subr.mxu0 0.0
    %2367 = vmatpush1.msra.mxu0 0.0
    %2368 = vmatprep.subr.mxu0 0.0
    %2369 = vmatpush1.msra.mxu0 0.0
    %2370 = vmatprep.subr.mxu0 0.0
    %2371 = vmatpush1.msra.mxu0 0.0
    %2372 = vmatprep.subr.mxu0 0.0
    %2373 = vmatpush1.msra.mxu0 0.0
    %2374 = vmatprep.subr.mxu0 0.0
    %2375 = vmatpush1.msra.mxu0 0.0
    %2376 = vmatprep.subr.mxu0 0.0
    %2377 = vmatpush1.msra.mxu0 0.0
    %2378 = vmatprep.subr.mxu0 0.0
    %2379 = vmatpush1.msra.mxu0 0.0
    %2380 = vmatprep.subr.mxu0 0.0
    %2381 = vmatpush1.msra.mxu0 0.0
    %2382 = vmatprep.subr.mxu0 0.0
    %2383 = vmatpush1.msra.mxu0 0.0
    %2384 = vmatprep.subr.mxu0 0.0
    %2385 = vmatpush1.msra.mxu0 0.0
    %2386 = vmatprep.subr.mxu0 0.0
    %2387 = vmatpush1.msra.mxu0 0.0
    %2388 = vmatprep.mubr.f32.mxu0 0.0
    %2389 = vmatmul.mubr.f32.gmra.mrb[0].mxu0 %v2322
    %v2390 = vpop.f32.mrb[0].mxu0
    %v2391 = vadd.f32 0.0, %v2390
    %v2392 = vpop.f32.mrb[0].mxu0
    %2393 = vdwg.mxu0
    %v2394 = vmul.f32 %v2391, %v2315
    %v2395 = vadd.f32 %v2229, %v2394
    %v2396 = vmul.f32 %v2055, %v643
    %v2398 = vsel %vm127, %v2396, 0
    %2400 = vmatprep.subr.mxu0 0.0
    %2401 = vmatpush1.xpose.msra.mxu0 %v2065
    %2402 = vmatprep.subr.mxu0 0.0
    %2403 = vmatpush1.xpose.msra.mxu0 0.0
    %2404 = vmatprep.subr.mxu0 0.0
    %2405 = vmatpush1.xpose.msra.mxu0 0.0
    %2406 = vmatprep.subr.mxu0 0.0
    %2407 = vmatpush1.xpose.msra.mxu0 0.0
    %2408 = vmatprep.subr.mxu0 0.0
    %2409 = vmatpush1.xpose.msra.mxu0 0.0
    %2410 = vmatprep.subr.mxu0 0.0
    %2411 = vmatpush1.xpose.msra.mxu0 0.0
    %2412 = vmatprep.subr.mxu0 0.0
    %2413 = vmatpush1.xpose.msra.mxu0 0.0
    %2414 = vmatprep.subr.mxu0 0.0
    %2415 = vmatpush1.xpose.msra.mxu0 0.0
    %2416 = vmatprep.subr.mxu0 0.0
    %2417 = vmatpush1.xpose.msra.mxu0 0.0
    %2418 = vmatprep.subr.mxu0 0.0
    %2419 = vmatpush1.xpose.msra.mxu0 0.0
    %2420 = vmatprep.subr.mxu0 0.0
    %2421 = vmatpush1.xpose.msra.mxu0 0.0
    %2422 = vmatprep.subr.mxu0 0.0
    %2423 = vmatpush1.xpose.msra.mxu0 0.0
    %2424 = vmatprep.subr.mxu0 0.0
    %2425 = vmatpush1.xpose.msra.mxu0 0.0
    %2426 = vmatprep.subr.mxu0 0.0
    %2427 = vmatpush1.xpose.msra.mxu0 0.0
    %2428 = vmatprep.subr.mxu0 0.0
    %2429 = vmatpush1.xpose.msra.mxu0 0.0
    %2430 = vmatprep.subr.mxu0 0.0
    %2431 = vmatpush1.xpose.msra.mxu0 0.0
    %2432 = vmatprep.subr.mxu0 0.0
    %2433 = vmatpush1.xpose.msra.mxu0 0.0
    %2434 = vmatprep.subr.mxu0 0.0
    %2435 = vmatpush1.xpose.msra.mxu0 0.0
    %2436 = vmatprep.subr.mxu0 0.0
    %2437 = vmatpush1.xpose.msra.mxu0 0.0
    %2438 = vmatprep.subr.mxu0 0.0
    %2439 = vmatpush1.xpose.msra.mxu0 0.0
    %2440 = vmatprep.subr.mxu0 0.0
    %2441 = vmatpush1.xpose.msra.mxu0 0.0
    %2442 = vmatprep.subr.mxu0 0.0
    %2443 = vmatpush1.xpose.msra.mxu0 0.0
    %2444 = vmatprep.subr.mxu0 0.0
    %2445 = vmatpush1.xpose.msra.mxu0 0.0
    %2446 = vmatprep.subr.mxu0 0.0
    %2447 = vmatpush1.xpose.msra.mxu0 0.0
    %2448 = vmatprep.subr.mxu0 0.0
    %2449 = vmatpush1.xpose.msra.mxu0 0.0
    %2450 = vmatprep.subr.mxu0 0.0
    %2451 = vmatpush1.xpose.msra.mxu0 0.0
    %2452 = vmatprep.subr.mxu0 0.0
    %2453 = vmatpush1.xpose.msra.mxu0 0.0
    %2454 = vmatprep.subr.mxu0 0.0
    %2455 = vmatpush1.xpose.msra.mxu0 0.0
    %2456 = vmatprep.subr.mxu0 0.0
    %2457 = vmatpush1.xpose.msra.mxu0 0.0
    %2458 = vmatprep.subr.mxu0 0.0
    %2459 = vmatpush1.xpose.msra.mxu0 0.0
    %2460 = vmatprep.subr.mxu0 0.0
    %2461 = vmatpush1.xpose.msra.mxu0 0.0
    %2462 = vmatprep.subr.mxu0 0.0
    %2463 = vmatpush1.xpose.msra.mxu0 0.0
    %2464 = vmatprep.mubr.f32.mxu0 0.0
    %2465 = vmatmul.mubr.f32.gmra.mrb[0].mxu0 %v2398
    %v2466 = vpop.f32.mrb[0].mxu0
    %v2467 = vadd.f32 0.0, %v2466
    %v2468 = vpop.f32.mrb[0].mxu0
    %2469 = vdwg.mxu0
    %v2470 = vmul.f32 %v2467, 0.35355338
    %v2471 = vadd.f32 %v2470, %v1975
    %v2472 = vsel %vm2139, %v2471, -inf
    %2473 = vmax.xlane.f32.xlu0 %v2472
    %v2474 = vpop.xlane.xlu0 %2473
    %v2475 = vsub.f32 %v2471, %v2474
    %v2476 = vmul.f32 %v2475, 1.442695
    %v2477 = vpow.pop %v2476
    %v2478 = vsel %vm2139, %v2477, 0.0
    %2479 = vadd.xlane.f32.xlu0 %v2478
    %v2480 = vpop.xlane.xlu0 %2479
    %v2481 = vrcp.pop %v2480
    %v2482 = vmul.f32 %v2055, %v753
    %2484 = vrot.lane.b32.xlu0 %v2482, 64
    %v2485 = vpop.permute.xlu0 %2484
    %v2488 = vsel %vm2139, %v2477, 0
    %2490 = vmatprep.subr.mxu0 0.0
    %2491 = vmatpush1.msra.mxu0 %v2485
    %2492 = vmatprep.subr.mxu0 0.0
    %2493 = vmatpush1.msra.mxu0 0.0
    %2494 = vmatprep.subr.mxu0 0.0
    %2495 = vmatpush1.msra.mxu0 0.0
    %2496 = vmatprep.subr.mxu0 0.0
    %2497 = vmatpush1.msra.mxu0 0.0
    %2498 = vmatprep.subr.mxu0 0.0
    %2499 = vmatpush1.msra.mxu0 0.0
    %2500 = vmatprep.subr.mxu0 0.0
    %2501 = vmatpush1.msra.mxu0 0.0
    %2502 = vmatprep.subr.mxu0 0.0
    %2503 = vmatpush1.msra.mxu0 0.0
    %2504 = vmatprep.subr.mxu0 0.0
    %2505 = vmatpush1.msra.mxu0 0.0
    %2506 = vmatprep.subr.mxu0 0.0
    %2507 = vmatpush1.msra.mxu0 0.0
    %2508 = vmatprep.subr.mxu0 0.0
    %2509 = vmatpush1.msra.mxu0 0.0
    %2510 = vmatprep.subr.mxu0 0.0
    %2511 = vmatpush1.msra.mxu0 0.0
    %2512 = vmatprep.subr.mxu0 0.0
    %2513 = vmatpush1.msra.mxu0 0.0
    %2514 = vmatprep.subr.mxu0 0.0
    %2515 = vmatpush1.msra.mxu0 0.0
    %2516 = vmatprep.subr.mxu0 0.0
    %2517 = vmatpush1.msra.mxu0 0.0
    %2518 = vmatprep.subr.mxu0 0.0
    %2519 = vmatpush1.msra.mxu0 0.0
    %2520 = vmatprep.subr.mxu0 0.0
    %2521 = vmatpush1.msra.mxu0 0.0
    %2522 = vmatprep.subr.mxu0 0.0
    %2523 = vmatpush1.msra.mxu0 0.0
    %2524 = vmatprep.subr.mxu0 0.0
    %2525 = vmatpush1.msra.mxu0 0.0
    %2526 = vmatprep.subr.mxu0 0.0
    %2527 = vmatpush1.msra.mxu0 0.0
    %2528 = vmatprep.subr.mxu0 0.0
    %2529 = vmatpush1.msra.mxu0 0.0
    %2530 = vmatprep.subr.mxu0 0.0
    %2531 = vmatpush1.msra.mxu0 0.0
    %2532 = vmatprep.subr.mxu0 0.0
    %2533 = vmatpush1.msra.mxu0 0.0
    %2534 = vmatprep.subr.mxu0 0.0
    %2535 = vmatpush1.msra.mxu0 0.0
    %2536 = vmatprep.subr.mxu0 0.0
    %2537 = vmatpush1.msra.mxu0 0.0
    %2538 = vmatprep.subr.mxu0 0.0
    %2539 = vmatpush1.msra.mxu0 0.0
    %2540 = vmatprep.subr.mxu0 0.0
    %2541 = vmatpush1.msra.mxu0 0.0
    %2542 = vmatprep.subr.mxu0 0.0
    %2543 = vmatpush1.msra.mxu0 0.0
    %2544 = vmatprep.subr.mxu0 0.0
    %2545 = vmatpush1.msra.mxu0 0.0
    %2546 = vmatprep.subr.mxu0 0.0
    %2547 = vmatpush1.msra.mxu0 0.0
    %2548 = vmatprep.subr.mxu0 0.0
    %2549 = vmatpush1.msra.mxu0 0.0
    %2550 = vmatprep.subr.mxu0 0.0
    %2551 = vmatpush1.msra.mxu0 0.0
    %2552 = vmatprep.subr.mxu0 0.0
    %2553 = vmatpush1.msra.mxu0 0.0
    %2554 = vmatprep.mubr.f32.mxu0 0.0
    %2555 = vmatmul.mubr.f32.gmra.mrb[0].mxu0 %v2488
    %v2556 = vpop.f32.mrb[0].mxu0
    %v2557 = vadd.f32 0.0, %v2556
    %v2558 = vpop.f32.mrb[0].mxu0
    %2559 = vdwg.mxu0
    %v2560 = vmul.f32 %v2557, %v2481
    %v2561 = vadd.f32 %v2395, %v2560
    %v2562 = vmul.f32 %v2055, %v853
    %v2564 = vsel %vm127, %v2562, 0
    %2566 = vmatprep.subr.mxu0 0.0
    %2567 = vmatpush1.xpose.msra.mxu0 %v2065
    %2568 = vmatprep.subr.mxu0 0.0
    %2569 = vmatpush1.xpose.msra.mxu0 0.0
    %2570 = vmatprep.subr.mxu0 0.0
    %2571 = vmatpush1.xpose.msra.mxu0 0.0
    %2572 = vmatprep.subr.mxu0 0.0
    %2573 = vmatpush1.xpose.msra.mxu0 0.0
    %2574 = vmatprep.subr.mxu0 0.0
    %2575 = vmatpush1.xpose.msra.mxu0 0.0
    %2576 = vmatprep.subr.mxu0 0.0
    %2577 = vmatpush1.xpose.msra.mxu0 0.0
    %2578 = vmatprep.subr.mxu0 0.0
    %2579 = vmatpush1.xpose.msra.mxu0 0.0
    %2580 = vmatprep.subr.mxu0 0.0
    %2581 = vmatpush1.xpose.msra.mxu0 0.0
    %2582 = vmatprep.subr.mxu0 0.0
    %2583 = vmatpush1.xpose.msra.mxu0 0.0
    %2584 = vmatprep.subr.mxu0 0.0
    %2585 = vmatpush1.xpose.msra.mxu0 0.0
    %2586 = vmatprep.subr.mxu0 0.0
    %2587 = vmatpush1.xpose.msra.mxu0 0.0
    %2588 = vmatprep.subr.mxu0 0.0
    %2589 = vmatpush1.xpose.msra.mxu0 0.0
    %2590 = vmatprep.subr.mxu0 0.0
    %2591 = vmatpush1.xpose.msra.mxu0 0.0
    %2592 = vmatprep.subr.mxu0 0.0
    %2593 = vmatpush1.xpose.msra.mxu0 0.0
    %2594 = vmatprep.subr.mxu0 0.0
    %2595 = vmatpush1.xpose.msra.mxu0 0.0
    %2596 = vmatprep.subr.mxu0 0.0
    %2597 = vmatpush1.xpose.msra.mxu0 0.0
    %2598 = vmatprep.subr.mxu0 0.0
    %2599 = vmatpush1.xpose.msra.mxu0 0.0
    %2600 = vmatprep.subr.mxu0 0.0
    %2601 = vmatpush1.xpose.msra.mxu0 0.0
    %2602 = vmatprep.subr.mxu0 0.0
    %2603 = vmatpush1.xpose.msra.mxu0 0.0
    %2604 = vmatprep.subr.mxu0 0.0
    %2605 = vmatpush1.xpose.msra.mxu0 0.0
    %2606 = vmatprep.subr.mxu0 0.0
    %2607 = vmatpush1.xpose.msra.mxu0 0.0
    %2608 = vmatprep.subr.mxu0 0.0
    %2609 = vmatpush1.xpose.msra.mxu0 0.0
    %2610 = vmatprep.subr.mxu0 0.0
    %2611 = vmatpush1.xpose.msra.mxu0 0.0
    %2612 = vmatprep.subr.mxu0 0.0
    %2613 = vmatpush1.xpose.msra.mxu0 0.0
    %2614 = vmatprep.subr.mxu0 0.0
    %2615 = vmatpush1.xpose.msra.mxu0 0.0
    %2616 = vmatprep.subr.mxu0 0.0
    %2617 = vmatpush1.xpose.msra.mxu0 0.0
    %2618 = vmatprep.subr.mxu0 0.0
    %2619 = vmatpush1.xpose.msra.mxu0 0.0
    %2620 = vmatprep.subr.mxu0 0.0
    %2621 = vmatpush1.xpose.msra.mxu0 0.0
    %2622 = vmatprep.subr.mxu0 0.0
    %2623 = vmatpush1.xpose.msra.mxu0 0.0
    %2624 = vmatprep.subr.mxu0 0.0
    %2625 = vmatpush1.xpose.msra.mxu0 0.0
    %2626 = vmatprep.subr.mxu0 0.0
    %2627 = vmatpush1.xpose.msra.mxu0 0.0
    %2628 = vmatprep.subr.mxu0 0.0
    %2629 = vmatpush1.xpose.msra.mxu0 0.0
    %2630 = vmatprep.mubr.f32.mxu0 0.0
    %2631 = vmatmul.mubr.f32.gmra.mrb[0].mxu0 %v2564
    %v2632 = vpop.f32.mrb[0].mxu0
    %v2633 = vadd.f32 0.0, %v2632
    %v2634 = vpop.f32.mrb[0].mxu0
    %2635 = vdwg.mxu0
    %v2636 = vmul.f32 %v2633, 0.35355338
    %v2637 = vadd.f32 %v2636, %v1975
    %v2638 = vsel %vm2139, %v2637, -inf
    %2639 = vmax.xlane.f32.xlu0 %v2638
    %v2640 = vpop.xlane.xlu0 %2639
    %v2641 = vsub.f32 %v2637, %v2640
    %v2642 = vmul.f32 %v2641, 1.442695
    %v2643 = vpow.pop %v2642
    %v2644 = vsel %vm2139, %v2643, 0.0
    %2645 = vadd.xlane.f32.xlu0 %v2644
    %v2646 = vpop.xlane.xlu0 %2645
    %v2647 = vrcp.pop %v2646
    %v2648 = vmul.f32 %v2055, %v963
    %2650 = vrot.lane.b32.xlu0 %v2648, 64
    %v2651 = vpop.permute.xlu0 %2650
    %v2654 = vsel %vm2139, %v2643, 0
    %2656 = vmatprep.subr.mxu0 0.0
    %2657 = vmatpush1.msra.mxu0 %v2651
    %2658 = vmatprep.subr.mxu0 0.0
    %2659 = vmatpush1.msra.mxu0 0.0
    %2660 = vmatprep.subr.mxu0 0.0
    %2661 = vmatpush1.msra.mxu0 0.0
    %2662 = vmatprep.subr.mxu0 0.0
    %2663 = vmatpush1.msra.mxu0 0.0
    %2664 = vmatprep.subr.mxu0 0.0
    %2665 = vmatpush1.msra.mxu0 0.0
    %2666 = vmatprep.subr.mxu0 0.0
    %2667 = vmatpush1.msra.mxu0 0.0
    %2668 = vmatprep.subr.mxu0 0.0
    %2669 = vmatpush1.msra.mxu0 0.0
    %2670 = vmatprep.subr.mxu0 0.0
    %2671 = vmatpush1.msra.mxu0 0.0
    %2672 = vmatprep.subr.mxu0 0.0
    %2673 = vmatpush1.msra.mxu0 0.0
    %2674 = vmatprep.subr.mxu0 0.0
    %2675 = vmatpush1.msra.mxu0 0.0
    %2676 = vmatprep.subr.mxu0 0.0
    %2677 = vmatpush1.msra.mxu0 0.0
    %2678 = vmatprep.subr.mxu0 0.0
    %2679 = vmatpush1.msra.mxu0 0.0
    %2680 = vmatprep.subr.mxu0 0.0
    %2681 = vmatpush1.msra.mxu0 0.0
    %2682 = vmatprep.subr.mxu0 0.0
    %2683 = vmatpush1.msra.mxu0 0.0
    %2684 = vmatprep.subr.mxu0 0.0
    %2685 = vmatpush1.msra.mxu0 0.0
    %2686 = vmatprep.subr.mxu0 0.0
    %2687 = vmatpush1.msra.mxu0 0.0
    %2688 = vmatprep.subr.mxu0 0.0
    %2689 = vmatpush1.msra.mxu0 0.0
    %2690 = vmatprep.subr.mxu0 0.0
    %2691 = vmatpush1.msra.mxu0 0.0
    %2692 = vmatprep.subr.mxu0 0.0
    %2693 = vmatpush1.msra.mxu0 0.0
    %2694 = vmatprep.subr.mxu0 0.0
    %2695 = vmatpush1.msra.mxu0 0.0
    %2696 = vmatprep.subr.mxu0 0.0
    %2697 = vmatpush1.msra.mxu0 0.0
    %2698 = vmatprep.subr.mxu0 0.0
    %2699 = vmatpush1.msra.mxu0 0.0
    %2700 = vmatprep.subr.mxu0 0.0
    %2701 = vmatpush1.msra.mxu0 0.0
    %2702 = vmatprep.subr.mxu0 0.0
    %2703 = vmatpush1.msra.mxu0 0.0
    %2704 = vmatprep.subr.mxu0 0.0
    %2705 = vmatpush1.msra.mxu0 0.0
    %2706 = vmatprep.subr.mxu0 0.0
    %2707 = vmatpush1.msra.mxu0 0.0
    %2708 = vmatprep.subr.mxu0 0.0
    %2709 = vmatpush1.msra.mxu0 0.0
    %2710 = vmatprep.subr.mxu0 0.0
    %2711 = vmatpush1.msra.mxu0 0.0
    %2712 = vmatprep.subr.mxu0 0.0
    %2713 = vmatpush1.msra.mxu0 0.0
    %2714 = vmatprep.subr.mxu0 0.0
    %2715 = vmatpush1.msra.mxu0 0.0
    %2716 = vmatprep.subr.mxu0 0.0
    %2717 = vmatpush1.msra.mxu0 0.0
    %2718 = vmatprep.subr.mxu0 0.0
    %2719 = vmatpush1.msra.mxu0 0.0
    %2720 = vmatprep.mubr.f32.mxu0 0.0
    %2721 = vmatmul.mubr.f32.gmra.mrb[0].mxu0 %v2654
    %v2722 = vpop.f32.mrb[0].mxu0
    %v2723 = vadd.f32 0.0, %v2722
    %v2724 = vpop.f32.mrb[0].mxu0
    %2725 = vdwg.mxu0
    %v2726 = vmul.f32 %v2723, %v2647
    %v2727 = vadd.f32 %v2561, %v2726
    %v2728 = vld [vmem:[%s1 + $0x1a0] sm:$0xff]
    %v2729 = vld [vmem:[%s1 + $0x1a8] sm:$0xff]
    %v2730 = vld [vmem:[%s1 + $0x1b0] sm:$0xff]
    %v2731 = vld [vmem:[%s1 + $0x1b8] sm:$0xff]
    %v2732 = vld [vmem:[%s1 + $0x1c0] sm:$0x1]
    %v2733 = vlaneseq
    %v2734 = vshrl.u32 %v2733, 7
    %v2735 = vsub.s32 0, %v2734
    %v2736 = vrot.slane %v2732, %v2735
    %v2738 = vsel %vm127, %v2727, 0
    %2740 = vmatprep.subr.mxu0 0.0
    %2741 = vmatpush1.msra.mxu0 %v2728
    %2742 = vmatprep.subr.mxu0 0.0
    %2743 = vmatpush1.msra.mxu0 %v2729
    %2744 = vmatprep.subr.mxu0 0.0
    %2745 = vmatpush1.msra.mxu0 %v2730
    %2746 = vmatprep.subr.mxu0 0.0
    %2747 = vmatpush1.msra.mxu0 %v2731
    %2748 = vmatprep.subr.mxu0 0.0
    %2749 = vmatpush1.msra.mxu0 0.0
    %2750 = vmatprep.subr.mxu0 0.0
    %2751 = vmatpush1.msra.mxu0 0.0
    %2752 = vmatprep.subr.mxu0 0.0
    %2753 = vmatpush1.msra.mxu0 0.0
    %2754 = vmatprep.subr.mxu0 0.0
    %2755 = vmatpush1.msra.mxu0 0.0
    %2756 = vmatprep.subr.mxu0 0.0
    %2757 = vmatpush1.msra.mxu0 0.0
    %2758 = vmatprep.subr.mxu0 0.0
    %2759 = vmatpush1.msra.mxu0 0.0
    %2760 = vmatprep.subr.mxu0 0.0
    %2761 = vmatpush1.msra.mxu0 0.0
    %2762 = vmatprep.subr.mxu0 0.0
    %2763 = vmatpush1.msra.mxu0 0.0
    %2764 = vmatprep.subr.mxu0 0.0
    %2765 = vmatpush1.msra.mxu0 0.0
    %2766 = vmatprep.subr.mxu0 0.0
    %2767 = vmatpush1.msra.mxu0 0.0
    %2768 = vmatprep.subr.mxu0 0.0
    %2769 = vmatpush1.msra.mxu0 0.0
    %2770 = vmatprep.subr.mxu0 0.0
    %2771 = vmatpush1.msra.mxu0 0.0
    %2772 = vmatprep.subr.mxu0 0.0
    %2773 = vmatpush1.msra.mxu0 0.0
    %2774 = vmatprep.subr.mxu0 0.0
    %2775 = vmatpush1.msra.mxu0 0.0
    %2776 = vmatprep.subr.mxu0 0.0
    %2777 = vmatpush1.msra.mxu0 0.0
    %2778 = vmatprep.subr.mxu0 0.0
    %2779 = vmatpush1.msra.mxu0 0.0
    %2780 = vmatprep.subr.mxu0 0.0
    %2781 = vmatpush1.msra.mxu0 0.0
    %2782 = vmatprep.subr.mxu0 0.0
    %2783 = vmatpush1.msra.mxu0 0.0
    %2784 = vmatprep.subr.mxu0 0.0
    %2785 = vmatpush1.msra.mxu0 0.0
    %2786 = vmatprep.subr.mxu0 0.0
    %2787 = vmatpush1.msra.mxu0 0.0
    %2788 = vmatprep.subr.mxu0 0.0
    %2789 = vmatpush1.msra.mxu0 0.0
    %2790 = vmatprep.subr.mxu0 0.0
    %2791 = vmatpush1.msra.mxu0 0.0
    %2792 = vmatprep.subr.mxu0 0.0
    %2793 = vmatpush1.msra.mxu0 0.0
    %2794 = vmatprep.subr.mxu0 0.0
    %2795 = vmatpush1.msra.mxu0 0.0
    %2796 = vmatprep.subr.mxu0 0.0
    %2797 = vmatpush1.msra.mxu0 0.0
    %2798 = vmatprep.subr.mxu0 0.0
    %2799 = vmatpush1.msra.mxu0 0.0
    %2800 = vmatprep.subr.mxu0 0.0
    %2801 = vmatpush1.msra.mxu0 0.0
    %2802 = vmatprep.subr.mxu0 0.0
    %2803 = vmatpush1.msra.mxu0 0.0
    %2804 = vmatprep.mubr.f32.mxu0 0.0
    %2805 = vmatmul.mubr.f32.gmra.mrb[0].mxu0 %v2738
    %v2806 = vpop.f32.mrb[0].mxu0
    %v2807 = vadd.f32 %v2736, %v2806
    %v2808 = vpop.f32.mrb[0].mxu0
    %2809 = vdwg.mxu0
    %v2810 = vadd.f32 %v1972, %v2807
    %v2811 = vld [vmem:[%s1 + $0x1c8] sm:$0x1]
    %v2812 = vld [vmem:[%s1 + $0x1d0] sm:$0x1]
    %v2813 = vsel %vm127, %v2810, 0.0
    %2814 = vadd.xlane.f32.xlu0 %v2813
    %v2815 = vpop.xlane.xlu0 %2814
    %v2816 = vmul.f32 %v2815, %v1160
    %v2817 = vsub.f32 %v2810, %v2816
    %v2818 = vmul.f32 %v2817, %v2817
    %v2819 = vsel %vm127, %v2818, 0.0
    %2820 = vadd.xlane.f32.xlu0 %v2819
    %v2821 = vpop.xlane.xlu0 %2820
    %v2822 = vmul.f32 %v2821, %v1160
    %v2823 = vadd.f32 %v2822, 1e-05
    %v2824 = vrsqrt.pop %v2823
    %v2825 = vmul.f32 %v2817, %v2824
    %v2826 = vlaneseq
    %v2827 = vshrl.u32 %v2826, 7
    %v2828 = vsub.s32 0, %v2827
    %v2829 = vrot.slane %v2811, %v2828
    %v2830 = vmul.f32 %v2825, %v2829
    %v2831 = vlaneseq
    %v2832 = vshrl.u32 %v2831, 7
    %v2833 = vsub.s32 0, %v2832
    %v2834 = vrot.slane %v2812, %v2833
    %v2835 = vadd.f32 %v2830, %v2834
    %v2836 = vld [vmem:[%s3 + $0x68] sm:$0xff]
    %v2837 = vld [vmem:[%s3 + $0x70] sm:$0xff]
    %v2838 = vld [vmem:[%s3 + $0x78] sm:$0xff]
    %v2839 = vld [vmem:[%s3 + $0x80] sm:$0xff]
    %v2840 = vld [vmem:[%s3 + $0x88] sm:$0x1]
    %v2841 = vlaneseq
    %v2842 = vshrl.u32 %v2841, 7
    %v2843 = vsub.s32 0, %v2842
    %v2844 = vrot.slane %v2840, %v2843
    %v2846 = vsel %vm127, %v2835, 0
    %2848 = vmatprep.subr.mxu0 0.0
    %2849 = vmatpush1.msra.mxu0 %v2836
    %2850 = vmatprep.subr.mxu0 0.0
    %2851 = vmatpush1.msra.mxu0 %v2837
    %2852 = vmatprep.subr.mxu0 0.0
    %2853 = vmatpush1.msra.mxu0 %v2838
    %2854 = vmatprep.subr.mxu0 0.0
    %2855 = vmatpush1.msra.mxu0 %v2839
    %2856 = vmatprep.subr.mxu0 0.0
    %2857 = vmatpush1.msra.mxu0 0.0
    %2858 = vmatprep.subr.mxu0 0.0
    %2859 = vmatpush1.msra.mxu0 0.0
    %2860 = vmatprep.subr.mxu0 0.0
    %2861 = vmatpush1.msra.mxu0 0.0
    %2862 = vmatprep.subr.mxu0 0.0
    %2863 = vmatpush1.msra.mxu0 0.0
    %2864 = vmatprep.subr.mxu0 0.0
    %2865 = vmatpush1.msra.mxu0 0.0
    %2866 = vmatprep.subr.mxu0 0.0
    %2867 = vmatpush1.msra.mxu0 0.0
    %2868 = vmatprep.subr.mxu0 0.0
    %2869 = vmatpush1.msra.mxu0 0.0
    %2870 = vmatprep.subr.mxu0 0.0
    %2871 = vmatpush1.msra.mxu0 0.0
    %2872 = vmatprep.subr.mxu0 0.0
    %2873 = vmatpush1.msra.mxu0 0.0
    %2874 = vmatprep.subr.mxu0 0.0
    %2875 = vmatpush1.msra.mxu0 0.0
    %2876 = vmatprep.subr.mxu0 0.0
    %2877 = vmatpush1.msra.mxu0 0.0
    %2878 = vmatprep.subr.mxu0 0.0
    %2879 = vmatpush1.msra.mxu0 0.0
    %2880 = vmatprep.subr.mxu0 0.0
    %2881 = vmatpush1.msra.mxu0 0.0
    %2882 = vmatprep.subr.mxu0 0.0
    %2883 = vmatpush1.msra.mxu0 0.0
    %2884 = vmatprep.subr.mxu0 0.0
    %2885 = vmatpush1.msra.mxu0 0.0
    %2886 = vmatprep.subr.mxu0 0.0
    %2887 = vmatpush1.msra.mxu0 0.0
    %2888 = vmatprep.subr.mxu0 0.0
    %2889 = vmatpush1.msra.mxu0 0.0
    %2890 = vmatprep.subr.mxu0 0.0
    %2891 = vmatpush1.msra.mxu0 0.0
    %2892 = vmatprep.subr.mxu0 0.0
    %2893 = vmatpush1.msra.mxu0 0.0
    %2894 = vmatprep.subr.mxu0 0.0
    %2895 = vmatpush1.msra.mxu0 0.0
    %2896 = vmatprep.subr.mxu0 0.0
    %2897 = vmatpush1.msra.mxu0 0.0
    %2898 = vmatprep.subr.mxu0 0.0
    %2899 = vmatpush1.msra.mxu0 0.0
    %2900 = vmatprep.subr.mxu0 0.0
    %2901 = vmatpush1.msra.mxu0 0.0
    %2902 = vmatprep.subr.mxu0 0.0
    %2903 = vmatpush1.msra.mxu0 0.0
    %2904 = vmatprep.subr.mxu0 0.0
    %2905 = vmatpush1.msra.mxu0 0.0
    %2906 = vmatprep.subr.mxu0 0.0
    %2907 = vmatpush1.msra.mxu0 0.0
    %2908 = vmatprep.subr.mxu0 0.0
    %2909 = vmatpush1.msra.mxu0 0.0
    %2910 = vmatprep.subr.mxu0 0.0
    %2911 = vmatpush1.msra.mxu0 0.0
    %2912 = vmatprep.mubr.f32.mxu0 0.0
    %2913 = vmatmul.mubr.f32.gmra.mrb[0].mxu0 %v2846
    %v2914 = vpop.f32.mrb[0].mxu0
    %v2915 = vadd.f32 %v2844, %v2914
    %v2916 = vpop.f32.mrb[0].mxu0
    %2917 = vdwg.mxu0
    %v2918 = vmul.f32 %v2915, 0.5
    %v2919 = vmul.f32 %v2915, 0.70710677
    %v2920 = verf.f32.pop %v2919
    %v2921 = vadd.f32 %v2920, 1.0
    %v2922 = vmul.f32 %v2918, %v2921
    %v2923 = vld [vmem:[%s1 + $0x1d8] sm:$0xff]
    %v2924 = vld [vmem:[%s1 + $0x1e0] sm:$0xff]
    %v2925 = vld [vmem:[%s1 + $0x1e8] sm:$0xff]
    %v2926 = vld [vmem:[%s1 + $0x1f0] sm:$0xff]
    %v2927 = vld [vmem:[%s1 + $0x1f8] sm:$0xff]
    %v2928 = vld [vmem:[%s1 + $0x200] sm:$0xff]
    %v2929 = vld [vmem:[%s1 + $0x208] sm:$0xff]
    %v2930 = vld [vmem:[%s1 + $0x210] sm:$0xff]
    %v2931 = vld [vmem:[%s1 + $0x218] sm:$0xff]
    %v2932 = vld [vmem:[%s1 + $0x220] sm:$0xff]
    %v2933 = vld [vmem:[%s1 + $0x228] sm:$0xff]
    %v2934 = vld [vmem:[%s1 + $0x230] sm:$0xff]
    %v2935 = vld [vmem:[%s1 + $0x238] sm:$0xff]
    %v2936 = vld [vmem:[%s1 + $0x240] sm:$0xff]
    %v2937 = vld [vmem:[%s1 + $0x248] sm:$0xff]
    %v2938 = vld [vmem:[%s1 + $0x250] sm:$0xff]
    %v2939 = vld [vmem:[%s1 + $0x258] sm:$0x1]
    %v2940 = vlaneseq
    %v2941 = vshrl.u32 %v2940, 7
    %v2942 = vsub.s32 0, %v2941
    %v2943 = vrot.slane %v2939, %v2942
    %2944 = vmatprep.subr.mxu0 0.0
    %2945 = vmatpush1.msra.mxu0 %v2923
    %2946 = vmatprep.subr.mxu0 0.0
    %2947 = vmatpush1.msra.mxu0 %v2924
    %2948 = vmatprep.subr.mxu0 0.0
    %2949 = vmatpush1.msra.mxu0 %v2925
    %2950 = vmatprep.subr.mxu0 0.0
    %2951 = vmatpush1.msra.mxu0 %v2926
    %2952 = vmatprep.subr.mxu0 0.0
    %2953 = vmatpush1.msra.mxu0 %v2927
    %2954 = vmatprep.subr.mxu0 0.0
    %2955 = vmatpush1.msra.mxu0 %v2928
    %2956 = vmatprep.subr.mxu0 0.0
    %2957 = vmatpush1.msra.mxu0 %v2929
    %2958 = vmatprep.subr.mxu0 0.0
    %2959 = vmatpush1.msra.mxu0 %v2930
    %2960 = vmatprep.subr.mxu0 0.0
    %2961 = vmatpush1.msra.mxu0 %v2931
    %2962 = vmatprep.subr.mxu0 0.0
    %2963 = vmatpush1.msra.mxu0 %v2932
    %2964 = vmatprep.subr.mxu0 0.0
    %2965 = vmatpush1.msra.mxu0 %v2933
    %2966 = vmatprep.subr.mxu0 0.0
    %2967 = vmatpush1.msra.mxu0 %v2934
    %2968 = vmatprep.subr.mxu0 0.0
    %2969 = vmatpush1.msra.mxu0 %v2935
    %2970 = vmatprep.subr.mxu0 0.0
    %2971 = vmatpush1.msra.mxu0 %v2936
    %2972 = vmatprep.subr.mxu0 0.0
    %2973 = vmatpush1.msra.mxu0 %v2937
    %2974 = vmatprep.subr.mxu0 0.0
    %2975 = vmatpush1.msra.mxu0 %v2938
    %2976 = vmatprep.subr.mxu0 0.0
    %2977 = vmatpush1.msra.mxu0 0.0
    %2978 = vmatprep.subr.mxu0 0.0
    %2979 = vmatpush1.msra.mxu0 0.0
    %2980 = vmatprep.subr.mxu0 0.0
    %2981 = vmatpush1.msra.mxu0 0.0
    %2982 = vmatprep.subr.mxu0 0.0
    %2983 = vmatpush1.msra.mxu0 0.0
    %2984 = vmatprep.subr.mxu0 0.0
    %2985 = vmatpush1.msra.mxu0 0.0
    %2986 = vmatprep.subr.mxu0 0.0
    %2987 = vmatpush1.msra.mxu0 0.0
    %2988 = vmatprep.subr.mxu0 0.0
    %2989 = vmatpush1.msra.mxu0 0.0
    %2990 = vmatprep.subr.mxu0 0.0
    %2991 = vmatpush1.msra.mxu0 0.0
    %2992 = vmatprep.subr.mxu0 0.0
    %2993 = vmatpush1.msra.mxu0 0.0
    %2994 = vmatprep.subr.mxu0 0.0
    %2995 = vmatpush1.msra.mxu0 0.0
    %2996 = vmatprep.subr.mxu0 0.0
    %2997 = vmatpush1.msra.mxu0 0.0
    %2998 = vmatprep.subr.mxu0 0.0
    %2999 = vmatpush1.msra.mxu0 0.0
    %3000 = vmatprep.subr.mxu0 0.0
    %3001 = vmatpush1.msra.mxu0 0.0
    %3002 = vmatprep.subr.mxu0 0.0
    %3003 = vmatpush1.msra.mxu0 0.0
    %3004 = vmatprep.subr.mxu0 0.0
    %3005 = vmatpush1.msra.mxu0 0.0
    %3006 = vmatprep.subr.mxu0 0.0
    %3007 = vmatpush1.msra.mxu0 0.0
    %3008 = vmatprep.mubr.f32.mxu0 0.0
    %3009 = vmatmul.mubr.f32.gmra.mrb[0].mxu0 %v2922
    %v3010 = vpop.f32.mrb[0].mxu0
    %v3011 = vadd.f32 %v2943, %v3010
    %v3012 = vpop.f32.mrb[0].mxu0
    %3013 = vdwg.mxu0
    %v3014 = vadd.f32 %v2835, %v3011
    %v3015 = vld [vmem:[%s1 + $0x260] sm:$0x1]
    %v3016 = vld [vmem:[%s1 + $0x268] sm:$0x1]
    %v3017 = vsel %vm127, %v3014, 0.0
    %3018 = vadd.xlane.f32.xlu0 %v3017
    %v3019 = vpop.xlane.xlu0 %3018
    %v3020 = vmul.f32 %v3019, %v1160
    %v3021 = vsub.f32 %v3014, %v3020
    %v3022 = vmul.f32 %v3021, %v3021
    %v3023 = vsel %vm127, %v3022, 0.0
    %3024 = vadd.xlane.f32.xlu0 %v3023
    %v3025 = vpop.xlane.xlu0 %3024
    %v3026 = vmul.f32 %v3025, %v1160
    %v3027 = vadd.f32 %v3026, 1e-05
    %v3028 = vrsqrt.pop %v3027
    %v3029 = vmul.f32 %v3021, %v3028
    %v3030 = vlaneseq
    %v3031 = vshrl.u32 %v3030, 7
    %v3032 = vsub.s32 0, %v3031
    %v3033 = vrot.slane %v3015, %v3032
    %v3034 = vmul.f32 %v3029, %v3033
    %v3035 = vlaneseq
    %v3036 = vshrl.u32 %v3035, 7
    %v3037 = vsub.s32 0, %v3036
    %v3038 = vrot.slane %v3016, %v3037
    %v3039 = vadd.f32 %v3034, %v3038
    %v3040 = vld [vmem:[%s1 + $0x270] sm:$0x1]
    %v3041 = vld [vmem:[%s1 + $0x278] sm:$0x1]
    %v3042 = vsel %vm127, %v3039, 0.0
    %3043 = vadd.xlane.f32.xlu0 %v3042
    %v3044 = vpop.xlane.xlu0 %3043
    %v3045 = vmul.f32 %v3044, %v1160
    %v3046 = vsub.f32 %v3039, %v3045
    %v3047 = vmul.f32 %v3046, %v3046
    %v3048 = vsel %vm127, %v3047, 0.0
    %3049 = vadd.xlane.f32.xlu0 %v3048
    %v3050 = vpop.xlane.xlu0 %3049
    %v3051 = vmul.f32 %v3050, %v1160
    %v3052 = vadd.f32 %v3051, 1e-05
    %v3053 = vrsqrt.pop %v3052
    %v3054 = vmul.f32 %v3046, %v3053
    %v3055 = vlaneseq
    %v3056 = vshrl.u32 %v3055, 7
    %v3057 = vsub.s32 0, %v3056
    %v3058 = vrot.slane %v3040, %v3057
    %v3059 = vmul.f32 %v3054, %v3058
    %v3060 = vlaneseq
    %v3061 = vshrl.u32 %v3060, 7
    %v3062 = vsub.s32 0, %v3061
    %v3063 = vrot.slane %v3041, %v3062
    %v3064 = vadd.f32 %v3059, %v3063
    %v3065 = vld [vmem:[%s3 + $0x90] sm:$0x3]
    %v3067 = vsel %vm2139, %v3065, 0
    %3069 = vmatprep.subr.mxu0 0.0
    %3070 = vmatpush1.msra.mxu0 %v3064
    %3071 = vmatprep.subr.mxu0 0.0
    %3072 = vmatpush1.msra.mxu0 0.0
    %3073 = vmatprep.subr.mxu0 0.0
    %3074 = vmatpush1.msra.mxu0 0.0
    %3075 = vmatprep.subr.mxu0 0.0
    %3076 = vmatpush1.msra.mxu0 0.0
    %3077 = vmatprep.subr.mxu0 0.0
    %3078 = vmatpush1.msra.mxu0 0.0
    %3079 = vmatprep.subr.mxu0 0.0
    %3080 = vmatpush1.msra.mxu0 0.0
    %3081 = vmatprep.subr.mxu0 0.0
    %3082 = vmatpush1.msra.mxu0 0.0
    %3083 = vmatprep.subr.mxu0 0.0
    %3084 = vmatpush1.msra.mxu0 0.0
    %3085 = vmatprep.subr.mxu0 0.0
    %3086 = vmatpush1.msra.mxu0 0.0
    %3087 = vmatprep.subr.mxu0 0.0
    %3088 = vmatpush1.msra.mxu0 0.0
    %3089 = vmatprep.subr.mxu0 0.0
    %3090 = vmatpush1.msra.mxu0 0.0
    %3091 = vmatprep.subr.mxu0 0.0
    %3092 = vmatpush1.msra.mxu0 0.0
    %3093 = vmatprep.subr.mxu0 0.0
    %3094 = vmatpush1.msra.mxu0 0.0
    %3095 = vmatprep.subr.mxu0 0.0
    %3096 = vmatpush1.msra.mxu0 0.0
    %3097 = vmatprep.subr.mxu0 0.0
    %3098 = vmatpush1.msra.mxu0 0.0
    %3099 = vmatprep.subr.mxu0 0.0
    %3100 = vmatpush1.msra.mxu0 0.0
    %3101 = vmatprep.subr.mxu0 0.0
    %3102 = vmatpush1.msra.mxu0 0.0
    %3103 = vmatprep.subr.mxu0 0.0
    %3104 = vmatpush1.msra.mxu0 0.0
    %3105 = vmatprep.subr.mxu0 0.0
    %3106 = vmatpush1.msra.mxu0 0.0
    %3107 = vmatprep.subr.mxu0 0.0
    %3108 = vmatpush1.msra.mxu0 0.0
    %3109 = vmatprep.subr.mxu0 0.0
    %3110 = vmatpush1.msra.mxu0 0.0
    %3111 = vmatprep.subr.mxu0 0.0
    %3112 = vmatpush1.msra.mxu0 0.0
    %3113 = vmatprep.subr.mxu0 0.0
    %3114 = vmatpush1.msra.mxu0 0.0
    %3115 = vmatprep.subr.mxu0 0.0
    %3116 = vmatpush1.msra.mxu0 0.0
    %3117 = vmatprep.subr.mxu0 0.0
    %3118 = vmatpush1.msra.mxu0 0.0
    %3119 = vmatprep.subr.mxu0 0.0
    %3120 = vmatpush1.msra.mxu0 0.0
    %3121 = vmatprep.subr.mxu0 0.0
    %3122 = vmatpush1.msra.mxu0 0.0
    %3123 = vmatprep.subr.mxu0 0.0
    %3124 = vmatpush1.msra.mxu0 0.0
    %3125 = vmatprep.subr.mxu0 0.0
    %3126 = vmatpush1.msra.mxu0 0.0
    %3127 = vmatprep.subr.mxu0 0.0
    %3128 = vmatpush1.msra.mxu0 0.0
    %3129 = vmatprep.subr.mxu0 0.0
    %3130 = vmatpush1.msra.mxu0 0.0
    %3131 = vmatprep.subr.mxu0 0.0
    %3132 = vmatpush1.msra.mxu0 0.0
    %3133 = vmatprep.mubr.f32.mxu0 0.0
    %3134 = vmatmul.mubr.f32.gmra.mrb[0].mxu0 %v3067
    %v3135 = vpop.f32.mrb[0].mxu0
    %v3136 = vadd.f32 0.0, %v3135
    %v3137 = vpop.f32.mrb[0].mxu0
    %3138 = vdwg.mxu0
    %v3139 = vld [vmem:[%s4] sm:$0xff]
    %v3140 = vld [vmem:[%s4 + $0x8] sm:$0xff]
    %v3141 = vld [vmem:[%s4 + $0x10] sm:$0xff]
    %v3142 = vld [vmem:[%s4 + $0x18] sm:$0xff]
    %v3143 = vld [vmem:[%s4 + $0x20] sm:$0x1]
    %v3144 = vlaneseq
    %v3145 = vshrl.u32 %v3144, 7
    %v3146 = vsub.s32 0, %v3145
    %v3147 = vrot.slane %v3143, %v3146
    %v3149 = vsel %vm127, %v3136, 0
    %3151 = vmatprep.subr.mxu0 0.0
    %3152 = vmatpush1.msra.mxu0 %v3139
    %3153 = vmatprep.subr.mxu0 0.0
    %3154 = vmatpush1.msra.mxu0 %v3140
    %3155 = vmatprep.subr.mxu0 0.0
    %3156 = vmatpush1.msra.mxu0 %v3141
    %3157 = vmatprep.subr.mxu0 0.0
    %3158 = vmatpush1.msra.mxu0 %v3142
    %3159 = vmatprep.subr.mxu0 0.0
    %3160 = vmatpush1.msra.mxu0 0.0
    %3161 = vmatprep.subr.mxu0 0.0
    %3162 = vmatpush1.msra.mxu0 0.0
    %3163 = vmatprep.subr.mxu0 0.0
    %3164 = vmatpush1.msra.mxu0 0.0
    %3165 = vmatprep.subr.mxu0 0.0
    %3166 = vmatpush1.msra.mxu0 0.0
    %3167 = vmatprep.subr.mxu0 0.0
    %3168 = vmatpush1.msra.mxu0 0.0
    %3169 = vmatprep.subr.mxu0 0.0
    %3170 = vmatpush1.msra.mxu0 0.0
    %3171 = vmatprep.subr.mxu0 0.0
    %3172 = vmatpush1.msra.mxu0 0.0
    %3173 = vmatprep.subr.mxu0 0.0
    %3174 = vmatpush1.msra.mxu0 0.0
    %3175 = vmatprep.subr.mxu0 0.0
    %3176 = vmatpush1.msra.mxu0 0.0
    %3177 = vmatprep.subr.mxu0 0.0
    %3178 = vmatpush1.msra.mxu0 0.0
    %3179 = vmatprep.subr.mxu0 0.0
    %3180 = vmatpush1.msra.mxu0 0.0
    %3181 = vmatprep.subr.mxu0 0.0
    %3182 = vmatpush1.msra.mxu0 0.0
    %3183 = vmatprep.subr.mxu0 0.0
    %3184 = vmatpush1.msra.mxu0 0.0
    %3185 = vmatprep.subr.mxu0 0.0
    %3186 = vmatpush1.msra.mxu0 0.0
    %3187 = vmatprep.subr.mxu0 0.0
    %3188 = vmatpush1.msra.mxu0 0.0
    %3189 = vmatprep.subr.mxu0 0.0
    %3190 = vmatpush1.msra.mxu0 0.0
    %3191 = vmatprep.subr.mxu0 0.0
    %3192 = vmatpush1.msra.mxu0 0.0
    %3193 = vmatprep.subr.mxu0 0.0
    %3194 = vmatpush1.msra.mxu0 0.0
    %3195 = vmatprep.subr.mxu0 0.0
    %3196 = vmatpush1.msra.mxu0 0.0
    %3197 = vmatprep.subr.mxu0 0.0
    %3198 = vmatpush1.msra.mxu0 0.0
    %3199 = vmatprep.subr.mxu0 0.0
    %3200 = vmatpush1.msra.mxu0 0.0
    %3201 = vmatprep.subr.mxu0 0.0
    %3202 = vmatpush1.msra.mxu0 0.0
    %3203 = vmatprep.subr.mxu0 0.0
    %3204 = vmatpush1.msra.mxu0 0.0
    %3205 = vmatprep.subr.mxu0 0.0
    %3206 = vmatpush1.msra.mxu0 0.0
    %3207 = vmatprep.subr.mxu0 0.0
    %3208 = vmatpush1.msra.mxu0 0.0
    %3209 = vmatprep.subr.mxu0 0.0
    %3210 = vmatpush1.msra.mxu0 0.0
    %3211 = vmatprep.subr.mxu0 0.0
    %3212 = vmatpush1.msra.mxu0 0.0
    %3213 = vmatprep.subr.mxu0 0.0
    %3214 = vmatpush1.msra.mxu0 0.0
    %3215 = vmatprep.mubr.f32.mxu0 0.0
    %3216 = vmatmul.mubr.f32.gmra.mrb[0].mxu0 %v3149
    %v3217 = vpop.f32.mrb[0].mxu0
    %v3218 = vadd.f32 %v3147, %v3217
    %v3219 = vpop.f32.mrb[0].mxu0
    %3220 = vdwg.mxu0
    %vm3221 = vcmask 17408
    %3222 = vst.msk [vmem:[#allocation2] sm:$0x3] %vm3221, %v3218
    // Predicated region
    $region22: #{tpu_custom_call.1} parent=1 // pred_check
      _
    $region23: #{tpu_custom_call.1} parent=1 // pred_check_branch
      %3224 = sbr.rel (0) target = $region25
    $region24: #{tpu_custom_call.1} parent=1 // pred_region
      %s3226 = ssub.s32 32, 32
      %3227 = vsyncadd [#allocation3], %s3226
      %s3229 = sshll.u32 [#allocation2], 4
      %s3230 = int_to_ptr.vmem [resolvable:$true] %s3229
      %3232 = dma.vmem_to_hbm [thread:$0]  %s3230, 32, %s5, [#allocation3]
    $region25: #{tpu_custom_call.1} parent=1 // pred_fallthru
      _
    // Predicated region
    $region26: #{tpu_custom_call.1} parent=1 // pred_check
      _
    $region27: #{tpu_custom_call.1} parent=1 // pred_check_branch
      %3234 = sbr.rel (0) target = $region29
    $region28: #{tpu_custom_call.1} parent=1 // pred_region
      %3235 = dma.done [#allocation3], 32
    $region29: #{tpu_custom_call.1} parent=1 // pred_fallthru
      _
    %3236 = vsyncpa [#allocation3], 1

</llo_original>
